<compile_context>
chip_gen: v5e
topology: v5e:2x2
jax: 0.10.0
libtpu: 0.0.40
codegen_flags: <defaults>
</compile_context>

<pallas_src>
import functools

import jax
import jax.numpy as jnp
from jax import lax
from jax.experimental import pallas as pl
from jax.experimental.pallas import tpu as pltpu

_F32 = jnp.float32
_HI = lax.Precision.HIGHEST
_JITTER = 1e-4         # matches the torch module's explicit +1e-4 * I terms
_CHOL_JITTER = 1e-6    # tiny extra jitter so cholesky(Kmm) is numerically safe
_LANE = 128
_MAX_TILE = 512        # conservative tile: fits v5e 16 MiB scoped / v7x 64 MiB
_VMEM_LIMIT = 32 * 1024 * 1024

_VMEM = pl.BlockSpec(memory_space=pltpu.MemorySpace.VMEM)
_SMEM = pl.BlockSpec(memory_space=pltpu.MemorySpace.SMEM)


def _round_up(n, m):
    return ((n + m - 1) // m) * m


# ---------------------------------------------------------------------------
# In-kernel helpers
# ---------------------------------------------------------------------------

def _eye(n, dtype=_F32):
    r = lax.broadcasted_iota(jnp.int32, (n, n), 0)
    c = lax.broadcasted_iota(jnp.int32, (n, n), 1)
    return (r == c).astype(dtype)


def _dot_t(a, b):
    """a @ b.T (contract last dims) on the MXU; f32 accumulate, full precision."""
    return lax.dot_general(a, b, (((1,), (1,)), ((), ())),
                           precision=_HI, preferred_element_type=_F32)


def _dot_tn(a, b):
    """a.T @ b (contract first dims) on the MXU; f32 accumulate, full precision."""
    return lax.dot_general(a, b, (((0,), (0,)), ((), ())),
                           precision=_HI, preferred_element_type=_F32)


# ---------------------------------------------------------------------------
# Pallas kernels
# ---------------------------------------------------------------------------

def _context_kernel(params_ref, z_ref, xc_ref, yc_ref,
                    kmm_ref, amat_ref, kty_ref, *, nc_valid):
    """Grid (Nc_pad/TC,), 'arbitrary'.  params: [sf2, scale, 1/sy2, sy2]."""
    step = pl.program_id(0)
    last = pl.num_programs(0) - 1

    sf2 = params_ref[0]
    scale = params_ref[1]        # sqrt(0.5)/l : inputs pre-scaled once (VPU win)
    inv_sy2 = params_ref[2]

    z = z_ref[...] * scale       # (M, D)
    xc = xc_ref[...] * scale     # (TC, D)
    tc = xc.shape[0]

    ones_d = jnp.ones((1, z.shape[1]), _F32)
    zz_col = jnp.sum(z * z, axis=1, keepdims=True)          # (M, 1)
    xc_row = _dot_t(ones_d, xc * xc)                         # (1, TC) lane row

    # k(Z, X_c tile) = sf2 * exp(-||z_s - x_s||^2)  (inputs already scaled)
    sq = jnp.maximum(zz_col + xc_row - 2.0 * _dot_t(z, xc), 0.0)
    kmc = sf2 * jnp.exp(-sq)                                 # (M, TC)

    # Mask padded context columns so they contribute nothing to the reductions.
    cols = step * tc + lax.broadcasted_iota(jnp.int32, (1, tc), 1)
    kmc = jnp.where(cols < nc_valid, kmc, 0.0)

    @pl.when(step == 0)
    def _init():
        amat_ref[...] = jnp.zeros_like(amat_ref)
        kty_ref[...] = jnp.zeros_like(kty_ref)

    amat_ref[...] += inv_sy2 * _dot_t(kmc, kmc)              # += Knm^T Knm / sy^2
    kty_ref[...] += jnp.dot(kmc, yc_ref[...], precision=_HI,
                            preferred_element_type=_F32)     # += Knm^T y_c

    @pl.when(step == last)
    def _finalize():
        zz_row = _dot_t(ones_d, z * z)                       # (1, M)
        sq_mm = jnp.maximum(zz_col + zz_row - 2.0 * _dot_t(z, z), 0.0)
        kmm = sf2 * jnp.exp(-sq_mm)
        kmm_ref[...] = kmm
        amat_ref[...] += kmm + _JITTER * _eye(kmm.shape[0])


def _target_kernel(params_ref, z_ref, xt_ref, kmt_ref):
    """Grid (Nt_pad/TN,), 'parallel'.  kmt tile = k(Z, X_t tile)  (M, TN)."""
    sf2 = params_ref[0]
    scale = params_ref[1]
    z = z_ref[...] * scale
    xt = xt_ref[...] * scale
    ones_d = jnp.ones((1, z.shape[1]), _F32)
    zz_col = jnp.sum(z * z, axis=1, keepdims=True)
    xt_row = _dot_t(ones_d, xt * xt)
    sq = jnp.maximum(zz_col + xt_row - 2.0 * _dot_t(z, xt), 0.0)
    kmt_ref[...] = sf2 * jnp.exp(-sq)


def _qu_kernel(params_ref, kmm_ref, x_ref, w_ref, c_ref, mvec_ref):
    """With X = L^{-1} Kmm and w = L^{-1} Kty (L = chol(A_mat)):
         m_star = sigma_y^-2 X^T w           (M, 1)
         S_star = X^T X + 1e-4 I
         C      = Kmm - S_star               (M, M)
       No explicit A_mat^{-1} is formed."""
    inv_sy2 = params_ref[2]
    x = x_ref[...]
    m = x.shape[0]
    c_ref[...] = kmm_ref[...] - _dot_tn(x, x) - _JITTER * _eye(m)
    mvec_ref[...] = inv_sy2 * _dot_tn(x, w_ref[...])


def _predict_kernel(params_ref, c_ref, mvec_ref, at_ref, mean_ref, std_ref):
    """Grid (Nt_pad/TN,), 'parallel'.  Lane-dense (1, TN) mean / std rows."""
    sf2 = params_ref[0]
    sy2 = params_ref[3]
    at = at_ref[...]                                         # (M, TN) == A^T tile
    mu = jnp.sum(mvec_ref[...] * at, axis=0, keepdims=True)  # (A m_star)^T
    cb = jnp.dot(c_ref[...], at, precision=_HI, preferred_element_type=_F32)
    quad = jnp.sum(at * cb, axis=0, keepdims=True)           # diag(A C A^T)
    f_var = sf2 - quad
    mean_ref[...] = mu
    # clamp-then-square epilogue folded: std = sqrt(max(f_var, 1e-8) + sy^2)
    std_ref[...] = jnp.sqrt(jnp.maximum(f_var, 1e-8) + sy2)


# ---------------------------------------------------------------------------
# Pallas wrappers
# ---------------------------------------------------------------------------

def _compiler_params(semantics=None):
    return pltpu.CompilerParams(dimension_semantics=semantics,
                                vmem_limit_bytes=_VMEM_LIMIT)


def _context_matrices(params_vec, Z, Xc_pad, yc_pad, nc_valid, tc):
    m, d = Z.shape
    nc_pad = Xc_pad.shape[0]
    shp = jax.ShapeDtypeStruct
    cost = pl.CostEstimate(
        flops=int(2 * m * nc_pad * d + 2 * m * m * nc_pad + 2 * m * nc_pad
                  + 2 * m * m * d),
        transcendentals=int(m * nc_pad + m * m),
        bytes_accessed=int(4 * (m * d + nc_pad * d + nc_pad + 2 * m * m + m)))
    return pl.pallas_call(
        functools.partial(_context_kernel, nc_valid=nc_valid),
        out_shape=(shp((m, m), _F32),      # Kmm
                   shp((m, m), _F32),      # A_mat
                   shp((m, 1), _F32)),     # Kty
        grid_spec=pltpu.PrefetchScalarGridSpec(
            num_scalar_prefetch=1,
            grid=(nc_pad // tc,),
            in_specs=[pl.BlockSpec((m, d), lambda i, p: (0, 0)),
                      pl.BlockSpec((tc, d), lambda i, p: (i, 0)),
                      pl.BlockSpec((tc, 1), lambda i, p: (i, 0))],
            out_specs=(pl.BlockSpec((m, m), lambda i, p: (0, 0)),
                       pl.BlockSpec((m, m), lambda i, p: (0, 0)),
                       pl.BlockSpec((m, 1), lambda i, p: (0, 0)))),
        compiler_params=_compiler_params(("arbitrary",)),
        cost_estimate=cost,
    )(params_vec, Z, Xc_pad, yc_pad)


def _target_covariance(params_vec, Z, Xt_pad, tn):
    m, d = Z.shape
    nt_pad = Xt_pad.shape[0]
    cost = pl.CostEstimate(
        flops=int(2 * m * nt_pad * d),
        transcendentals=int(m * nt_pad),
        bytes_accessed=int(4 * (m * d + nt_pad * d + m * nt_pad)))
    return pl.pallas_call(
        _target_kernel,
        out_shape=jax.ShapeDtypeStruct((m, nt_pad), _F32),   # Kmt = Knm_t^T
        grid_spec=pltpu.PrefetchScalarGridSpec(
            num_scalar_prefetch=1,
            grid=(nt_pad // tn,),
            in_specs=[pl.BlockSpec((m, d), lambda i, p: (0, 0)),
                      pl.BlockSpec((tn, d), lambda i, p: (i, 0))],
            out_specs=pl.BlockSpec((m, tn), lambda i, p: (0, i))),
        compiler_params=_compiler_params(("parallel",)),
        cost_estimate=cost,
    )(params_vec, Z, Xt_pad)


def _qu_moments(params_vec, Kmm, X, w):
    m = Kmm.shape[0]
    shp = jax.ShapeDtypeStruct
    cost = pl.CostEstimate(flops=int(2 * m ** 3 + 2 * m * m), transcendentals=0,
                           bytes_accessed=int(4 * (3 * m * m + 2 * m)))
    return pl.pallas_call(
        _qu_kernel,
        out_shape=(shp((m, m), _F32),      # C = Kmm - S_star
                   shp((m, 1), _F32)),     # m_star
        in_specs=[_SMEM, _VMEM, _VMEM, _VMEM],
        out_specs=(_VMEM, _VMEM),
        compiler_params=_compiler_params(),
        cost_estimate=cost,
    )(params_vec, Kmm, X, w)


def _predict(params_vec, C, m_vec, AT, tn):
    m, nt_pad = AT.shape
    shp = jax.ShapeDtypeStruct
    cost = pl.CostEstimate(
        flops=int(2 * m * m * nt_pad + 4 * m * nt_pad),
        transcendentals=int(nt_pad),
        bytes_accessed=int(4 * (m * m + m + m * nt_pad + 2 * nt_pad)))
    return pl.pallas_call(
        _predict_kernel,
        out_shape=(shp((1, nt_pad), _F32),     # predictive mean row (lane-dense)
                   shp((1, nt_pad), _F32)),    # predictive std  row (lane-dense)
        grid_spec=pltpu.PrefetchScalarGridSpec(
            num_scalar_prefetch=1,
            grid=(nt_pad // tn,),
            in_specs=[pl.BlockSpec((m, m), lambda i, p: (0, 0)),
                      pl.BlockSpec((m, 1), lambda i, p: (0, 0)),
                      pl.BlockSpec((m, tn), lambda i, p: (0, i))],
            out_specs=(pl.BlockSpec((1, tn), lambda i, p: (0, i)),
                       pl.BlockSpec((1, tn), lambda i, p: (0, i)))),
        compiler_params=_compiler_params(("parallel",)),
        cost_estimate=cost,
    )(params_vec, C, m_vec, AT)


# ---------------------------------------------------------------------------
# BaseSVGP forward (posterior predictive), mirroring the torch semantics
# ---------------------------------------------------------------------------

@jax.jit
def svgp_forward(params, X_t, X_c, y_c):
    sf2 = jnp.exp(2.0 * params["log_sigma_f"])               # sigma_f^2
    inv_l = jnp.exp(-params["log_l"])                        # 1 / l
    scale = jnp.sqrt(jnp.float32(0.5)) * inv_l               # sqrt(0.5)/l prescale
    sy2 = jnp.exp(2.0 * params["log_sigma_y"])               # sigma_y^2
    inv_sy2 = 1.0 / sy2
    Z = params["Z"].astype(_F32)
    M, D = Z.shape
    n_c = X_c.shape[0]
    n_t = X_t.shape[0]

    # Lane-align context / target axes (masked in-kernel / sliced at the end).
    tc = min(_MAX_TILE, _round_up(n_c, _LANE))
    tn = min(_MAX_TILE, _round_up(n_t, _LANE))
    nc_pad = _round_up(n_c, tc)
    nt_pad = _round_up(n_t, tn)
    Xc_pad = jnp.pad(X_c.astype(_F32), ((0, nc_pad - n_c), (0, 0)))
    yc_pad = jnp.pad(y_c.astype(_F32), ((0, nc_pad - n_c), (0, 0)))
    Xt_pad = jnp.pad(X_t.astype(_F32), ((0, nt_pad - n_t), (0, 0)))

    params_vec = jnp.stack([sf2, scale, inv_sy2, sy2]).astype(_F32)

    # ---- Pallas: context-side covariances / Titsias A-matrix ---------------
    Kmm, A_mat, Kty = _context_matrices(params_vec, Z, Xc_pad, yc_pad, n_c, tc)
    # ---- Pallas: k(Z, X_t) --------------------------------------------------
    Kmt = _target_covariance(params_vec, Z, Xt_pad, tn)

    # ---- XLA glue: Cholesky + triangular solves (no Pallas equivalent) -----
    eye = jnp.eye(M, dtype=_F32)
    L = jnp.linalg.cholesky(A_mat)                                   # chol(A_mat)
    X = jax.scipy.linalg.solve_triangular(L, Kmm, lower=True)        # L^{-1} Kmm
    w = jax.scipy.linalg.solve_triangular(L, Kty, lower=True)        # L^{-1} Kty
    Lmm = jnp.linalg.cholesky(Kmm + _CHOL_JITTER * eye)
    AT = jax.scipy.linalg.cho_solve((Lmm, True), Kmt)                # Kmm^{-1} Kmt

    # ---- Pallas: q(u*) moments then predictive mean / std ------------------
    C, m_vec = _qu_moments(params_vec, Kmm, X, w)
    mean_row, std_row = _predict(params_vec, C, m_vec, AT, tn)
    return mean_row[0, :n_t], std_row[0, :n_t]


# ---------------------------------------------------------------------------
# Pure-JAX reference (mirrors the torch math directly) for validation
# ---------------------------------------------------------------------------

def _reference(params, X_t, X_c, y_c):
    with jax.default_matmul_precision("highest"):
        sf2 = jnp.exp(2.0 * params["log_sigma_f"])
        inv_l2 = jnp.exp(-2.0 * params["log_l"])
        sy2 = jnp.exp(2.0 * params["log_sigma_y"])
        Z = params["Z"]
        M = Z.shape[0]

        def k(a, b):
            d2 = (jnp.sum(a * a, 1)[:, None] + jnp.sum(b * b, 1)[None, :]
                  - 2.0 * a @ b.T)
            return sf2 * jnp.exp(-0.5 * inv_l2 * jnp.maximum(d2, 0.0))

        Kmm = k(Z, Z)
        Knm = k(X_c, Z)
        A_mat = Kmm + (1.0 / sy2) * Knm.T @ Knm + _JITTER * jnp.eye(M)
        Sigma = jnp.linalg.inv(A_mat)
        m_star = (1.0 / sy2) * Kmm @ Sigma @ Knm.T @ y_c
        S_star = Kmm @ Sigma @ Kmm + _JITTER * jnp.eye(M)
        Knm_t = k(X_t, Z)
        Lmm = jnp.linalg.cholesky(Kmm + _CHOL_JITTER * jnp.eye(M))
        A = jax.scipy.linalg.cho_solve((Lmm, True), Knm_t.T).T
        f_mu = (A @ m_star)[:, 0]
        f_var = sf2 - jnp.einsum("ij,jk,ik->i", A, Kmm - S_star, A)
        f_std = jnp.maximum(jnp.sqrt(jnp.maximum(f_var, 0.0)), 1e-4)
        return f_mu, jnp.sqrt(f_std ** 2 + sy2)


# ---------------------------------------------------------------------------
# Demo
# ---------------------------------------------------------------------------

if __name__ == "__main__":
    x_dim, num_inducing, n_c, n_t = 4, 16, 48, 40

    key = jax.random.PRNGKey(0)
    k1, k2, k3, k4 = jax.random.split(key, 4)
    X_c = jax.random.normal(k1, (n_c, x_dim), _F32)
    y_c = jax.random.normal(k2, (n_c, 1), _F32)
    X_t = jax.random.normal(k3, (n_t, x_dim), _F32)

    params = {
        "log_sigma_f": jnp.float32(0.0),           # sigma_f = 1.0
        "log_l": jnp.float32(0.0),                 # lengthscale = 1.0
        "log_sigma_y": jnp.float32(jnp.log(0.2)),  # sigma_y = 0.2
        "Z": jax.random.normal(k4, (num_inducing, x_dim), _F32),
    }

    mean, std = svgp_forward(params, X_t, X_c, y_c)
    jax.block_until_ready((mean, std))

    assert mean.shape == (n_t,) and std.shape == (n_t,)
    assert bool(jnp.all(jnp.isfinite(mean))) and bool(jnp.all(std > 0))

    ref_mean, ref_std = _reference(params, X_t, X_c, y_c)
    assert bool(jnp.allclose(mean, ref_mean, rtol=1e-2, atol=1e-2)), "mean mismatch"
    assert bool(jnp.allclose(std, ref_std, rtol=1e-2, atol=1e-2)), "std mismatch"

    print("KERNEL_OK")
</pallas_src>

<mosaic_0001>
module attributes {stable_mosaic.version = 11 : i64} {
  func.func @_context_kernel(%arg0: i32, %arg1: memref<4xf32, #tpu.memory_space<smem>>, %arg2: memref<16x4xf32, #tpu.memory_space<vmem>>, %arg3: memref<128x4xf32, #tpu.memory_space<vmem>>, %arg4: memref<128x1xf32, #tpu.memory_space<vmem>>, %arg5: memref<16x16xf32, #tpu.memory_space<vmem>>, %arg6: memref<16x16xf32, #tpu.memory_space<vmem>>, %arg7: memref<16x1xf32, #tpu.memory_space<vmem>>) attributes {dimension_semantics = [#tpu.dimension_semantics<arbitrary>], iteration_bounds = array<i64: 1>, scalar_prefetch = 1 : i64, scratch_operands = 0 : i64, tpu.core_type = #tpu.core_type<tc>, window_params = [{pipeline_mode = #tpu.pipeline_mode<synchronous>, transform_indices = @transform_0, window_bounds = array<i64: 16, 4>}, {transform_indices = @transform_1, window_bounds = array<i64: 128, 4>}, {transform_indices = @transform_2, window_bounds = array<i64: 128, 1>}, {pipeline_mode = #tpu.pipeline_mode<synchronous>, transform_indices = @transform_3, window_bounds = array<i64: 16, 16>}, {pipeline_mode = #tpu.pipeline_mode<synchronous>, transform_indices = @transform_4, window_bounds = array<i64: 16, 16>}, {pipeline_mode = #tpu.pipeline_mode<synchronous>, transform_indices = @transform_5, window_bounds = array<i64: 16, 1>}]} {
    %c0 = arith.constant 0 : index
    %0 = memref.load %arg1[%c0] : memref<4xf32, #tpu.memory_space<smem>>
    %c1 = arith.constant 1 : index
    %1 = memref.load %arg1[%c1] : memref<4xf32, #tpu.memory_space<smem>>
    %c2 = arith.constant 2 : index
    %2 = memref.load %arg1[%c2] : memref<4xf32, #tpu.memory_space<smem>>
    %c0_0 = arith.constant 0 : index
    %c0_1 = arith.constant 0 : index
    %3 = vector.load %arg2[%c0_0, %c0_1] : memref<16x4xf32, #tpu.memory_space<vmem>>, vector<16x4xf32>
    %4 = vector.broadcast %1 : f32 to vector<16x4xf32>
    %5 = arith.mulf %3, %4 : vector<16x4xf32>
    %c0_2 = arith.constant 0 : index
    %c0_3 = arith.constant 0 : index
    %6 = vector.load %arg3[%c0_2, %c0_3] : memref<128x4xf32, #tpu.memory_space<vmem>>, vector<128x4xf32>
    %7 = vector.broadcast %1 : f32 to vector<128x4xf32>
    %8 = arith.mulf %6, %7 : vector<128x4xf32>
    %cst = arith.constant 1.000000e+00 : f32
    %9 = vector.broadcast %cst : f32 to vector<1x4xf32>
    %10 = arith.mulf %5, %5 : vector<16x4xf32>
    %cst_4 = arith.constant dense<0.000000e+00> : vector<16xf32>
    %11 = vector.multi_reduction <add>, %10, %cst_4 [1] : vector<16x4xf32> to vector<16xf32>
    %12 = vector.shape_cast %11 : vector<16xf32> to vector<16x1xf32>
    %13 = arith.mulf %8, %8 : vector<128x4xf32>
    %cst_5 = arith.constant dense<0.000000e+00> : vector<1x128xf32>
    %14 = tpu.matmul %9, %13, %cst_5 {dimension_numbers = #tpu.dot_dimension_numbers<[1], [1], [0], [0], [0, 0, 1, 0], [], []>, precision = #tpu.contract_precision<fp32>} : vector<1x4xf32>, vector<128x4xf32>, vector<1x128xf32> -> vector<1x128xf32>
    %15 = vector.broadcast %12 : vector<16x1xf32> to vector<16x128xf32>
    %16 = vector.broadcast %14 : vector<1x128xf32> to vector<16x128xf32>
    %17 = arith.addf %15, %16 : vector<16x128xf32>
    %cst_6 = arith.constant dense<0.000000e+00> : vector<16x128xf32>
    %18 = tpu.matmul %5, %8, %cst_6 {dimension_numbers = #tpu.dot_dimension_numbers<[1], [1], [0], [0], [0, 0, 1, 0], [], []>, precision = #tpu.contract_precision<fp32>} : vector<16x4xf32>, vector<128x4xf32>, vector<16x128xf32> -> vector<16x128xf32>
    %cst_7 = arith.constant 2.000000e+00 : f32
    %19 = vector.broadcast %cst_7 : f32 to vector<16x128xf32>
    %20 = arith.mulf %19, %18 : vector<16x128xf32>
    %21 = arith.subf %17, %20 : vector<16x128xf32>
    %cst_8 = arith.constant 0.000000e+00 : f32
    %22 = vector.broadcast %cst_8 : f32 to vector<16x128xf32>
    %23 = arith.maximumf %21, %22 : vector<16x128xf32>
    %cst_9 = arith.constant 0.000000e+00 : f32
    %24 = vector.broadcast %cst_9 : f32 to vector<16x128xf32>
    %25 = arith.subf %24, %23 : vector<16x128xf32>
    %26 = math.exp %25 : vector<16x128xf32>
    %27 = vector.broadcast %0 : f32 to vector<16x128xf32>
    %28 = arith.mulf %27, %26 : vector<16x128xf32>
    %c128_i32 = arith.constant 128 : i32
    %29 = arith.muli %arg0, %c128_i32 : i32
    %30 = tpu.iota {dimensions = array<i32: 1>} : vector<1x128xi32>
    %31 = vector.broadcast %29 : i32 to vector<1x128xi32>
    %32 = arith.addi %31, %30 : vector<1x128xi32>
    %c48_i32 = arith.constant 48 : i32
    %33 = vector.broadcast %c48_i32 : i32 to vector<1x128xi32>
    %34 = arith.cmpi slt, %32, %33 : vector<1x128xi32>
    %cst_10 = arith.constant 0.000000e+00 : f32
    %35 = vector.shape_cast %34 : vector<1x128xi1> to vector<1x128xi1>
    %36 = vector.broadcast %35 : vector<1x128xi1> to vector<16x128xi1>
    %37 = vector.broadcast %cst_10 : f32 to vector<16x128xf32>
    %38 = arith.select %36, %28, %37 : vector<16x128xi1>, vector<16x128xf32>
    %c0_i32 = arith.constant 0 : i32
    %39 = arith.cmpi eq, %arg0, %c0_i32 : i32
    %40 = arith.extui %39 : i1 to i32
    %c0_i32_11 = arith.constant 0 : i32
    %41 = arith.cmpi ne, %40, %c0_i32_11 : i32
    scf.if %41 {
      %cst_26 = arith.constant 0.000000e+00 : f32
      %56 = vector.broadcast %cst_26 : f32 to vector<16x16xf32>
      %c0_27 = arith.constant 0 : index
      %c0_28 = arith.constant 0 : index
      %57 = vector.load %arg6[%c0_27, %c0_28] : memref<16x16xf32, #tpu.memory_space<vmem>>, vector<16x16xf32>
      tpu.vector_store %arg6[%c0_27, %c0_28], %56 {strides = array<i32>} : memref<16x16xf32, #tpu.memory_space<vmem>>, vector<16x16xf32>,
      %cst_29 = arith.constant 0.000000e+00 : f32
      %58 = vector.broadcast %cst_29 : f32 to vector<16x1xf32>
      %c0_30 = arith.constant 0 : index
      %c0_31 = arith.constant 0 : index
      %59 = vector.load %arg7[%c0_30, %c0_31] : memref<16x1xf32, #tpu.memory_space<vmem>>, vector<16x1xf32>
      tpu.vector_store %arg7[%c0_30, %c0_31], %58 {strides = array<i32>} : memref<16x1xf32, #tpu.memory_space<vmem>>, vector<16x1xf32>,
    } else {
    }
    %c0_12 = arith.constant 0 : index
    %c0_13 = arith.constant 0 : index
    %42 = vector.load %arg6[%c0_12, %c0_13] : memref<16x16xf32, #tpu.memory_space<vmem>>, vector<16x16xf32>
    %cst_14 = arith.constant dense<0.000000e+00> : vector<16x16xf32>
    %43 = tpu.matmul %38, %38, %cst_14 {dimension_numbers = #tpu.dot_dimension_numbers<[1], [1], [0], [0], [0, 0, 1, 0], [], []>, precision = #tpu.contract_precision<fp32>} : vector<16x128xf32>, vector<16x128xf32>, vector<16x16xf32> -> vector<16x16xf32>
    %44 = vector.broadcast %2 : f32 to vector<16x16xf32>
    %45 = arith.mulf %44, %43 : vector<16x16xf32>
    %46 = arith.addf %42, %45 : vector<16x16xf32>
    %c0_15 = arith.constant 0 : index
    %c0_16 = arith.constant 0 : index
    %47 = vector.load %arg6[%c0_15, %c0_16] : memref<16x16xf32, #tpu.memory_space<vmem>>, vector<16x16xf32>
    tpu.vector_store %arg6[%c0_15, %c0_16], %46 {strides = array<i32>} : memref<16x16xf32, #tpu.memory_space<vmem>>, vector<16x16xf32>,
    %c0_17 = arith.constant 0 : index
    %c0_18 = arith.constant 0 : index
    %48 = vector.load %arg7[%c0_17, %c0_18] : memref<16x1xf32, #tpu.memory_space<vmem>>, vector<16x1xf32>
    %c0_19 = arith.constant 0 : index
    %c0_20 = arith.constant 0 : index
    %49 = vector.load %arg4[%c0_19, %c0_20] : memref<128x1xf32, #tpu.memory_space<vmem>>, vector<128x1xf32>
    %cst_21 = arith.constant dense<0.000000e+00> : vector<16x1xf32>
    %50 = tpu.matmul %38, %49, %cst_21 {dimension_numbers = #tpu.dot_dimension_numbers<[1], [0], [0], [1], [0, 0, 1, 1], [], []>, precision = #tpu.contract_precision<fp32>} : vector<16x128xf32>, vector<128x1xf32>, vector<16x1xf32> -> vector<16x1xf32>
    %51 = arith.addf %48, %50 : vector<16x1xf32>
    %c0_22 = arith.constant 0 : index
    %c0_23 = arith.constant 0 : index
    %52 = vector.load %arg7[%c0_22, %c0_23] : memref<16x1xf32, #tpu.memory_space<vmem>>, vector<16x1xf32>
    tpu.vector_store %arg7[%c0_22, %c0_23], %51 {strides = array<i32>} : memref<16x1xf32, #tpu.memory_space<vmem>>, vector<16x1xf32>,
    %c0_i32_24 = arith.constant 0 : i32
    %53 = arith.cmpi eq, %arg0, %c0_i32_24 : i32
    %54 = arith.extui %53 : i1 to i32
    %c0_i32_25 = arith.constant 0 : i32
    %55 = arith.cmpi ne, %54, %c0_i32_25 : i32
    scf.if %55 {
      %56 = arith.mulf %5, %5 : vector<16x4xf32>
      %cst_26 = arith.constant dense<0.000000e+00> : vector<1x16xf32>
      %57 = tpu.matmul %9, %56, %cst_26 {dimension_numbers = #tpu.dot_dimension_numbers<[1], [1], [0], [0], [0, 0, 1, 0], [], []>, precision = #tpu.contract_precision<fp32>} : vector<1x4xf32>, vector<16x4xf32>, vector<1x16xf32> -> vector<1x16xf32>
      %58 = vector.broadcast %12 : vector<16x1xf32> to vector<16x16xf32>
      %59 = vector.broadcast %57 : vector<1x16xf32> to vector<16x16xf32>
      %60 = arith.addf %58, %59 : vector<16x16xf32>
      %cst_27 = arith.constant dense<0.000000e+00> : vector<16x16xf32>
      %61 = tpu.matmul %5, %5, %cst_27 {dimension_numbers = #tpu.dot_dimension_numbers<[1], [1], [0], [0], [0, 0, 1, 0], [], []>, precision = #tpu.contract_precision<fp32>} : vector<16x4xf32>, vector<16x4xf32>, vector<16x16xf32> -> vector<16x16xf32>
      %cst_28 = arith.constant 2.000000e+00 : f32
      %62 = vector.broadcast %cst_28 : f32 to vector<16x16xf32>
      %63 = arith.mulf %62, %61 : vector<16x16xf32>
      %64 = arith.subf %60, %63 : vector<16x16xf32>
      %cst_29 = arith.constant 0.000000e+00 : f32
      %65 = vector.broadcast %cst_29 : f32 to vector<16x16xf32>
      %66 = arith.maximumf %64, %65 : vector<16x16xf32>
      %cst_30 = arith.constant 0.000000e+00 : f32
      %67 = vector.broadcast %cst_30 : f32 to vector<16x16xf32>
      %68 = arith.subf %67, %66 : vector<16x16xf32>
      %69 = math.exp %68 : vector<16x16xf32>
      %70 = vector.broadcast %0 : f32 to vector<16x16xf32>
      %71 = arith.mulf %70, %69 : vector<16x16xf32>
      %c0_31 = arith.constant 0 : index
      %c0_32 = arith.constant 0 : index
      %72 = vector.load %arg5[%c0_31, %c0_32] : memref<16x16xf32, #tpu.memory_space<vmem>>, vector<16x16xf32>
      tpu.vector_store %arg5[%c0_31, %c0_32], %71 {strides = array<i32>} : memref<16x16xf32, #tpu.memory_space<vmem>>, vector<16x16xf32>,
      %c0_33 = arith.constant 0 : index
      %c0_34 = arith.constant 0 : index
      %73 = vector.load %arg6[%c0_33, %c0_34] : memref<16x16xf32, #tpu.memory_space<vmem>>, vector<16x16xf32>
      %74 = tpu.iota {dimensions = array<i32: 0>} : vector<16x16xi32>
      %75 = tpu.iota {dimensions = array<i32: 1>} : vector<16x16xi32>
      %76 = arith.cmpi eq, %74, %75 : vector<16x16xi32>
      %77 = arith.extui %76 : vector<16x16xi1> to vector<16x16xi32>
      %78 = arith.sitofp %77 : vector<16x16xi32> to vector<16x16xf32>
      %cst_35 = arith.constant 9.99999974E-5 : f32
      %79 = vector.broadcast %cst_35 : f32 to vector<16x16xf32>
      %80 = arith.mulf %79, %78 : vector<16x16xf32>
      %81 = arith.addf %71, %80 : vector<16x16xf32>
      %82 = arith.addf %73, %81 : vector<16x16xf32>
      %c0_36 = arith.constant 0 : index
      %c0_37 = arith.constant 0 : index
      %83 = vector.load %arg6[%c0_36, %c0_37] : memref<16x16xf32, #tpu.memory_space<vmem>>, vector<16x16xf32>
      tpu.vector_store %arg6[%c0_36, %c0_37], %82 {strides = array<i32>} : memref<16x16xf32, #tpu.memory_space<vmem>>, vector<16x16xf32>,
    } else {
    }
    return
  }
  func.func @transform_0(%arg0: i32, %arg1: memref<4xf32, #tpu.memory_space<smem>>) -> (i32, i32) {
    %c0_i32 = arith.constant 0 : i32
    %c0_i32_0 = arith.constant 0 : i32
    %c0_i32_1 = arith.constant 0 : i32
    return %c0_i32, %c0_i32_0 : i32, i32
  }
  func.func @transform_1(%arg0: i32, %arg1: memref<4xf32, #tpu.memory_space<smem>>) -> (i32, i32) {
    %c0_i32 = arith.constant 0 : i32
    %c0_i32_0 = arith.constant 0 : i32
    return %arg0, %c0_i32 : i32, i32
  }
  func.func @transform_2(%arg0: i32, %arg1: memref<4xf32, #tpu.memory_space<smem>>) -> (i32, i32) {
    %c0_i32 = arith.constant 0 : i32
    %c0_i32_0 = arith.constant 0 : i32
    return %arg0, %c0_i32 : i32, i32
  }
  func.func @transform_3(%arg0: i32, %arg1: memref<4xf32, #tpu.memory_space<smem>>) -> (i32, i32) {
    %c0_i32 = arith.constant 0 : i32
    %c0_i32_0 = arith.constant 0 : i32
    %c0_i32_1 = arith.constant 0 : i32
    return %c0_i32, %c0_i32_0 : i32, i32
  }
  func.func @transform_4(%arg0: i32, %arg1: memref<4xf32, #tpu.memory_space<smem>>) -> (i32, i32) {
    %c0_i32 = arith.constant 0 : i32
    %c0_i32_0 = arith.constant 0 : i32
    %c0_i32_1 = arith.constant 0 : i32
    return %c0_i32, %c0_i32_0 : i32, i32
  }
  func.func @transform_5(%arg0: i32, %arg1: memref<4xf32, #tpu.memory_space<smem>>) -> (i32, i32) {
    %c0_i32 = arith.constant 0 : i32
    %c0_i32_0 = arith.constant 0 : i32
    %c0_i32_1 = arith.constant 0 : i32
    return %c0_i32, %c0_i32_0 : i32, i32
  }
}

module attributes {stable_mosaic.version = 11 : i64} {
  func.func @_target_kernel(%arg0: i32, %arg1: memref<4xf32, #tpu.memory_space<smem>>, %arg2: memref<16x4xf32, #tpu.memory_space<vmem>>, %arg3: memref<128x4xf32, #tpu.memory_space<vmem>>, %arg4: memref<16x128xf32, #tpu.memory_space<vmem>>) attributes {dimension_semantics = [#tpu.dimension_semantics<parallel>], iteration_bounds = array<i64: 1>, scalar_prefetch = 1 : i64, scratch_operands = 0 : i64, tpu.core_type = #tpu.core_type<tc>, window_params = [{pipeline_mode = #tpu.pipeline_mode<synchronous>, transform_indices = @transform_0, window_bounds = array<i64: 16, 4>}, {transform_indices = @transform_1, window_bounds = array<i64: 128, 4>}, {transform_indices = @transform_2, window_bounds = array<i64: 16, 128>}]} {
    %c0 = arith.constant 0 : index
    %0 = memref.load %arg1[%c0] : memref<4xf32, #tpu.memory_space<smem>>
    %c1 = arith.constant 1 : index
    %1 = memref.load %arg1[%c1] : memref<4xf32, #tpu.memory_space<smem>>
    %c0_0 = arith.constant 0 : index
    %c0_1 = arith.constant 0 : index
    %2 = vector.load %arg2[%c0_0, %c0_1] : memref<16x4xf32, #tpu.memory_space<vmem>>, vector<16x4xf32>
    %3 = vector.broadcast %1 : f32 to vector<16x4xf32>
    %4 = arith.mulf %2, %3 : vector<16x4xf32>
    %c0_2 = arith.constant 0 : index
    %c0_3 = arith.constant 0 : index
    %5 = vector.load %arg3[%c0_2, %c0_3] : memref<128x4xf32, #tpu.memory_space<vmem>>, vector<128x4xf32>
    %6 = vector.broadcast %1 : f32 to vector<128x4xf32>
    %7 = arith.mulf %5, %6 : vector<128x4xf32>
    %cst = arith.constant 1.000000e+00 : f32
    %8 = vector.broadcast %cst : f32 to vector<1x4xf32>
    %9 = arith.mulf %4, %4 : vector<16x4xf32>
    %cst_4 = arith.constant dense<0.000000e+00> : vector<16xf32>
    %10 = vector.multi_reduction <add>, %9, %cst_4 [1] : vector<16x4xf32> to vector<16xf32>
    %11 = vector.shape_cast %10 : vector<16xf32> to vector<16x1xf32>
    %12 = arith.mulf %7, %7 : vector<128x4xf32>
    %cst_5 = arith.constant dense<0.000000e+00> : vector<1x128xf32>
    %13 = tpu.matmul %8, %12, %cst_5 {dimension_numbers = #tpu.dot_dimension_numbers<[1], [1], [0], [0], [0, 0, 1, 0], [], []>, precision = #tpu.contract_precision<fp32>} : vector<1x4xf32>, vector<128x4xf32>, vector<1x128xf32> -> vector<1x128xf32>
    %14 = vector.broadcast %11 : vector<16x1xf32> to vector<16x128xf32>
    %15 = vector.broadcast %13 : vector<1x128xf32> to vector<16x128xf32>
    %16 = arith.addf %14, %15 : vector<16x128xf32>
    %cst_6 = arith.constant dense<0.000000e+00> : vector<16x128xf32>
    %17 = tpu.matmul %4, %7, %cst_6 {dimension_numbers = #tpu.dot_dimension_numbers<[1], [1], [0], [0], [0, 0, 1, 0], [], []>, precision = #tpu.contract_precision<fp32>} : vector<16x4xf32>, vector<128x4xf32>, vector<16x128xf32> -> vector<16x128xf32>
    %cst_7 = arith.constant 2.000000e+00 : f32
    %18 = vector.broadcast %cst_7 : f32 to vector<16x128xf32>
    %19 = arith.mulf %18, %17 : vector<16x128xf32>
    %20 = arith.subf %16, %19 : vector<16x128xf32>
    %cst_8 = arith.constant 0.000000e+00 : f32
    %21 = vector.broadcast %cst_8 : f32 to vector<16x128xf32>
    %22 = arith.maximumf %20, %21 : vector<16x128xf32>
    %cst_9 = arith.constant 0.000000e+00 : f32
    %23 = vector.broadcast %cst_9 : f32 to vector<16x128xf32>
    %24 = arith.subf %23, %22 : vector<16x128xf32>
    %25 = math.exp %24 : vector<16x128xf32>
    %26 = vector.broadcast %0 : f32 to vector<16x128xf32>
    %27 = arith.mulf %26, %25 : vector<16x128xf32>
    %c0_10 = arith.constant 0 : index
    %c0_11 = arith.constant 0 : index
    %28 = vector.load %arg4[%c0_10, %c0_11] : memref<16x128xf32, #tpu.memory_space<vmem>>, vector<16x128xf32>
    tpu.vector_store %arg4[%c0_10, %c0_11], %27 {strides = array<i32>} : memref<16x128xf32, #tpu.memory_space<vmem>>, vector<16x128xf32>,
    return
  }
  func.func @transform_0(%arg0: i32, %arg1: memref<4xf32, #tpu.memory_space<smem>>) -> (i32, i32) {
    %c0_i32 = arith.constant 0 : i32
    %c0_i32_0 = arith.constant 0 : i32
    %c0_i32_1 = arith.constant 0 : i32
    return %c0_i32, %c0_i32_0 : i32, i32
  }
  func.func @transform_1(%arg0: i32, %arg1: memref<4xf32, #tpu.memory_space<smem>>) -> (i32, i32) {
    %c0_i32 = arith.constant 0 : i32
    %c0_i32_0 = arith.constant 0 : i32
    return %arg0, %c0_i32 : i32, i32
  }
  func.func @transform_2(%arg0: i32, %arg1: memref<4xf32, #tpu.memory_space<smem>>) -> (i32, i32) {
    %c0_i32 = arith.constant 0 : i32
    %c0_i32_0 = arith.constant 0 : i32
    return %c0_i32, %arg0 : i32, i32
  }
}

module attributes {stable_mosaic.version = 11 : i64} {
  func.func @_qu_kernel(%arg0: memref<4xf32, #tpu.memory_space<smem>>, %arg1: memref<16x16xf32, #tpu.memory_space<vmem>>, %arg2: memref<16x16xf32, #tpu.memory_space<vmem>>, %arg3: memref<16x1xf32, #tpu.memory_space<vmem>>, %arg4: memref<16x16xf32, #tpu.memory_space<vmem>>, %arg5: memref<16x1xf32, #tpu.memory_space<vmem>>) attributes {dimension_semantics = [], scalar_prefetch = 0 : i64, scratch_operands = 0 : i64, tpu.core_type = #tpu.core_type<tc>} {
    %c2 = arith.constant 2 : index
    %0 = memref.load %arg0[%c2] : memref<4xf32, #tpu.memory_space<smem>>
    %c0 = arith.constant 0 : index
    %c0_0 = arith.constant 0 : index
    %1 = vector.load %arg2[%c0, %c0_0] : memref<16x16xf32, #tpu.memory_space<vmem>>, vector<16x16xf32>
    %c0_1 = arith.constant 0 : index
    %c0_2 = arith.constant 0 : index
    %2 = vector.load %arg1[%c0_1, %c0_2] : memref<16x16xf32, #tpu.memory_space<vmem>>, vector<16x16xf32>
    %cst = arith.constant dense<0.000000e+00> : vector<16x16xf32>
    %3 = tpu.matmul %1, %1, %cst {dimension_numbers = #tpu.dot_dimension_numbers<[0], [0], [1], [1], [0, 1, 1, 1], [], []>, precision = #tpu.contract_precision<fp32>} : vector<16x16xf32>, vector<16x16xf32>, vector<16x16xf32> -> vector<16x16xf32>
    %4 = arith.subf %2, %3 : vector<16x16xf32>
    %5 = tpu.iota {dimensions = array<i32: 0>} : vector<16x16xi32>
    %6 = tpu.iota {dimensions = array<i32: 1>} : vector<16x16xi32>
    %7 = arith.cmpi eq, %5, %6 : vector<16x16xi32>
    %8 = arith.extui %7 : vector<16x16xi1> to vector<16x16xi32>
    %9 = arith.sitofp %8 : vector<16x16xi32> to vector<16x16xf32>
    %cst_3 = arith.constant 9.99999974E-5 : f32
    %10 = vector.broadcast %cst_3 : f32 to vector<16x16xf32>
    %11 = arith.mulf %10, %9 : vector<16x16xf32>
    %12 = arith.subf %4, %11 : vector<16x16xf32>
    %c0_4 = arith.constant 0 : index
    %c0_5 = arith.constant 0 : index
    %13 = vector.load %arg4[%c0_4, %c0_5] : memref<16x16xf32, #tpu.memory_space<vmem>>, vector<16x16xf32>
    tpu.vector_store %arg4[%c0_4, %c0_5], %12 {strides = array<i32>} : memref<16x16xf32, #tpu.memory_space<vmem>>, vector<16x16xf32>,
    %c0_6 = arith.constant 0 : index
    %c0_7 = arith.constant 0 : index
    %14 = vector.load %arg3[%c0_6, %c0_7] : memref<16x1xf32, #tpu.memory_space<vmem>>, vector<16x1xf32>
    %cst_8 = arith.constant dense<0.000000e+00> : vector<16x1xf32>
    %15 = tpu.matmul %1, %14, %cst_8 {dimension_numbers = #tpu.dot_dimension_numbers<[0], [0], [1], [1], [0, 1, 1, 1], [], []>, precision = #tpu.contract_precision<fp32>} : vector<16x16xf32>, vector<16x1xf32>, vector<16x1xf32> -> vector<16x1xf32>
    %16 = vector.broadcast %0 : f32 to vector<16x1xf32>
    %17 = arith.mulf %16, %15 : vector<16x1xf32>
    %c0_9 = arith.constant 0 : index
    %c0_10 = arith.constant 0 : index
    %18 = vector.load %arg5[%c0_9, %c0_10] : memref<16x1xf32, #tpu.memory_space<vmem>>, vector<16x1xf32>
    tpu.vector_store %arg5[%c0_9, %c0_10], %17 {strides = array<i32>} : memref<16x1xf32, #tpu.memory_space<vmem>>, vector<16x1xf32>,
    return
  }
}

module attributes {stable_mosaic.version = 11 : i64} {
  func.func @_predict_kernel(%arg0: i32, %arg1: memref<4xf32, #tpu.memory_space<smem>>, %arg2: memref<16x16xf32, #tpu.memory_space<vmem>>, %arg3: memref<16x1xf32, #tpu.memory_space<vmem>>, %arg4: memref<16x128xf32, #tpu.memory_space<vmem>>, %arg5: memref<1x128xf32, #tpu.memory_space<vmem>>, %arg6: memref<1x128xf32, #tpu.memory_space<vmem>>) attributes {dimension_semantics = [#tpu.dimension_semantics<parallel>], iteration_bounds = array<i64: 1>, scalar_prefetch = 1 : i64, scratch_operands = 0 : i64, tpu.core_type = #tpu.core_type<tc>, window_params = [{pipeline_mode = #tpu.pipeline_mode<synchronous>, transform_indices = @transform_0, window_bounds = array<i64: 16, 16>}, {pipeline_mode = #tpu.pipeline_mode<synchronous>, transform_indices = @transform_1, window_bounds = array<i64: 16, 1>}, {transform_indices = @transform_2, window_bounds = array<i64: 16, 128>}, {transform_indices = @transform_3, window_bounds = array<i64: 1, 128>}, {transform_indices = @transform_4, window_bounds = array<i64: 1, 128>}]} {
    %c0 = arith.constant 0 : index
    %0 = memref.load %arg1[%c0] : memref<4xf32, #tpu.memory_space<smem>>
    %c3 = arith.constant 3 : index
    %1 = memref.load %arg1[%c3] : memref<4xf32, #tpu.memory_space<smem>>
    %c0_0 = arith.constant 0 : index
    %c0_1 = arith.constant 0 : index
    %2 = vector.load %arg4[%c0_0, %c0_1] : memref<16x128xf32, #tpu.memory_space<vmem>>, vector<16x128xf32>
    %c0_2 = arith.constant 0 : index
    %c0_3 = arith.constant 0 : index
    %3 = vector.load %arg3[%c0_2, %c0_3] : memref<16x1xf32, #tpu.memory_space<vmem>>, vector<16x1xf32>
    %4 = vector.broadcast %3 : vector<16x1xf32> to vector<16x128xf32>
    %5 = arith.mulf %4, %2 : vector<16x128xf32>
    %cst = arith.constant dense<0.000000e+00> : vector<128xf32>
    %6 = vector.multi_reduction <add>, %5, %cst [0] : vector<16x128xf32> to vector<128xf32>
    %7 = vector.shape_cast %6 : vector<128xf32> to vector<1x128xf32>
    %c0_4 = arith.constant 0 : index
    %c0_5 = arith.constant 0 : index
    %8 = vector.load %arg2[%c0_4, %c0_5] : memref<16x16xf32, #tpu.memory_space<vmem>>, vector<16x16xf32>
    %cst_6 = arith.constant dense<0.000000e+00> : vector<16x128xf32>
    %9 = tpu.matmul %8, %2, %cst_6 {dimension_numbers = #tpu.dot_dimension_numbers<[1], [0], [0], [1], [0, 0, 1, 1], [], []>, precision = #tpu.contract_precision<fp32>} : vector<16x16xf32>, vector<16x128xf32>, vector<16x128xf32> -> vector<16x128xf32>
    %10 = arith.mulf %2, %9 : vector<16x128xf32>
    %cst_7 = arith.constant dense<0.000000e+00> : vector<128xf32>
    %11 = vector.multi_reduction <add>, %10, %cst_7 [0] : vector<16x128xf32> to vector<128xf32>
    %12 = vector.shape_cast %11 : vector<128xf32> to vector<1x128xf32>
    %13 = vector.broadcast %0 : f32 to vector<1x128xf32>
    %14 = arith.subf %13, %12 : vector<1x128xf32>
    %c0_8 = arith.constant 0 : index
    %c0_9 = arith.constant 0 : index
    %15 = vector.load %arg5[%c0_8, %c0_9] : memref<1x128xf32, #tpu.memory_space<vmem>>, vector<1x128xf32>
    tpu.vector_store %arg5[%c0_8, %c0_9], %7 {strides = array<i32>} : memref<1x128xf32, #tpu.memory_space<vmem>>, vector<1x128xf32>,
    %cst_10 = arith.constant 9.99999993E-9 : f32
    %16 = vector.broadcast %cst_10 : f32 to vector<1x128xf32>
    %17 = arith.maximumf %14, %16 : vector<1x128xf32>
    %18 = vector.broadcast %1 : f32 to vector<1x128xf32>
    %19 = arith.addf %17, %18 : vector<1x128xf32>
    %20 = math.sqrt %19 : vector<1x128xf32>
    %c0_11 = arith.constant 0 : index
    %c0_12 = arith.constant 0 : index
    %21 = vector.load %arg6[%c0_11, %c0_12] : memref<1x128xf32, #tpu.memory_space<vmem>>, vector<1x128xf32>
    tpu.vector_store %arg6[%c0_11, %c0_12], %20 {strides = array<i32>} : memref<1x128xf32, #tpu.memory_space<vmem>>, vector<1x128xf32>,
    return
  }
  func.func @transform_0(%arg0: i32, %arg1: memref<4xf32, #tpu.memory_space<smem>>) -> (i32, i32) {
    %c0_i32 = arith.constant 0 : i32
    %c0_i32_0 = arith.constant 0 : i32
    %c0_i32_1 = arith.constant 0 : i32
    return %c0_i32, %c0_i32_0 : i32, i32
  }
  func.func @transform_1(%arg0: i32, %arg1: memref<4xf32, #tpu.memory_space<smem>>) -> (i32, i32) {
    %c0_i32 = arith.constant 0 : i32
    %c0_i32_0 = arith.constant 0 : i32
    %c0_i32_1 = arith.constant 0 : i32
    return %c0_i32, %c0_i32_0 : i32, i32
  }
  func.func @transform_2(%arg0: i32, %arg1: memref<4xf32, #tpu.memory_space<smem>>) -> (i32, i32) {
    %c0_i32 = arith.constant 0 : i32
    %c0_i32_0 = arith.constant 0 : i32
    return %c0_i32, %arg0 : i32, i32
  }
  func.func @transform_3(%arg0: i32, %arg1: memref<4xf32, #tpu.memory_space<smem>>) -> (i32, i32) {
    %c0_i32 = arith.constant 0 : i32
    %c0_i32_0 = arith.constant 0 : i32
    return %c0_i32, %arg0 : i32, i32
  }
  func.func @transform_4(%arg0: i32, %arg1: memref<4xf32, #tpu.memory_space<smem>>) -> (i32, i32) {
    %c0_i32 = arith.constant 0 : i32
    %c0_i32_0 = arith.constant 0 : i32
    return %c0_i32, %arg0 : i32, i32
  }
}

</mosaic_0001>

<llo_original>
// kernel: custom-call.16
$region0: #{custom-call.16}
  %s0 = inlined_call_operand.vmem [shape: f32[16,16], index: 0, kind: input, shape index: {}]
  %s1 = inlined_call_operand.vmem [shape: f32[16,16], index: 1, kind: output, shape index: {}]
  $region1: #{custom-call.16} parent=0
    #allocation0 [shape = 'u8[8192]{0}', space=vmem, size = 0x2000, scoped, tag = 'operand span for operand 0']
    #allocation1 [shape = 'u8[8192]{0}', space=vmem, size = 0x2000, scoped, tag = 'operand span for operand 1']
    // Predicated region
    $region2: #{custom-call.16} parent=1 // pred_check
      _
    $region3: #{custom-call.16} parent=1 // pred_check_branch
      %3 = sbr.rel (0) target = $region5
    $region4: #{custom-call.16} parent=1 // pred_region
      // Predicated region
      $region6: #{custom-call.16} parent=4 // pred_check
        _
      $region7: #{custom-call.16} parent=4 // pred_check_branch
        %5 = sbr.rel (0) target = $region9
      $region8: #{custom-call.16} parent=4 // pred_region
        // Predicated region
        $region21: #{custom-call.16} parent=8 // pred_check
          _
        $region22: #{custom-call.16} parent=8 // pred_check_branch
          %23 = sbr.rel (0) target = $region24
        $region23: #{custom-call.16} parent=8 // pred_region
          loop: start=0, step=1, limit=1
          $region25: #{custom-call.16} parent=23 // loop_pre_header
            _
          $region26: #{custom-call.16} parent=23 // loop_header
            %s25 = sphi 0, %s29
            %p26 = scmp.ge.s32.totalorder %s25, 1
            %s30 = sphi %s0, %s0
            %s31 = sphi [#allocation0], [#allocation0]
          $region27: #{custom-call.16} parent=23 // loop_header_branch
            %28 = sbr.rel (%p26) target = $region31
          $region28: #{custom-call.16} parent=23 // loop_body
            %v32 = vld [vmem:[%s30] sm:$0xff]
            %33 = vst [vmem:[%s31] sm:$0xff] %v32
            %v34 = vld [vmem:[%s30 + $0x8] sm:$0xff]
            %35 = vst [vmem:[%s31 + $0x8] sm:$0xff] %v34
          $region29: #{custom-call.16} parent=23 // loop_footer
            %s29 = sadd.s32 1, %s25
          $region30: #{custom-call.16} parent=23 // loop_footer_branch
            %24 = sbr.rel target = $region26
          $region31: #{custom-call.16} parent=23 // loop_exit
            _
        $region24: #{custom-call.16} parent=8 // pred_fallthru
          _
        // Predicated region
        $region32: #{custom-call.16} parent=8 // pred_check
          _
        $region33: #{custom-call.16} parent=8 // pred_check_branch
          %37 = sbr.rel target = $region35
        $region34: #{custom-call.16} parent=8 // pred_region
          _
        $region35: #{custom-call.16} parent=8 // pred_fallthru
          _
      $region9: #{custom-call.16} parent=4 // pred_fallthru
        _
      // Predicated region
      $region10: #{custom-call.16} parent=4 // pred_check
        _
      $region11: #{custom-call.16} parent=4 // pred_check_branch
        %7 = sbr.rel target = $region13
      $region12: #{custom-call.16} parent=4 // pred_region
        %s9 = ssub.s32 256, 1
        loop: start=0, step=1, limit=1
        $region14: #{custom-call.16} parent=12 // loop_pre_header
          _
        $region15: #{custom-call.16} parent=12 // loop_header
          %s11 = sphi 0, %s15
          %p12 = scmp.ge.s32.totalorder %s11, 1
          %s16 = sphi %s0, %s0
          %s17 = sphi [#allocation0], [#allocation0]
        $region16: #{custom-call.16} parent=12 // loop_header_branch
          %14 = sbr.rel (%p12) target = $region20
        $region17: #{custom-call.16} parent=12 // loop_body
          %v18 = vld [vmem:[%s16] sm:%s9]
          %19 = vst [vmem:[%s17] sm:%s9] %v18
          %v20 = vld [vmem:[%s16 + $0x8] sm:%s9]
          %21 = vst [vmem:[%s17 + $0x8] sm:%s9] %v20
        $region18: #{custom-call.16} parent=12 // loop_footer
          %s15 = sadd.s32 1, %s11
        $region19: #{custom-call.16} parent=12 // loop_footer_branch
          %10 = sbr.rel target = $region15
        $region20: #{custom-call.16} parent=12 // loop_exit
          _
      $region13: #{custom-call.16} parent=4 // pred_fallthru
        _
    $region5: #{custom-call.16} parent=1 // pred_fallthru
      _
    %38 = vnop
    %39 = vst [vmem:[#allocation1] sm:$0xff] 0.0
    %s40 = scalar_lea.vmem [#allocation1], 8
    %41 = vst [vmem:[%s40] sm:$0xff] 0.0
    %vm42 = vcmask 7168
    %v43 = vld [vmem:[#allocation1] ss:$0 sm:$0xff]
    %v44 = vld [vmem:[#allocation0] ss:$0 sm:$0xff]
    %v45 = vmul.f32 %v43, %v43
    %46 = vadd.xlane.f32.xlu0 %v45
    %v47 = vpop.xlane.xlu0 %46
    %v48 = vsub.f32 %v44, %v47
    %v49 = vrsqrt.pop %v48
    %v50 = vmul.f32 %v49, %v48
    %v51 = vmul.f32 %v50, %v49
    %v52 = vmul.f32 0.5, %v51
    %v53 = vsub.f32 1.5, %v52
    %v54 = vmul.f32 %v49, %v53
    %vm55 = vweird.f32 %v48
    %vm56 = vweird.f32 %v49
    %vm57 = vmor %vm55, %vm56
    %v58 = vsel %vm57, %v49, %v54
    %v59 = vld [vmem:[#allocation0] sm:$0xff]
    %v60 = vld [vmem:[#allocation1] sm:$0xff]
    %v61 = vmul.f32 %v60, %v43
    %62 = vadd.xlane.f32.xlu0 %v61
    %v63 = vpop.xlane.xlu0 %62
    %v64 = vsub.f32 %v59, %v63
    %v65 = vmul.f32 %v64, %v58
    %v66 = vsel %vm42, %v65, 0.0
    %v67 = vadd.f32 %v60, %v66
    %68 = vst [vmem:[#allocation1] sm:$0xff] %v67
    %s69 = scalar_lea.vmem [#allocation0], 8
    %v70 = vld [vmem:[%s69] sm:$0xff]
    %s71 = scalar_lea.vmem [#allocation1], 8
    %v72 = vld [vmem:[%s71] sm:$0xff]
    %v73 = vmul.f32 %v72, %v43
    %74 = vadd.xlane.f32.xlu0 %v73
    %v75 = vpop.xlane.xlu0 %74
    %v76 = vsub.f32 %v70, %v75
    %v77 = vmul.f32 %v76, %v58
    %v78 = vsel %vm42, %v77, 0.0
    %v79 = vadd.f32 %v72, %v78
    %s80 = scalar_lea.vmem [#allocation1], 8
    %81 = vst [vmem:[%s80] sm:$0xff] %v79
    %vm82 = vcmask 15368
    %s83 = scalar_lea.vmem [#allocation1], 1
    %v84 = vld [vmem:[%s83] ss:$0 sm:$0xff]
    %s85 = scalar_lea.vmem [#allocation0], 1
    %v86 = vld [vmem:[%s85] ss:$0 sm:$0xff]
    %v87 = vmul.f32 %v84, %v84
    %88 = vadd.xlane.f32.xlu0 %v87
    %v89 = vpop.xlane.xlu0 %88
    %v90 = vsub.f32 %v86, %v89
    %v91 = vrsqrt.pop %v90
    %v92 = vmul.f32 %v91, %v90
    %v93 = vmul.f32 %v92, %v91
    %v94 = vmul.f32 0.5, %v93
    %v95 = vsub.f32 1.5, %v94
    %v96 = vmul.f32 %v91, %v95
    %vm97 = vweird.f32 %v90
    %vm98 = vweird.f32 %v91
    %vm99 = vmor %vm97, %vm98
    %v100 = vsel %vm99, %v91, %v96
    %v101 = vld [vmem:[#allocation0] sm:$0xff]
    %v102 = vld [vmem:[#allocation1] sm:$0xff]
    %v103 = vmul.f32 %v102, %v84
    %104 = vadd.xlane.f32.xlu0 %v103
    %v105 = vpop.xlane.xlu0 %104
    %v106 = vsub.f32 %v101, %v105
    %v107 = vmul.f32 %v106, %v100
    %vm108 = vcmask 1047553
    %vm109 = vmand %vm82, %vm108
    %v110 = vsel %vm109, %v107, 0.0
    %v111 = vadd.f32 %v102, %v110
    %112 = vst [vmem:[#allocation1] sm:$0xff] %v111
    %s113 = scalar_lea.vmem [#allocation0], 8
    %v114 = vld [vmem:[%s113] sm:$0xff]
    %s115 = scalar_lea.vmem [#allocation1], 8
    %v116 = vld [vmem:[%s115] sm:$0xff]
    %v117 = vmul.f32 %v116, %v84
    %118 = vadd.xlane.f32.xlu0 %v117
    %v119 = vpop.xlane.xlu0 %118
    %v120 = vsub.f32 %v114, %v119
    %v121 = vmul.f32 %v120, %v100
    %v122 = vsel %vm82, %v121, 0.0
    %v123 = vadd.f32 %v116, %v122
    %s124 = scalar_lea.vmem [#allocation1], 8
    %125 = vst [vmem:[%s124] sm:$0xff] %v123
    %vm126 = vcmask 23568
    %s127 = scalar_lea.vmem [#allocation1], 2
    %v128 = vld [vmem:[%s127] ss:$0 sm:$0xff]
    %s129 = scalar_lea.vmem [#allocation0], 2
    %v130 = vld [vmem:[%s129] ss:$0 sm:$0xff]
    %v131 = vmul.f32 %v128, %v128
    %132 = vadd.xlane.f32.xlu0 %v131
    %v133 = vpop.xlane.xlu0 %132
    %v134 = vsub.f32 %v130, %v133
    %v135 = vrsqrt.pop %v134
    %v136 = vmul.f32 %v135, %v134
    %v137 = vmul.f32 %v136, %v135
    %v138 = vmul.f32 0.5, %v137
    %v139 = vsub.f32 1.5, %v138
    %v140 = vmul.f32 %v135, %v139
    %vm141 = vweird.f32 %v134
    %vm142 = vweird.f32 %v135
    %vm143 = vmor %vm141, %vm142
    %v144 = vsel %vm143, %v135, %v140
    %v145 = vld [vmem:[#allocation0] sm:$0xff]
    %v146 = vld [vmem:[#allocation1] sm:$0xff]
    %v147 = vmul.f32 %v146, %v128
    %148 = vadd.xlane.f32.xlu0 %v147
    %v149 = vpop.xlane.xlu0 %148
    %v150 = vsub.f32 %v145, %v149
    %v151 = vmul.f32 %v150, %v144
    %vm152 = vcmask 1047554
    %vm153 = vmand %vm126, %vm152
    %v154 = vsel %vm153, %v151, 0.0
    %v155 = vadd.f32 %v146, %v154
    %156 = vst [vmem:[#allocation1] sm:$0xff] %v155
    %s157 = scalar_lea.vmem [#allocation0], 8
    %v158 = vld [vmem:[%s157] sm:$0xff]
    %s159 = scalar_lea.vmem [#allocation1], 8
    %v160 = vld [vmem:[%s159] sm:$0xff]
    %v161 = vmul.f32 %v160, %v128
    %162 = vadd.xlane.f32.xlu0 %v161
    %v163 = vpop.xlane.xlu0 %162
    %v164 = vsub.f32 %v158, %v163
    %v165 = vmul.f32 %v164, %v144
    %v166 = vsel %vm126, %v165, 0.0
    %v167 = vadd.f32 %v160, %v166
    %s168 = scalar_lea.vmem [#allocation1], 8
    %169 = vst [vmem:[%s168] sm:$0xff] %v167
    %vm170 = vcmask 31768
    %s171 = scalar_lea.vmem [#allocation1], 3
    %v172 = vld [vmem:[%s171] ss:$0 sm:$0xff]
    %s173 = scalar_lea.vmem [#allocation0], 3
    %v174 = vld [vmem:[%s173] ss:$0 sm:$0xff]
    %v175 = vmul.f32 %v172, %v172
    %176 = vadd.xlane.f32.xlu0 %v175
    %v177 = vpop.xlane.xlu0 %176
    %v178 = vsub.f32 %v174, %v177
    %v179 = vrsqrt.pop %v178
    %v180 = vmul.f32 %v179, %v178
    %v181 = vmul.f32 %v180, %v179
    %v182 = vmul.f32 0.5, %v181
    %v183 = vsub.f32 1.5, %v182
    %v184 = vmul.f32 %v179, %v183
    %vm185 = vweird.f32 %v178
    %vm186 = vweird.f32 %v179
    %vm187 = vmor %vm185, %vm186
    %v188 = vsel %vm187, %v179, %v184
    %v189 = vld [vmem:[#allocation0] sm:$0xff]
    %v190 = vld [vmem:[#allocation1] sm:$0xff]
    %v191 = vmul.f32 %v190, %v172
    %192 = vadd.xlane.f32.xlu0 %v191
    %v193 = vpop.xlane.xlu0 %192
    %v194 = vsub.f32 %v189, %v193
    %v195 = vmul.f32 %v194, %v188
    %vm196 = vcmask 1047555
    %vm197 = vmand %vm170, %vm196
    %v198 = vsel %vm197, %v195, 0.0
    %v199 = vadd.f32 %v190, %v198
    %200 = vst [vmem:[#allocation1] sm:$0xff] %v199
    %s201 = scalar_lea.vmem [#allocation0], 8
    %v202 = vld [vmem:[%s201] sm:$0xff]
    %s203 = scalar_lea.vmem [#allocation1], 8
    %v204 = vld [vmem:[%s203] sm:$0xff]
    %v205 = vmul.f32 %v204, %v172
    %206 = vadd.xlane.f32.xlu0 %v205
    %v207 = vpop.xlane.xlu0 %206
    %v208 = vsub.f32 %v202, %v207
    %v209 = vmul.f32 %v208, %v188
    %v210 = vsel %vm170, %v209, 0.0
    %v211 = vadd.f32 %v204, %v210
    %s212 = scalar_lea.vmem [#allocation1], 8
    %213 = vst [vmem:[%s212] sm:$0xff] %v211
    %vm214 = vcmask 39968
    %s215 = scalar_lea.vmem [#allocation1], 4
    %v216 = vld [vmem:[%s215] ss:$0 sm:$0xff]
    %s217 = scalar_lea.vmem [#allocation0], 4
    %v218 = vld [vmem:[%s217] ss:$0 sm:$0xff]
    %v219 = vmul.f32 %v216, %v216
    %220 = vadd.xlane.f32.xlu0 %v219
    %v221 = vpop.xlane.xlu0 %220
    %v222 = vsub.f32 %v218, %v221
    %v223 = vrsqrt.pop %v222
    %v224 = vmul.f32 %v223, %v222
    %v225 = vmul.f32 %v224, %v223
    %v226 = vmul.f32 0.5, %v225
    %v227 = vsub.f32 1.5, %v226
    %v228 = vmul.f32 %v223, %v227
    %vm229 = vweird.f32 %v222
    %vm230 = vweird.f32 %v223
    %vm231 = vmor %vm229, %vm230
    %v232 = vsel %vm231, %v223, %v228
    %v233 = vld [vmem:[#allocation0] sm:$0xff]
    %v234 = vld [vmem:[#allocation1] sm:$0xff]
    %v235 = vmul.f32 %v234, %v216
    %236 = vadd.xlane.f32.xlu0 %v235
    %v237 = vpop.xlane.xlu0 %236
    %v238 = vsub.f32 %v233, %v237
    %v239 = vmul.f32 %v238, %v232
    %vm240 = vcmask 1047556
    %vm241 = vmand %vm214, %vm240
    %v242 = vsel %vm241, %v239, 0.0
    %v243 = vadd.f32 %v234, %v242
    %244 = vst [vmem:[#allocation1] sm:$0xff] %v243
    %s245 = scalar_lea.vmem [#allocation0], 8
    %v246 = vld [vmem:[%s245] sm:$0xff]
    %s247 = scalar_lea.vmem [#allocation1], 8
    %v248 = vld [vmem:[%s247] sm:$0xff]
    %v249 = vmul.f32 %v248, %v216
    %250 = vadd.xlane.f32.xlu0 %v249
    %v251 = vpop.xlane.xlu0 %250
    %v252 = vsub.f32 %v246, %v251
    %v253 = vmul.f32 %v252, %v232
    %v254 = vsel %vm214, %v253, 0.0
    %v255 = vadd.f32 %v248, %v254
    %s256 = scalar_lea.vmem [#allocation1], 8
    %257 = vst [vmem:[%s256] sm:$0xff] %v255
    %vm258 = vcmask 48168
    %s259 = scalar_lea.vmem [#allocation1], 5
    %v260 = vld [vmem:[%s259] ss:$0 sm:$0xff]
    %s261 = scalar_lea.vmem [#allocation0], 5
    %v262 = vld [vmem:[%s261] ss:$0 sm:$0xff]
    %v263 = vmul.f32 %v260, %v260
    %264 = vadd.xlane.f32.xlu0 %v263
    %v265 = vpop.xlane.xlu0 %264
    %v266 = vsub.f32 %v262, %v265
    %v267 = vrsqrt.pop %v266
    %v268 = vmul.f32 %v267, %v266
    %v269 = vmul.f32 %v268, %v267
    %v270 = vmul.f32 0.5, %v269
    %v271 = vsub.f32 1.5, %v270
    %v272 = vmul.f32 %v267, %v271
    %vm273 = vweird.f32 %v266
    %vm274 = vweird.f32 %v267
    %vm275 = vmor %vm273, %vm274
    %v276 = vsel %vm275, %v267, %v272
    %v277 = vld [vmem:[#allocation0] sm:$0xff]
    %v278 = vld [vmem:[#allocation1] sm:$0xff]
    %v279 = vmul.f32 %v278, %v260
    %280 = vadd.xlane.f32.xlu0 %v279
    %v281 = vpop.xlane.xlu0 %280
    %v282 = vsub.f32 %v277, %v281
    %v283 = vmul.f32 %v282, %v276
    %vm284 = vcmask 1047557
    %vm285 = vmand %vm258, %vm284
    %v286 = vsel %vm285, %v283, 0.0
    %v287 = vadd.f32 %v278, %v286
    %288 = vst [vmem:[#allocation1] sm:$0xff] %v287
    %s289 = scalar_lea.vmem [#allocation0], 8
    %v290 = vld [vmem:[%s289] sm:$0xff]
    %s291 = scalar_lea.vmem [#allocation1], 8
    %v292 = vld [vmem:[%s291] sm:$0xff]
    %v293 = vmul.f32 %v292, %v260
    %294 = vadd.xlane.f32.xlu0 %v293
    %v295 = vpop.xlane.xlu0 %294
    %v296 = vsub.f32 %v290, %v295
    %v297 = vmul.f32 %v296, %v276
    %v298 = vsel %vm258, %v297, 0.0
    %v299 = vadd.f32 %v292, %v298
    %s300 = scalar_lea.vmem [#allocation1], 8
    %301 = vst [vmem:[%s300] sm:$0xff] %v299
    %vm302 = vcmask 56368
    %s303 = scalar_lea.vmem [#allocation1], 6
    %v304 = vld [vmem:[%s303] ss:$0 sm:$0xff]
    %s305 = scalar_lea.vmem [#allocation0], 6
    %v306 = vld [vmem:[%s305] ss:$0 sm:$0xff]
    %v307 = vmul.f32 %v304, %v304
    %308 = vadd.xlane.f32.xlu0 %v307
    %v309 = vpop.xlane.xlu0 %308
    %v310 = vsub.f32 %v306, %v309
    %v311 = vrsqrt.pop %v310
    %v312 = vmul.f32 %v311, %v310
    %v313 = vmul.f32 %v312, %v311
    %v314 = vmul.f32 0.5, %v313
    %v315 = vsub.f32 1.5, %v314
    %v316 = vmul.f32 %v311, %v315
    %vm317 = vweird.f32 %v310
    %vm318 = vweird.f32 %v311
    %vm319 = vmor %vm317, %vm318
    %v320 = vsel %vm319, %v311, %v316
    %v321 = vld [vmem:[#allocation0] sm:$0xff]
    %v322 = vld [vmem:[#allocation1] sm:$0xff]
    %v323 = vmul.f32 %v322, %v304
    %324 = vadd.xlane.f32.xlu0 %v323
    %v325 = vpop.xlane.xlu0 %324
    %v326 = vsub.f32 %v321, %v325
    %v327 = vmul.f32 %v326, %v320
    %vm328 = vcmask 1047558
    %vm329 = vmand %vm302, %vm328
    %v330 = vsel %vm329, %v327, 0.0
    %v331 = vadd.f32 %v322, %v330
    %332 = vst [vmem:[#allocation1] sm:$0xff] %v331
    %s333 = scalar_lea.vmem [#allocation0], 8
    %v334 = vld [vmem:[%s333] sm:$0xff]
    %s335 = scalar_lea.vmem [#allocation1], 8
    %v336 = vld [vmem:[%s335] sm:$0xff]
    %v337 = vmul.f32 %v336, %v304
    %338 = vadd.xlane.f32.xlu0 %v337
    %v339 = vpop.xlane.xlu0 %338
    %v340 = vsub.f32 %v334, %v339
    %v341 = vmul.f32 %v340, %v320
    %v342 = vsel %vm302, %v341, 0.0
    %v343 = vadd.f32 %v336, %v342
    %s344 = scalar_lea.vmem [#allocation1], 8
    %345 = vst [vmem:[%s344] sm:$0xff] %v343
    %vm346 = vcmask 64568
    %s347 = scalar_lea.vmem [#allocation1], 7
    %v348 = vld [vmem:[%s347] ss:$0 sm:$0xff]
    %s349 = scalar_lea.vmem [#allocation0], 7
    %v350 = vld [vmem:[%s349] ss:$0 sm:$0xff]
    %v351 = vmul.f32 %v348, %v348
    %352 = vadd.xlane.f32.xlu0 %v351
    %v353 = vpop.xlane.xlu0 %352
    %v354 = vsub.f32 %v350, %v353
    %v355 = vrsqrt.pop %v354
    %v356 = vmul.f32 %v355, %v354
    %v357 = vmul.f32 %v356, %v355
    %v358 = vmul.f32 0.5, %v357
    %v359 = vsub.f32 1.5, %v358
    %v360 = vmul.f32 %v355, %v359
    %vm361 = vweird.f32 %v354
    %vm362 = vweird.f32 %v355
    %vm363 = vmor %vm361, %vm362
    %v364 = vsel %vm363, %v355, %v360
    %v365 = vld [vmem:[#allocation0] sm:$0xff]
    %v366 = vld [vmem:[#allocation1] sm:$0xff]
    %v367 = vmul.f32 %v366, %v348
    %368 = vadd.xlane.f32.xlu0 %v367
    %v369 = vpop.xlane.xlu0 %368
    %v370 = vsub.f32 %v365, %v369
    %v371 = vmul.f32 %v370, %v364
    %vm372 = vcmask 1047559
    %vm373 = vmand %vm346, %vm372
    %v374 = vsel %vm373, %v371, 0.0
    %v375 = vadd.f32 %v366, %v374
    %376 = vst [vmem:[#allocation1] sm:$0xff] %v375
    %s377 = scalar_lea.vmem [#allocation0], 8
    %v378 = vld [vmem:[%s377] sm:$0xff]
    %s379 = scalar_lea.vmem [#allocation1], 8
    %v380 = vld [vmem:[%s379] sm:$0xff]
    %v381 = vmul.f32 %v380, %v348
    %382 = vadd.xlane.f32.xlu0 %v381
    %v383 = vpop.xlane.xlu0 %382
    %v384 = vsub.f32 %v378, %v383
    %v385 = vmul.f32 %v384, %v364
    %v386 = vsel %vm346, %v385, 0.0
    %v387 = vadd.f32 %v380, %v386
    %s388 = scalar_lea.vmem [#allocation1], 8
    %389 = vst [vmem:[%s388] sm:$0xff] %v387
    %vm390 = vcmask 72768
    %s391 = scalar_lea.vmem [#allocation1], 8
    %v392 = vld [vmem:[%s391] ss:$0 sm:$0xff]
    %s393 = scalar_lea.vmem [#allocation0], 8
    %v394 = vld [vmem:[%s393] ss:$0 sm:$0xff]
    %v395 = vmul.f32 %v392, %v392
    %396 = vadd.xlane.f32.xlu0 %v395
    %v397 = vpop.xlane.xlu0 %396
    %v398 = vsub.f32 %v394, %v397
    %v399 = vrsqrt.pop %v398
    %v400 = vmul.f32 %v399, %v398
    %v401 = vmul.f32 %v400, %v399
    %v402 = vmul.f32 0.5, %v401
    %v403 = vsub.f32 1.5, %v402
    %v404 = vmul.f32 %v399, %v403
    %vm405 = vweird.f32 %v398
    %vm406 = vweird.f32 %v399
    %vm407 = vmor %vm405, %vm406
    %v408 = vsel %vm407, %v399, %v404
    %s409 = scalar_lea.vmem [#allocation0], 8
    %v410 = vld [vmem:[%s409] sm:$0xff]
    %s411 = scalar_lea.vmem [#allocation1], 8
    %v412 = vld [vmem:[%s411] sm:$0xff]
    %v413 = vmul.f32 %v412, %v392
    %414 = vadd.xlane.f32.xlu0 %v413
    %v415 = vpop.xlane.xlu0 %414
    %v416 = vsub.f32 %v410, %v415
    %v417 = vmul.f32 %v416, %v408
    %v418 = vsel %vm390, %v417, 0.0
    %v419 = vadd.f32 %v412, %v418
    %s420 = scalar_lea.vmem [#allocation1], 8
    %421 = vst [vmem:[%s420] sm:$0xff] %v419
    %vm422 = vcmask 80968
    %s423 = scalar_lea.vmem [#allocation1], 9
    %v424 = vld [vmem:[%s423] ss:$0 sm:$0xff]
    %s425 = scalar_lea.vmem [#allocation0], 9
    %v426 = vld [vmem:[%s425] ss:$0 sm:$0xff]
    %v427 = vmul.f32 %v424, %v424
    %428 = vadd.xlane.f32.xlu0 %v427
    %v429 = vpop.xlane.xlu0 %428
    %v430 = vsub.f32 %v426, %v429
    %v431 = vrsqrt.pop %v430
    %v432 = vmul.f32 %v431, %v430
    %v433 = vmul.f32 %v432, %v431
    %v434 = vmul.f32 0.5, %v433
    %v435 = vsub.f32 1.5, %v434
    %v436 = vmul.f32 %v431, %v435
    %vm437 = vweird.f32 %v430
    %vm438 = vweird.f32 %v431
    %vm439 = vmor %vm437, %vm438
    %v440 = vsel %vm439, %v431, %v436
    %s441 = scalar_lea.vmem [#allocation0], 8
    %v442 = vld [vmem:[%s441] sm:$0xff]
    %s443 = scalar_lea.vmem [#allocation1], 8
    %v444 = vld [vmem:[%s443] sm:$0xff]
    %v445 = vmul.f32 %v444, %v424
    %446 = vadd.xlane.f32.xlu0 %v445
    %v447 = vpop.xlane.xlu0 %446
    %v448 = vsub.f32 %v442, %v447
    %v449 = vmul.f32 %v448, %v440
    %vm450 = vcmask 1047553
    %vm451 = vmand %vm422, %vm450
    %v452 = vsel %vm451, %v449, 0.0
    %v453 = vadd.f32 %v444, %v452
    %s454 = scalar_lea.vmem [#allocation1], 8
    %455 = vst [vmem:[%s454] sm:$0xff] %v453
    %vm456 = vcmask 89168
    %s457 = scalar_lea.vmem [#allocation1], 10
    %v458 = vld [vmem:[%s457] ss:$0 sm:$0xff]
    %s459 = scalar_lea.vmem [#allocation0], 10
    %v460 = vld [vmem:[%s459] ss:$0 sm:$0xff]
    %v461 = vmul.f32 %v458, %v458
    %462 = vadd.xlane.f32.xlu0 %v461
    %v463 = vpop.xlane.xlu0 %462
    %v464 = vsub.f32 %v460, %v463
    %v465 = vrsqrt.pop %v464
    %v466 = vmul.f32 %v465, %v464
    %v467 = vmul.f32 %v466, %v465
    %v468 = vmul.f32 0.5, %v467
    %v469 = vsub.f32 1.5, %v468
    %v470 = vmul.f32 %v465, %v469
    %vm471 = vweird.f32 %v464
    %vm472 = vweird.f32 %v465
    %vm473 = vmor %vm471, %vm472
    %v474 = vsel %vm473, %v465, %v470
    %s475 = scalar_lea.vmem [#allocation0], 8
    %v476 = vld [vmem:[%s475] sm:$0xff]
    %s477 = scalar_lea.vmem [#allocation1], 8
    %v478 = vld [vmem:[%s477] sm:$0xff]
    %v479 = vmul.f32 %v478, %v458
    %480 = vadd.xlane.f32.xlu0 %v479
    %v481 = vpop.xlane.xlu0 %480
    %v482 = vsub.f32 %v476, %v481
    %v483 = vmul.f32 %v482, %v474
    %vm484 = vcmask 1047554
    %vm485 = vmand %vm456, %vm484
    %v486 = vsel %vm485, %v483, 0.0
    %v487 = vadd.f32 %v478, %v486
    %s488 = scalar_lea.vmem [#allocation1], 8
    %489 = vst [vmem:[%s488] sm:$0xff] %v487
    %vm490 = vcmask 97368
    %s491 = scalar_lea.vmem [#allocation1], 11
    %v492 = vld [vmem:[%s491] ss:$0 sm:$0xff]
    %s493 = scalar_lea.vmem [#allocation0], 11
    %v494 = vld [vmem:[%s493] ss:$0 sm:$0xff]
    %v495 = vmul.f32 %v492, %v492
    %496 = vadd.xlane.f32.xlu0 %v495
    %v497 = vpop.xlane.xlu0 %496
    %v498 = vsub.f32 %v494, %v497
    %v499 = vrsqrt.pop %v498
    %v500 = vmul.f32 %v499, %v498
    %v501 = vmul.f32 %v500, %v499
    %v502 = vmul.f32 0.5, %v501
    %v503 = vsub.f32 1.5, %v502
    %v504 = vmul.f32 %v499, %v503
    %vm505 = vweird.f32 %v498
    %vm506 = vweird.f32 %v499
    %vm507 = vmor %vm505, %vm506
    %v508 = vsel %vm507, %v499, %v504
    %s509 = scalar_lea.vmem [#allocation0], 8
    %v510 = vld [vmem:[%s509] sm:$0xff]
    %s511 = scalar_lea.vmem [#allocation1], 8
    %v512 = vld [vmem:[%s511] sm:$0xff]
    %v513 = vmul.f32 %v512, %v492
    %514 = vadd.xlane.f32.xlu0 %v513
    %v515 = vpop.xlane.xlu0 %514
    %v516 = vsub.f32 %v510, %v515
    %v517 = vmul.f32 %v516, %v508
    %vm518 = vcmask 1047555
    %vm519 = vmand %vm490, %vm518
    %v520 = vsel %vm519, %v517, 0.0
    %v521 = vadd.f32 %v512, %v520
    %s522 = scalar_lea.vmem [#allocation1], 8
    %523 = vst [vmem:[%s522] sm:$0xff] %v521
    %vm524 = vcmask 105568
    %s525 = scalar_lea.vmem [#allocation1], 12
    %v526 = vld [vmem:[%s525] ss:$0 sm:$0xff]
    %s527 = scalar_lea.vmem [#allocation0], 12
    %v528 = vld [vmem:[%s527] ss:$0 sm:$0xff]
    %v529 = vmul.f32 %v526, %v526
    %530 = vadd.xlane.f32.xlu0 %v529
    %v531 = vpop.xlane.xlu0 %530
    %v532 = vsub.f32 %v528, %v531
    %v533 = vrsqrt.pop %v532
    %v534 = vmul.f32 %v533, %v532
    %v535 = vmul.f32 %v534, %v533
    %v536 = vmul.f32 0.5, %v535
    %v537 = vsub.f32 1.5, %v536
    %v538 = vmul.f32 %v533, %v537
    %vm539 = vweird.f32 %v532
    %vm540 = vweird.f32 %v533
    %vm541 = vmor %vm539, %vm540
    %v542 = vsel %vm541, %v533, %v538
    %s543 = scalar_lea.vmem [#allocation0], 8
    %v544 = vld [vmem:[%s543] sm:$0xff]
    %s545 = scalar_lea.vmem [#allocation1], 8
    %v546 = vld [vmem:[%s545] sm:$0xff]
    %v547 = vmul.f32 %v546, %v526
    %548 = vadd.xlane.f32.xlu0 %v547
    %v549 = vpop.xlane.xlu0 %548
    %v550 = vsub.f32 %v544, %v549
    %v551 = vmul.f32 %v550, %v542
    %vm552 = vcmask 1047556
    %vm553 = vmand %vm524, %vm552
    %v554 = vsel %vm553, %v551, 0.0
    %v555 = vadd.f32 %v546, %v554
    %s556 = scalar_lea.vmem [#allocation1], 8
    %557 = vst [vmem:[%s556] sm:$0xff] %v555
    %vm558 = vcmask 113768
    %s559 = scalar_lea.vmem [#allocation1], 13
    %v560 = vld [vmem:[%s559] ss:$0 sm:$0xff]
    %s561 = scalar_lea.vmem [#allocation0], 13
    %v562 = vld [vmem:[%s561] ss:$0 sm:$0xff]
    %v563 = vmul.f32 %v560, %v560
    %564 = vadd.xlane.f32.xlu0 %v563
    %v565 = vpop.xlane.xlu0 %564
    %v566 = vsub.f32 %v562, %v565
    %v567 = vrsqrt.pop %v566
    %v568 = vmul.f32 %v567, %v566
    %v569 = vmul.f32 %v568, %v567
    %v570 = vmul.f32 0.5, %v569
    %v571 = vsub.f32 1.5, %v570
    %v572 = vmul.f32 %v567, %v571
    %vm573 = vweird.f32 %v566
    %vm574 = vweird.f32 %v567
    %vm575 = vmor %vm573, %vm574
    %v576 = vsel %vm575, %v567, %v572
    %s577 = scalar_lea.vmem [#allocation0], 8
    %v578 = vld [vmem:[%s577] sm:$0xff]
    %s579 = scalar_lea.vmem [#allocation1], 8
    %v580 = vld [vmem:[%s579] sm:$0xff]
    %v581 = vmul.f32 %v580, %v560
    %582 = vadd.xlane.f32.xlu0 %v581
    %v583 = vpop.xlane.xlu0 %582
    %v584 = vsub.f32 %v578, %v583
    %v585 = vmul.f32 %v584, %v576
    %vm586 = vcmask 1047557
    %vm587 = vmand %vm558, %vm586
    %v588 = vsel %vm587, %v585, 0.0
    %v589 = vadd.f32 %v580, %v588
    %s590 = scalar_lea.vmem [#allocation1], 8
    %591 = vst [vmem:[%s590] sm:$0xff] %v589
    %vm592 = vcmask 121968
    %s593 = scalar_lea.vmem [#allocation1], 14
    %v594 = vld [vmem:[%s593] ss:$0 sm:$0xff]
    %s595 = scalar_lea.vmem [#allocation0], 14
    %v596 = vld [vmem:[%s595] ss:$0 sm:$0xff]
    %v597 = vmul.f32 %v594, %v594
    %598 = vadd.xlane.f32.xlu0 %v597
    %v599 = vpop.xlane.xlu0 %598
    %v600 = vsub.f32 %v596, %v599
    %v601 = vrsqrt.pop %v600
    %v602 = vmul.f32 %v601, %v600
    %v603 = vmul.f32 %v602, %v601
    %v604 = vmul.f32 0.5, %v603
    %v605 = vsub.f32 1.5, %v604
    %v606 = vmul.f32 %v601, %v605
    %vm607 = vweird.f32 %v600
    %vm608 = vweird.f32 %v601
    %vm609 = vmor %vm607, %vm608
    %v610 = vsel %vm609, %v601, %v606
    %s611 = scalar_lea.vmem [#allocation0], 8
    %v612 = vld [vmem:[%s611] sm:$0xff]
    %s613 = scalar_lea.vmem [#allocation1], 8
    %v614 = vld [vmem:[%s613] sm:$0xff]
    %v615 = vmul.f32 %v614, %v594
    %616 = vadd.xlane.f32.xlu0 %v615
    %v617 = vpop.xlane.xlu0 %616
    %v618 = vsub.f32 %v612, %v617
    %v619 = vmul.f32 %v618, %v610
    %vm620 = vcmask 1047558
    %vm621 = vmand %vm592, %vm620
    %v622 = vsel %vm621, %v619, 0.0
    %v623 = vadd.f32 %v614, %v622
    %s624 = scalar_lea.vmem [#allocation1], 8
    %625 = vst [vmem:[%s624] sm:$0xff] %v623
    %vm626 = vcmask 130168
    %s627 = scalar_lea.vmem [#allocation1], 15
    %v628 = vld [vmem:[%s627] ss:$0 sm:$0xff]
    %s629 = scalar_lea.vmem [#allocation0], 15
    %v630 = vld [vmem:[%s629] ss:$0 sm:$0xff]
    %v631 = vmul.f32 %v628, %v628
    %632 = vadd.xlane.f32.xlu0 %v631
    %v633 = vpop.xlane.xlu0 %632
    %v634 = vsub.f32 %v630, %v633
    %v635 = vrsqrt.pop %v634
    %v636 = vmul.f32 %v635, %v634
    %v637 = vmul.f32 %v636, %v635
    %v638 = vmul.f32 0.5, %v637
    %v639 = vsub.f32 1.5, %v638
    %v640 = vmul.f32 %v635, %v639
    %vm641 = vweird.f32 %v634
    %vm642 = vweird.f32 %v635
    %vm643 = vmor %vm641, %vm642
    %v644 = vsel %vm643, %v635, %v640
    %s645 = scalar_lea.vmem [#allocation0], 8
    %v646 = vld [vmem:[%s645] sm:$0xff]
    %s647 = scalar_lea.vmem [#allocation1], 8
    %v648 = vld [vmem:[%s647] sm:$0xff]
    %v649 = vmul.f32 %v648, %v628
    %650 = vadd.xlane.f32.xlu0 %v649
    %v651 = vpop.xlane.xlu0 %650
    %v652 = vsub.f32 %v646, %v651
    %v653 = vmul.f32 %v652, %v644
    %vm654 = vcmask 1047559
    %vm655 = vmand %vm626, %vm654
    %v656 = vsel %vm655, %v653, 0.0
    %v657 = vadd.f32 %v648, %v656
    %s658 = scalar_lea.vmem [#allocation1], 8
    %659 = vst [vmem:[%s658] sm:$0xff] %v657
    // Predicated region
    $region36: #{custom-call.16} parent=1 // pred_check
      _
    $region37: #{custom-call.16} parent=1 // pred_check_branch
      %661 = sbr.rel (0) target = $region39
    $region38: #{custom-call.16} parent=1 // pred_region
      // Predicated region
      $region40: #{custom-call.16} parent=38 // pred_check
        _
      $region41: #{custom-call.16} parent=38 // pred_check_branch
        %663 = sbr.rel (0) target = $region43
      $region42: #{custom-call.16} parent=38 // pred_region
        // Predicated region
        $region55: #{custom-call.16} parent=42 // pred_check
          _
        $region56: #{custom-call.16} parent=42 // pred_check_branch
          %681 = sbr.rel (0) target = $region58
        $region57: #{custom-call.16} parent=42 // pred_region
          loop: start=0, step=1, limit=1
          $region59: #{custom-call.16} parent=57 // loop_pre_header
            _
          $region60: #{custom-call.16} parent=57 // loop_header
            %s683 = sphi 0, %s687
            %p684 = scmp.ge.s32.totalorder %s683, 1
            %s688 = sphi [#allocation1], [#allocation1]
            %s689 = sphi %s1, %s1
          $region61: #{custom-call.16} parent=57 // loop_header_branch
            %686 = sbr.rel (%p684) target = $region65
          $region62: #{custom-call.16} parent=57 // loop_body
            %v690 = vld [vmem:[%s688] sm:$0xff]
            %691 = vst [vmem:[%s689] sm:$0xff] %v690
            %v692 = vld [vmem:[%s688 + $0x8] sm:$0xff]
            %693 = vst [vmem:[%s689 + $0x8] sm:$0xff] %v692
          $region63: #{custom-call.16} parent=57 // loop_footer
            %s687 = sadd.s32 1, %s683
          $region64: #{custom-call.16} parent=57 // loop_footer_branch
            %682 = sbr.rel target = $region60
          $region65: #{custom-call.16} parent=57 // loop_exit
            _
        $region58: #{custom-call.16} parent=42 // pred_fallthru
          _
        // Predicated region
        $region66: #{custom-call.16} parent=42 // pred_check
          _
        $region67: #{custom-call.16} parent=42 // pred_check_branch
          %695 = sbr.rel target = $region69
        $region68: #{custom-call.16} parent=42 // pred_region
          _
        $region69: #{custom-call.16} parent=42 // pred_fallthru
          _
      $region43: #{custom-call.16} parent=38 // pred_fallthru
        _
      // Predicated region
      $region44: #{custom-call.16} parent=38 // pred_check
        _
      $region45: #{custom-call.16} parent=38 // pred_check_branch
        %665 = sbr.rel target = $region47
      $region46: #{custom-call.16} parent=38 // pred_region
        %s667 = ssub.s32 256, 1
        loop: start=0, step=1, limit=1
        $region48: #{custom-call.16} parent=46 // loop_pre_header
          _
        $region49: #{custom-call.16} parent=46 // loop_header
          %s669 = sphi 0, %s673
          %p670 = scmp.ge.s32.totalorder %s669, 1
          %s674 = sphi [#allocation1], [#allocation1]
          %s675 = sphi %s1, %s1
        $region50: #{custom-call.16} parent=46 // loop_header_branch
          %672 = sbr.rel (%p670) target = $region54
        $region51: #{custom-call.16} parent=46 // loop_body
          %v676 = vld [vmem:[%s674] sm:%s667]
          %677 = vst [vmem:[%s675] sm:%s667] %v676
          %v678 = vld [vmem:[%s674 + $0x8] sm:%s667]
          %679 = vst [vmem:[%s675 + $0x8] sm:%s667] %v678
        $region52: #{custom-call.16} parent=46 // loop_footer
          %s673 = sadd.s32 1, %s669
        $region53: #{custom-call.16} parent=46 // loop_footer_branch
          %668 = sbr.rel target = $region49
        $region54: #{custom-call.16} parent=46 // loop_exit
          _
      $region47: #{custom-call.16} parent=38 // pred_fallthru
        _
    $region39: #{custom-call.16} parent=1 // pred_fallthru
      _
    %696 = vnop

// kernel: custom-call.12
$region0: #{custom-call.12}
  %s0 = inlined_call_operand.vmem [shape: f32[1,16,16], index: 0, kind: input, shape index: {}]
  %s1 = inlined_call_operand.vmem [shape: f32[1,16,16], index: 1, kind: output, shape index: {}]
  $region1: #{custom-call.12} parent=0
    #allocation0 [shape = 'u8[8192]{0}', space=vmem, size = 0x2000, scoped, tag = 'operand span for operand 0']
    #allocation1 [shape = 'u8[8192]{0}', space=vmem, size = 0x2000, scoped, tag = 'operand span for operand 1']
    #allocation2 [shape = 'f32[16,16]{1,0}', space=vmem, size = 0x2000, scoped, tag = 'rescaled input a']
    // Predicated region
    $region2: #{custom-call.12} parent=1 // pred_check
      _
    $region3: #{custom-call.12} parent=1 // pred_check_branch
      %3 = sbr.rel (0) target = $region5
    $region4: #{custom-call.12} parent=1 // pred_region
      // Predicated region
      $region6: #{custom-call.12} parent=4 // pred_check
        _
      $region7: #{custom-call.12} parent=4 // pred_check_branch
        %5 = sbr.rel (0) target = $region9
      $region8: #{custom-call.12} parent=4 // pred_region
        // Predicated region
        $region21: #{custom-call.12} parent=8 // pred_check
          _
        $region22: #{custom-call.12} parent=8 // pred_check_branch
          %23 = sbr.rel (0) target = $region24
        $region23: #{custom-call.12} parent=8 // pred_region
          loop: start=0, step=1, limit=1
          $region25: #{custom-call.12} parent=23 // loop_pre_header
            _
          $region26: #{custom-call.12} parent=23 // loop_header
            %s25 = sphi 0, %s29
            %p26 = scmp.ge.s32.totalorder %s25, 1
            %s30 = sphi %s0, %s0
            %s31 = sphi [#allocation0], [#allocation0]
          $region27: #{custom-call.12} parent=23 // loop_header_branch
            %28 = sbr.rel (%p26) target = $region31
          $region28: #{custom-call.12} parent=23 // loop_body
            %v32 = vld [vmem:[%s30] sm:$0xff]
            %33 = vst [vmem:[%s31] sm:$0xff] %v32
            %v34 = vld [vmem:[%s30 + $0x8] sm:$0xff]
            %35 = vst [vmem:[%s31 + $0x8] sm:$0xff] %v34
          $region29: #{custom-call.12} parent=23 // loop_footer
            %s29 = sadd.s32 1, %s25
          $region30: #{custom-call.12} parent=23 // loop_footer_branch
            %24 = sbr.rel target = $region26
          $region31: #{custom-call.12} parent=23 // loop_exit
            _
        $region24: #{custom-call.12} parent=8 // pred_fallthru
          _
        // Predicated region
        $region32: #{custom-call.12} parent=8 // pred_check
          _
        $region33: #{custom-call.12} parent=8 // pred_check_branch
          %37 = sbr.rel target = $region35
        $region34: #{custom-call.12} parent=8 // pred_region
          _
        $region35: #{custom-call.12} parent=8 // pred_fallthru
          _
      $region9: #{custom-call.12} parent=4 // pred_fallthru
        _
      // Predicated region
      $region10: #{custom-call.12} parent=4 // pred_check
        _
      $region11: #{custom-call.12} parent=4 // pred_check_branch
        %7 = sbr.rel target = $region13
      $region12: #{custom-call.12} parent=4 // pred_region
        %s9 = ssub.s32 256, 1
        loop: start=0, step=1, limit=1
        $region14: #{custom-call.12} parent=12 // loop_pre_header
          _
        $region15: #{custom-call.12} parent=12 // loop_header
          %s11 = sphi 0, %s15
          %p12 = scmp.ge.s32.totalorder %s11, 1
          %s16 = sphi %s0, %s0
          %s17 = sphi [#allocation0], [#allocation0]
        $region16: #{custom-call.12} parent=12 // loop_header_branch
          %14 = sbr.rel (%p12) target = $region20
        $region17: #{custom-call.12} parent=12 // loop_body
          %v18 = vld [vmem:[%s16] sm:%s9]
          %19 = vst [vmem:[%s17] sm:%s9] %v18
          %v20 = vld [vmem:[%s16 + $0x8] sm:%s9]
          %21 = vst [vmem:[%s17 + $0x8] sm:%s9] %v20
        $region18: #{custom-call.12} parent=12 // loop_footer
          %s15 = sadd.s32 1, %s11
        $region19: #{custom-call.12} parent=12 // loop_footer_branch
          %10 = sbr.rel target = $region15
        $region20: #{custom-call.12} parent=12 // loop_exit
          _
      $region13: #{custom-call.12} parent=4 // pred_fallthru
        _
    $region5: #{custom-call.12} parent=1 // pred_fallthru
      _
    %38 = vnop
    %v39 = vlaneseq
    %v40 = vand.u32 %v39, 127
    %vm41 = vcmp.lt.s32.totalorder %v40, 16
    %v42 = vlaneseq
    %v43 = vshrl.u32 %v42, 7
    %vm45 = vcmp.eq.s32.totalorder %v43, %v40
    %v46 = vld [vmem:[#allocation0] sm:$0xff]
    %v47 = vsel %vm45, %v46, 0.0
    %48 = vadd.xlane.f32.xlu0 %v47
    %v49 = vpop.xlane.xlu0 %48
    %vm50 = vcmp.ge.s32.totalorder %v43, %v40
    %vm51 = vmand %vm50, %vm41
    %v52 = vsel %vm51, %v46, 0.0
    %v53 = vrcp.pop %v49
    %v54 = vmul.f32 %v49, %v53
    %v55 = vsub.f32 1.0, %v54
    %v56 = vmul.f32 %v53, %v55
    %v57 = vadd.f32 %v53, %v56
    %vm58 = vweird.f32 %v49
    %vm59 = vweird.f32 %v53
    %vm60 = vmor %vm58, %vm59
    %v61 = vsel %vm60, %v53, %v57
    %v62 = vand.u32 2147483647, %v49
    %vm63 = vcmp.eq.f32.partialorder %v62, 8.507059e+37
    %v64 = vand.u32 %v49, 2147483648
    %v65 = vor.u32 1.1754944e-38, %v64
    %v66 = vsel %vm63, %v65, %v61
    %v67 = vmul.f32 %v52, %v66
    %68 = vst [vmem:[#allocation2] sm:$0xff] %v67
    %s69 = scalar_lea.vmem [#allocation0], 8
    %s70 = scalar_lea.vmem [#allocation2], 8
    %v71 = vlaneseq
    %v72 = vshrl.u32 %v71, 7
    %v73 = vadd.s32 %v72, 8
    %vm74 = vcmp.eq.s32.totalorder %v73, %v40
    %v75 = vld [vmem:[%s69] sm:$0xff]
    %v76 = vsel %vm74, %v75, 0.0
    %77 = vadd.xlane.f32.xlu0 %v76
    %v78 = vpop.xlane.xlu0 %77
    %vm79 = vcmp.ge.s32.totalorder %v73, %v40
    %vm80 = vmand %vm79, %vm41
    %v81 = vsel %vm80, %v75, 0.0
    %v82 = vrcp.pop %v78
    %v83 = vmul.f32 %v78, %v82
    %v84 = vsub.f32 1.0, %v83
    %v85 = vmul.f32 %v82, %v84
    %v86 = vadd.f32 %v82, %v85
    %vm87 = vweird.f32 %v78
    %vm88 = vweird.f32 %v82
    %vm89 = vmor %vm87, %vm88
    %v90 = vsel %vm89, %v82, %v86
    %v91 = vand.u32 2147483647, %v78
    %vm92 = vcmp.eq.f32.partialorder %v91, 8.507059e+37
    %v93 = vand.u32 %v78, 2147483648
    %v94 = vor.u32 1.1754944e-38, %v93
    %v95 = vsel %vm92, %v94, %v90
    %v96 = vmul.f32 %v81, %v95
    %97 = vst [vmem:[%s70] sm:$0xff] %v96
    %v98 = vlaneseq
    %v99 = vand.u32 %v98, 127
    %v100 = vlaneseq
    %v101 = vshrl.u32 %v100, 7
    %vm103 = vcmp.eq.s32.totalorder %v99, %v101
    %v104 = vlaneseq
    %v105 = vand.u32 %v104, 127
    %vm106 = vcmp.eq.s32.totalorder %v105, 0
    %v107 = vsel %vm106, 1.0, -1.0
    %v108 = vsel %vm103, %v107, 0.0
    %v109 = vlaneseq
    %v110 = vand.u32 %v109, 127
    %v111 = vlaneseq
    %v112 = vshrl.u32 %v111, 7
    %v113 = vadd.s32 %v112, 8
    %vm114 = vcmp.eq.s32.totalorder %v110, %v113
    %v115 = vsel %vm114, -1.0, 0.0
    %s116 = scalar_lea.vmem [#allocation2], 1
    %v117 = vld [vmem:[%s116] ss:$0 sm:$0xff]
    %v118 = vxor.u32 %v117, 2147483648
    %v119 = vlaneseq
    %v120 = vand.u32 %v119, 127
    %vm121 = vcmp.eq.s32.totalorder %v120, 1
    %v122 = vmul.f32 %v118, %v108
    %123 = vadd.xlane.f32.xlu0 %v122
    %v124 = vpop.xlane.xlu0 %123
    %v125 = vsel %vm121, %v124, %v108
    %s126 = scalar_lea.vmem [#allocation2], 2
    %v127 = vld [vmem:[%s126] ss:$0 sm:$0xff]
    %v128 = vxor.u32 %v127, 2147483648
    %v129 = vlaneseq
    %v130 = vand.u32 %v129, 127
    %vm131 = vcmp.eq.s32.totalorder %v130, 2
    %v132 = vmul.f32 %v128, %v125
    %133 = vadd.xlane.f32.xlu0 %v132
    %v134 = vpop.xlane.xlu0 %133
    %v135 = vsel %vm131, %v134, %v125
    %s136 = scalar_lea.vmem [#allocation2], 3
    %v137 = vld [vmem:[%s136] ss:$0 sm:$0xff]
    %v138 = vxor.u32 %v137, 2147483648
    %v139 = vlaneseq
    %v140 = vand.u32 %v139, 127
    %vm141 = vcmp.eq.s32.totalorder %v140, 3
    %v142 = vmul.f32 %v138, %v135
    %143 = vadd.xlane.f32.xlu0 %v142
    %v144 = vpop.xlane.xlu0 %143
    %v145 = vsel %vm141, %v144, %v135
    %s146 = scalar_lea.vmem [#allocation2], 4
    %v147 = vld [vmem:[%s146] ss:$0 sm:$0xff]
    %v148 = vxor.u32 %v147, 2147483648
    %v149 = vlaneseq
    %v150 = vand.u32 %v149, 127
    %vm151 = vcmp.eq.s32.totalorder %v150, 4
    %v152 = vmul.f32 %v148, %v145
    %153 = vadd.xlane.f32.xlu0 %v152
    %v154 = vpop.xlane.xlu0 %153
    %v155 = vsel %vm151, %v154, %v145
    %s156 = scalar_lea.vmem [#allocation2], 5
    %v157 = vld [vmem:[%s156] ss:$0 sm:$0xff]
    %v158 = vxor.u32 %v157, 2147483648
    %v159 = vlaneseq
    %v160 = vand.u32 %v159, 127
    %vm161 = vcmp.eq.s32.totalorder %v160, 5
    %v162 = vmul.f32 %v158, %v155
    %163 = vadd.xlane.f32.xlu0 %v162
    %v164 = vpop.xlane.xlu0 %163
    %v165 = vsel %vm161, %v164, %v155
    %s166 = scalar_lea.vmem [#allocation2], 6
    %v167 = vld [vmem:[%s166] ss:$0 sm:$0xff]
    %v168 = vxor.u32 %v167, 2147483648
    %v169 = vlaneseq
    %v170 = vand.u32 %v169, 127
    %vm171 = vcmp.eq.s32.totalorder %v170, 6
    %v172 = vmul.f32 %v168, %v165
    %173 = vadd.xlane.f32.xlu0 %v172
    %v174 = vpop.xlane.xlu0 %173
    %v175 = vsel %vm171, %v174, %v165
    %s176 = scalar_lea.vmem [#allocation2], 7
    %v177 = vld [vmem:[%s176] ss:$0 sm:$0xff]
    %v178 = vxor.u32 %v177, 2147483648
    %v179 = vlaneseq
    %v180 = vand.u32 %v179, 127
    %vm181 = vcmp.eq.s32.totalorder %v180, 7
    %v182 = vmul.f32 %v178, %v175
    %183 = vadd.xlane.f32.xlu0 %v182
    %v184 = vpop.xlane.xlu0 %183
    %v185 = vsel %vm181, %v184, %v175
    %s186 = scalar_lea.vmem [#allocation2], 8
    %v187 = vld [vmem:[%s186] ss:$0 sm:$0xff]
    %v188 = vxor.u32 %v187, 2147483648
    %v189 = vlaneseq
    %v190 = vand.u32 %v189, 127
    %vm191 = vcmp.eq.s32.totalorder %v190, 8
    %v192 = vmul.f32 %v188, %v185
    %193 = vadd.xlane.f32.xlu0 %v192
    %v194 = vpop.xlane.xlu0 %193
    %v195 = vsel %vm191, %v194, %v185
    %v196 = vmul.f32 %v188, %v115
    %197 = vadd.xlane.f32.xlu0 %v196
    %v198 = vpop.xlane.xlu0 %197
    %v199 = vsel %vm191, %v198, %v115
    %s200 = scalar_lea.vmem [#allocation2], 9
    %v201 = vld [vmem:[%s200] ss:$0 sm:$0xff]
    %v202 = vxor.u32 %v201, 2147483648
    %v203 = vlaneseq
    %v204 = vand.u32 %v203, 127
    %vm205 = vcmp.eq.s32.totalorder %v204, 9
    %v206 = vmul.f32 %v202, %v195
    %207 = vadd.xlane.f32.xlu0 %v206
    %v208 = vpop.xlane.xlu0 %207
    %v209 = vsel %vm205, %v208, %v195
    %v210 = vmul.f32 %v202, %v199
    %211 = vadd.xlane.f32.xlu0 %v210
    %v212 = vpop.xlane.xlu0 %211
    %v213 = vsel %vm205, %v212, %v199
    %s214 = scalar_lea.vmem [#allocation2], 10
    %v215 = vld [vmem:[%s214] ss:$0 sm:$0xff]
    %v216 = vxor.u32 %v215, 2147483648
    %v217 = vlaneseq
    %v218 = vand.u32 %v217, 127
    %vm219 = vcmp.eq.s32.totalorder %v218, 10
    %v220 = vmul.f32 %v216, %v209
    %221 = vadd.xlane.f32.xlu0 %v220
    %v222 = vpop.xlane.xlu0 %221
    %v223 = vsel %vm219, %v222, %v209
    %v224 = vmul.f32 %v216, %v213
    %225 = vadd.xlane.f32.xlu0 %v224
    %v226 = vpop.xlane.xlu0 %225
    %v227 = vsel %vm219, %v226, %v213
    %s228 = scalar_lea.vmem [#allocation2], 11
    %v229 = vld [vmem:[%s228] ss:$0 sm:$0xff]
    %v230 = vxor.u32 %v229, 2147483648
    %v231 = vlaneseq
    %v232 = vand.u32 %v231, 127
    %vm233 = vcmp.eq.s32.totalorder %v232, 11
    %v234 = vmul.f32 %v230, %v223
    %235 = vadd.xlane.f32.xlu0 %v234
    %v236 = vpop.xlane.xlu0 %235
    %v237 = vsel %vm233, %v236, %v223
    %v238 = vmul.f32 %v230, %v227
    %239 = vadd.xlane.f32.xlu0 %v238
    %v240 = vpop.xlane.xlu0 %239
    %v241 = vsel %vm233, %v240, %v227
    %s242 = scalar_lea.vmem [#allocation2], 12
    %v243 = vld [vmem:[%s242] ss:$0 sm:$0xff]
    %v244 = vxor.u32 %v243, 2147483648
    %v245 = vlaneseq
    %v246 = vand.u32 %v245, 127
    %vm247 = vcmp.eq.s32.totalorder %v246, 12
    %v248 = vmul.f32 %v244, %v237
    %249 = vadd.xlane.f32.xlu0 %v248
    %v250 = vpop.xlane.xlu0 %249
    %v251 = vsel %vm247, %v250, %v237
    %v252 = vmul.f32 %v244, %v241
    %253 = vadd.xlane.f32.xlu0 %v252
    %v254 = vpop.xlane.xlu0 %253
    %v255 = vsel %vm247, %v254, %v241
    %s256 = scalar_lea.vmem [#allocation2], 13
    %v257 = vld [vmem:[%s256] ss:$0 sm:$0xff]
    %v258 = vxor.u32 %v257, 2147483648
    %v259 = vlaneseq
    %v260 = vand.u32 %v259, 127
    %vm261 = vcmp.eq.s32.totalorder %v260, 13
    %v262 = vmul.f32 %v258, %v251
    %263 = vadd.xlane.f32.xlu0 %v262
    %v264 = vpop.xlane.xlu0 %263
    %v265 = vsel %vm261, %v264, %v251
    %v266 = vmul.f32 %v258, %v255
    %267 = vadd.xlane.f32.xlu0 %v266
    %v268 = vpop.xlane.xlu0 %267
    %v269 = vsel %vm261, %v268, %v255
    %s270 = scalar_lea.vmem [#allocation2], 14
    %v271 = vld [vmem:[%s270] ss:$0 sm:$0xff]
    %v272 = vxor.u32 %v271, 2147483648
    %v273 = vlaneseq
    %v274 = vand.u32 %v273, 127
    %vm275 = vcmp.eq.s32.totalorder %v274, 14
    %v276 = vmul.f32 %v272, %v265
    %277 = vadd.xlane.f32.xlu0 %v276
    %v278 = vpop.xlane.xlu0 %277
    %v279 = vsel %vm275, %v278, %v265
    %v280 = vmul.f32 %v272, %v269
    %281 = vadd.xlane.f32.xlu0 %v280
    %v282 = vpop.xlane.xlu0 %281
    %v283 = vsel %vm275, %v282, %v269
    %s284 = scalar_lea.vmem [#allocation2], 15
    %v285 = vld [vmem:[%s284] ss:$0 sm:$0xff]
    %v286 = vxor.u32 %v285, 2147483648
    %v287 = vlaneseq
    %v288 = vand.u32 %v287, 127
    %vm289 = vcmp.eq.s32.totalorder %v288, 15
    %v290 = vmul.f32 %v286, %v279
    %291 = vadd.xlane.f32.xlu0 %v290
    %v292 = vpop.xlane.xlu0 %291
    %v293 = vsel %vm289, %v292, %v279
    %v294 = vmul.f32 %v286, %v283
    %295 = vadd.xlane.f32.xlu0 %v294
    %v296 = vpop.xlane.xlu0 %295
    %v297 = vsel %vm289, %v296, %v283
    %v298 = vrcp.pop %v49
    %v299 = vmul.f32 %v49, %v298
    %v300 = vsub.f32 1.0, %v299
    %v301 = vmul.f32 %v298, %v300
    %v302 = vadd.f32 %v298, %v301
    %vm303 = vweird.f32 %v49
    %vm304 = vweird.f32 %v298
    %vm305 = vmor %vm303, %vm304
    %v306 = vsel %vm305, %v298, %v302
    %v307 = vand.u32 2147483647, %v49
    %vm308 = vcmp.eq.f32.partialorder %v307, 8.507059e+37
    %v309 = vand.u32 %v49, 2147483648
    %v310 = vor.u32 1.1754944e-38, %v309
    %v311 = vsel %vm308, %v310, %v306
    %v312 = vmul.f32 %v293, %v311
    %vm313 = vweird.f32 %v49
    %v314 = vsel %vm313, %v293, %v312
    %315 = vst [vmem:[#allocation1] sm:$0xff] %v314
    %v316 = vrcp.pop %v78
    %v317 = vmul.f32 %v78, %v316
    %v318 = vsub.f32 1.0, %v317
    %v319 = vmul.f32 %v316, %v318
    %v320 = vadd.f32 %v316, %v319
    %vm321 = vweird.f32 %v78
    %vm322 = vweird.f32 %v316
    %vm323 = vmor %vm321, %vm322
    %v324 = vsel %vm323, %v316, %v320
    %v325 = vand.u32 2147483647, %v78
    %vm326 = vcmp.eq.f32.partialorder %v325, 8.507059e+37
    %v327 = vand.u32 %v78, 2147483648
    %v328 = vor.u32 1.1754944e-38, %v327
    %v329 = vsel %vm326, %v328, %v324
    %v330 = vmul.f32 %v297, %v329
    %vm331 = vweird.f32 %v78
    %v332 = vsel %vm331, %v297, %v330
    %s333 = scalar_lea.vmem [#allocation1], 8
    %334 = vst [vmem:[%s333] sm:$0xff] %v332
    // Predicated region
    $region36: #{custom-call.12} parent=1 // pred_check
      _
    $region37: #{custom-call.12} parent=1 // pred_check_branch
      %336 = sbr.rel (0) target = $region39
    $region38: #{custom-call.12} parent=1 // pred_region
      // Predicated region
      $region40: #{custom-call.12} parent=38 // pred_check
        _
      $region41: #{custom-call.12} parent=38 // pred_check_branch
        %338 = sbr.rel (0) target = $region43
      $region42: #{custom-call.12} parent=38 // pred_region
        // Predicated region
        $region55: #{custom-call.12} parent=42 // pred_check
          _
        $region56: #{custom-call.12} parent=42 // pred_check_branch
          %356 = sbr.rel (0) target = $region58
        $region57: #{custom-call.12} parent=42 // pred_region
          loop: start=0, step=1, limit=1
          $region59: #{custom-call.12} parent=57 // loop_pre_header
            _
          $region60: #{custom-call.12} parent=57 // loop_header
            %s358 = sphi 0, %s362
            %p359 = scmp.ge.s32.totalorder %s358, 1
            %s363 = sphi [#allocation1], [#allocation1]
            %s364 = sphi %s1, %s1
          $region61: #{custom-call.12} parent=57 // loop_header_branch
            %361 = sbr.rel (%p359) target = $region65
          $region62: #{custom-call.12} parent=57 // loop_body
            %v365 = vld [vmem:[%s363] sm:$0xff]
            %366 = vst [vmem:[%s364] sm:$0xff] %v365
            %v367 = vld [vmem:[%s363 + $0x8] sm:$0xff]
            %368 = vst [vmem:[%s364 + $0x8] sm:$0xff] %v367
          $region63: #{custom-call.12} parent=57 // loop_footer
            %s362 = sadd.s32 1, %s358
          $region64: #{custom-call.12} parent=57 // loop_footer_branch
            %357 = sbr.rel target = $region60
          $region65: #{custom-call.12} parent=57 // loop_exit
            _
        $region58: #{custom-call.12} parent=42 // pred_fallthru
          _
        // Predicated region
        $region66: #{custom-call.12} parent=42 // pred_check
          _
        $region67: #{custom-call.12} parent=42 // pred_check_branch
          %370 = sbr.rel target = $region69
        $region68: #{custom-call.12} parent=42 // pred_region
          _
        $region69: #{custom-call.12} parent=42 // pred_fallthru
          _
      $region43: #{custom-call.12} parent=38 // pred_fallthru
        _
      // Predicated region
      $region44: #{custom-call.12} parent=38 // pred_check
        _
      $region45: #{custom-call.12} parent=38 // pred_check_branch
        %340 = sbr.rel target = $region47
      $region46: #{custom-call.12} parent=38 // pred_region
        %s342 = ssub.s32 256, 1
        loop: start=0, step=1, limit=1
        $region48: #{custom-call.12} parent=46 // loop_pre_header
          _
        $region49: #{custom-call.12} parent=46 // loop_header
          %s344 = sphi 0, %s348
          %p345 = scmp.ge.s32.totalorder %s344, 1
          %s349 = sphi [#allocation1], [#allocation1]
          %s350 = sphi %s1, %s1
        $region50: #{custom-call.12} parent=46 // loop_header_branch
          %347 = sbr.rel (%p345) target = $region54
        $region51: #{custom-call.12} parent=46 // loop_body
          %v351 = vld [vmem:[%s349] sm:%s342]
          %352 = vst [vmem:[%s350] sm:%s342] %v351
          %v353 = vld [vmem:[%s349 + $0x8] sm:%s342]
          %354 = vst [vmem:[%s350 + $0x8] sm:%s342] %v353
        $region52: #{custom-call.12} parent=46 // loop_footer
          %s348 = sadd.s32 1, %s344
        $region53: #{custom-call.12} parent=46 // loop_footer_branch
          %343 = sbr.rel target = $region49
        $region54: #{custom-call.12} parent=46 // loop_exit
          _
      $region47: #{custom-call.12} parent=38 // pred_fallthru
        _
    $region39: #{custom-call.12} parent=1 // pred_fallthru
      _
    %371 = vnop

// kernel: svgp_forward.5
$region0: #{svgp_forward.5}
  #allocation0 [shape = 'u32[]', space=smem, size = 0x4, offset = 0x4, fixed_abs, tag = 'smem constant byte address 0x4 - core index']
  #allocation1 [shape = 'u32[72,128]{1,0:T(1,128)}', space=vmem, size = 0x9000, scoped, tag = 'internal scratch']
  #allocation2 [shape = 's32[1]{0}', space=sflag, size = 0x4, scoped, tag = 'scoped memory for svgp_forward.5']
  #allocation3 [shape = 'u8[512]{0}', space=smem, size = 0x200, scoped, tag = 'prefetched SMEM operand 0']
  %s0 = inlined_call_operand.vmem [shape: f32[4], index: 0, kind: input, shape index: {}]
  %s1 = inlined_call_operand.vmem [shape: f32[16,4], index: 1, kind: input, shape index: {}]
  %s2 = inlined_call_operand.vmem [shape: f32[128,4], index: 2, kind: input, shape index: {}]
  %s3 = inlined_call_operand.vmem [shape: f32[16,128], index: 3, kind: output, shape index: {}]
  %s4 = sld [smem:[#allocation0]]
  $region18: #{svgp_forward.5} parent=0
    _
  %s6 = ssub.s32 1, %s4
  %s7 = scalar_select 0, %s6, %s4
  %s9 = sshll.u32 %s0, 4
  %s10 = int_to_ptr.vmem [resolvable:$true] %s9
  %12 = dma.vmem_to_smem %s10, 16, [#allocation3], [#allocation2]
  %14 = dma.done [#allocation2], 16
  %15 = sfence
  // Predicated region
  $region2: #{svgp_forward.5} parent=0 // pred_check
    _
  $region3: #{svgp_forward.5} parent=0 // pred_check_branch
    %17 = sbr.rel (0) target = $region5
  $region4: #{svgp_forward.5} parent=0 // pred_region
    _
  $region5: #{svgp_forward.5} parent=0 // pred_fallthru
    _
  // Predicated region
  $region6: #{svgp_forward.5} parent=0 // pred_check
    _
  $region7: #{svgp_forward.5} parent=0 // pred_check_branch
    %19 = sbr.rel (0) target = $region9
  $region8: #{svgp_forward.5} parent=0 // pred_region
    _
  $region9: #{svgp_forward.5} parent=0 // pred_fallthru
    _
  %s20 = sld [smem:[#allocation3]]
  %s21 = sld [smem:[#allocation3 + $0x1]]
  %v22 = vld [vmem:[%s1] sm:$0xff]
  %v23 = vld [vmem:[%s1 + $0x8] sm:$0xff]
  %v24 = vstv %s21
  %v25 = vmul.f32 %v22, %v24
  %v26 = vmul.f32 %v23, %v24
  %v27 = vld [vmem:[%s2] sm:$0xff]
  %v28 = vld [vmem:[%s2 + $0x8] sm:$0xff]
  %v29 = vld [vmem:[%s2 + $0x10] sm:$0xff]
  %v30 = vld [vmem:[%s2 + $0x18] sm:$0xff]
  %v31 = vld [vmem:[%s2 + $0x20] sm:$0xff]
  %v32 = vld [vmem:[%s2 + $0x28] sm:$0xff]
  %v33 = vld [vmem:[%s2 + $0x30] sm:$0xff]
  %v34 = vld [vmem:[%s2 + $0x38] sm:$0xff]
  %v35 = vld [vmem:[%s2 + $0x40] sm:$0xff]
  %v36 = vld [vmem:[%s2 + $0x48] sm:$0xff]
  %v37 = vld [vmem:[%s2 + $0x50] sm:$0xff]
  %v38 = vld [vmem:[%s2 + $0x58] sm:$0xff]
  %v39 = vld [vmem:[%s2 + $0x60] sm:$0xff]
  %v40 = vld [vmem:[%s2 + $0x68] sm:$0xff]
  %v41 = vld [vmem:[%s2 + $0x70] sm:$0xff]
  %v42 = vld [vmem:[%s2 + $0x78] sm:$0xff]
  %v43 = vmul.f32 %v27, %v24
  %v44 = vmul.f32 %v28, %v24
  %v45 = vmul.f32 %v29, %v24
  %v46 = vmul.f32 %v30, %v24
  %v47 = vmul.f32 %v31, %v24
  %v48 = vmul.f32 %v32, %v24
  %v49 = vmul.f32 %v33, %v24
  %v50 = vmul.f32 %v34, %v24
  %v51 = vmul.f32 %v35, %v24
  %v52 = vmul.f32 %v36, %v24
  %v53 = vmul.f32 %v37, %v24
  %v54 = vmul.f32 %v38, %v24
  %v55 = vmul.f32 %v39, %v24
  %v56 = vmul.f32 %v40, %v24
  %v57 = vmul.f32 %v41, %v24
  %v58 = vmul.f32 %v42, %v24
  %v59 = vmul.f32 %v25, %v25
  %v60 = vmul.f32 %v26, %v26
  %vm61 = vcmask 31744
  %v62 = vsel %vm61, %v59, 0.0
  %63 = vadd.xlane.f32.xlu0 %v62
  %v64 = vpop.xlane.xlu0 %63
  %v65 = vsel %vm61, %v60, 0.0
  %66 = vadd.xlane.f32.xlu0 %v65
  %v67 = vpop.xlane.xlu0 %66
  %v68 = vmul.f32 %v43, %v43
  %v69 = vmul.f32 %v44, %v44
  %v70 = vmul.f32 %v45, %v45
  %v71 = vmul.f32 %v46, %v46
  %v72 = vmul.f32 %v47, %v47
  %v73 = vmul.f32 %v48, %v48
  %v74 = vmul.f32 %v49, %v49
  %v75 = vmul.f32 %v50, %v50
  %v76 = vmul.f32 %v51, %v51
  %v77 = vmul.f32 %v52, %v52
  %v78 = vmul.f32 %v53, %v53
  %v79 = vmul.f32 %v54, %v54
  %v80 = vmul.f32 %v55, %v55
  %v81 = vmul.f32 %v56, %v56
  %v82 = vmul.f32 %v57, %v57
  %v83 = vmul.f32 %v58, %v58
  %v85 = vsel %vm61, 1.0, 0
  %v88 = vsel %vm61, %v68, 0
  %v91 = vsel %vm61, %v69, 0
  %v94 = vsel %vm61, %v70, 0
  %v97 = vsel %vm61, %v71, 0
  %v100 = vsel %vm61, %v72, 0
  %v103 = vsel %vm61, %v73, 0
  %v106 = vsel %vm61, %v74, 0
  %v109 = vsel %vm61, %v75, 0
  %v112 = vsel %vm61, %v76, 0
  %v115 = vsel %vm61, %v77, 0
  %v118 = vsel %vm61, %v78, 0
  %v121 = vsel %vm61, %v79, 0
  %v124 = vsel %vm61, %v80, 0
  %v127 = vsel %vm61, %v81, 0
  %v130 = vsel %vm61, %v82, 0
  %v133 = vsel %vm61, %v83, 0
  %v135 = vand.u32 %v133, 4294901760
  %136 = vmatpush.xpose.msra.mxu0 %v135
  %v137 = vand.u32 %v130, 4294901760
  %138 = vmatpush.xpose.msra.mxu0 %v137
  %v139 = vand.u32 %v127, 4294901760
  %140 = vmatpush.xpose.msra.mxu0 %v139
  %v141 = vand.u32 %v124, 4294901760
  %142 = vmatpush.xpose.msra.mxu0 %v141
  %v143 = vand.u32 %v121, 4294901760
  %144 = vmatpush.xpose.msra.mxu0 %v143
  %v145 = vand.u32 %v118, 4294901760
  %146 = vmatpush.xpose.msra.mxu0 %v145
  %v147 = vand.u32 %v115, 4294901760
  %148 = vmatpush.xpose.msra.mxu0 %v147
  %v149 = vand.u32 %v112, 4294901760
  %150 = vmatpush.xpose.msra.mxu0 %v149
  %v151 = vand.u32 %v109, 4294901760
  %152 = vmatpush.xpose.msra.mxu0 %v151
  %v153 = vand.u32 %v106, 4294901760
  %154 = vmatpush.xpose.msra.mxu0 %v153
  %v155 = vand.u32 %v103, 4294901760
  %156 = vmatpush.xpose.msra.mxu0 %v155
  %v157 = vand.u32 %v100, 4294901760
  %158 = vmatpush.xpose.msra.mxu0 %v157
  %v159 = vand.u32 %v97, 4294901760
  %160 = vmatpush.xpose.msra.mxu0 %v159
  %v161 = vand.u32 %v94, 4294901760
  %162 = vmatpush.xpose.msra.mxu0 %v161
  %v163 = vand.u32 %v91, 4294901760
  %164 = vmatpush.xpose.msra.mxu0 %v163
  %v165 = vand.u32 %v88, 4294901760
  %166 = vmatpush.xpose.msra.mxu0 %v165
  %v167 = vand.u32 %v85, 4294901760
  %v168 = vsub.f32 %v85, %v167
  %v169 = vand.u32 %v168, 4294901760
  %v170 = vsub.f32 %v168, %v169
  %v171 = vand.u32 %v170, 4294901760
  %172 = vmatmul.f32.gmra.mxu0 %v171
  %v173 = vpop.f32.mrf.mxu0
  %v174 = vadd.f32 0.0, %v173
  %175 = vdwg.mxu0
  %v176 = vand.u32 %v133, 4294901760
  %v177 = vsub.f32 %v133, %v176
  %v178 = vand.u32 %v177, 4294901760
  %v179 = vsub.f32 %v177, %v178
  %v180 = vand.u32 %v179, 4294901760
  %181 = vmatpush.xpose.msra.mxu0 %v180
  %v182 = vand.u32 %v130, 4294901760
  %v183 = vsub.f32 %v130, %v182
  %v184 = vand.u32 %v183, 4294901760
  %v185 = vsub.f32 %v183, %v184
  %v186 = vand.u32 %v185, 4294901760
  %187 = vmatpush.xpose.msra.mxu0 %v186
  %v188 = vand.u32 %v127, 4294901760
  %v189 = vsub.f32 %v127, %v188
  %v190 = vand.u32 %v189, 4294901760
  %v191 = vsub.f32 %v189, %v190
  %v192 = vand.u32 %v191, 4294901760
  %193 = vmatpush.xpose.msra.mxu0 %v192
  %v194 = vand.u32 %v124, 4294901760
  %v195 = vsub.f32 %v124, %v194
  %v196 = vand.u32 %v195, 4294901760
  %v197 = vsub.f32 %v195, %v196
  %v198 = vand.u32 %v197, 4294901760
  %199 = vmatpush.xpose.msra.mxu0 %v198
  %v200 = vand.u32 %v121, 4294901760
  %v201 = vsub.f32 %v121, %v200
  %v202 = vand.u32 %v201, 4294901760
  %v203 = vsub.f32 %v201, %v202
  %v204 = vand.u32 %v203, 4294901760
  %205 = vmatpush.xpose.msra.mxu0 %v204
  %v206 = vand.u32 %v118, 4294901760
  %v207 = vsub.f32 %v118, %v206
  %v208 = vand.u32 %v207, 4294901760
  %v209 = vsub.f32 %v207, %v208
  %v210 = vand.u32 %v209, 4294901760
  %211 = vmatpush.xpose.msra.mxu0 %v210
  %v212 = vand.u32 %v115, 4294901760
  %v213 = vsub.f32 %v115, %v212
  %v214 = vand.u32 %v213, 4294901760
  %v215 = vsub.f32 %v213, %v214
  %v216 = vand.u32 %v215, 4294901760
  %217 = vmatpush.xpose.msra.mxu0 %v216
  %v218 = vand.u32 %v112, 4294901760
  %v219 = vsub.f32 %v112, %v218
  %v220 = vand.u32 %v219, 4294901760
  %v221 = vsub.f32 %v219, %v220
  %v222 = vand.u32 %v221, 4294901760
  %223 = vmatpush.xpose.msra.mxu0 %v222
  %v224 = vand.u32 %v109, 4294901760
  %v225 = vsub.f32 %v109, %v224
  %v226 = vand.u32 %v225, 4294901760
  %v227 = vsub.f32 %v225, %v226
  %v228 = vand.u32 %v227, 4294901760
  %229 = vmatpush.xpose.msra.mxu0 %v228
  %v230 = vand.u32 %v106, 4294901760
  %v231 = vsub.f32 %v106, %v230
  %v232 = vand.u32 %v231, 4294901760
  %v233 = vsub.f32 %v231, %v232
  %v234 = vand.u32 %v233, 4294901760
  %235 = vmatpush.xpose.msra.mxu0 %v234
  %v236 = vand.u32 %v103, 4294901760
  %v237 = vsub.f32 %v103, %v236
  %v238 = vand.u32 %v237, 4294901760
  %v239 = vsub.f32 %v237, %v238
  %v240 = vand.u32 %v239, 4294901760
  %241 = vmatpush.xpose.msra.mxu0 %v240
  %v242 = vand.u32 %v100, 4294901760
  %v243 = vsub.f32 %v100, %v242
  %v244 = vand.u32 %v243, 4294901760
  %v245 = vsub.f32 %v243, %v244
  %v246 = vand.u32 %v245, 4294901760
  %247 = vmatpush.xpose.msra.mxu0 %v246
  %v248 = vand.u32 %v97, 4294901760
  %v249 = vsub.f32 %v97, %v248
  %v250 = vand.u32 %v249, 4294901760
  %v251 = vsub.f32 %v249, %v250
  %v252 = vand.u32 %v251, 4294901760
  %253 = vmatpush.xpose.msra.mxu0 %v252
  %v254 = vand.u32 %v94, 4294901760
  %v255 = vsub.f32 %v94, %v254
  %v256 = vand.u32 %v255, 4294901760
  %v257 = vsub.f32 %v255, %v256
  %v258 = vand.u32 %v257, 4294901760
  %259 = vmatpush.xpose.msra.mxu0 %v258
  %v260 = vand.u32 %v91, 4294901760
  %v261 = vsub.f32 %v91, %v260
  %v262 = vand.u32 %v261, 4294901760
  %v263 = vsub.f32 %v261, %v262
  %v264 = vand.u32 %v263, 4294901760
  %265 = vmatpush.xpose.msra.mxu0 %v264
  %v266 = vand.u32 %v88, 4294901760
  %v267 = vsub.f32 %v88, %v266
  %v268 = vand.u32 %v267, 4294901760
  %v269 = vsub.f32 %v267, %v268
  %v270 = vand.u32 %v269, 4294901760
  %271 = vmatpush.xpose.msra.mxu0 %v270
  %v272 = vand.u32 %v85, 4294901760
  %273 = vmatmul.f32.gmra.mxu0 %v272
  %v274 = vpop.f32.mrf.mxu0
  %v275 = vadd.f32 %v174, %v274
  %276 = vdwg.mxu0
  %v277 = vand.u32 %v133, 4294901760
  %v278 = vsub.f32 %v133, %v277
  %279 = vmatpush.xpose.msra.mxu0 %v278
  %v280 = vand.u32 %v130, 4294901760
  %v281 = vsub.f32 %v130, %v280
  %282 = vmatpush.xpose.msra.mxu0 %v281
  %v283 = vand.u32 %v127, 4294901760
  %v284 = vsub.f32 %v127, %v283
  %285 = vmatpush.xpose.msra.mxu0 %v284
  %v286 = vand.u32 %v124, 4294901760
  %v287 = vsub.f32 %v124, %v286
  %288 = vmatpush.xpose.msra.mxu0 %v287
  %v289 = vand.u32 %v121, 4294901760
  %v290 = vsub.f32 %v121, %v289
  %291 = vmatpush.xpose.msra.mxu0 %v290
  %v292 = vand.u32 %v118, 4294901760
  %v293 = vsub.f32 %v118, %v292
  %294 = vmatpush.xpose.msra.mxu0 %v293
  %v295 = vand.u32 %v115, 4294901760
  %v296 = vsub.f32 %v115, %v295
  %297 = vmatpush.xpose.msra.mxu0 %v296
  %v298 = vand.u32 %v112, 4294901760
  %v299 = vsub.f32 %v112, %v298
  %300 = vmatpush.xpose.msra.mxu0 %v299
  %v301 = vand.u32 %v109, 4294901760
  %v302 = vsub.f32 %v109, %v301
  %303 = vmatpush.xpose.msra.mxu0 %v302
  %v304 = vand.u32 %v106, 4294901760
  %v305 = vsub.f32 %v106, %v304
  %306 = vmatpush.xpose.msra.mxu0 %v305
  %v307 = vand.u32 %v103, 4294901760
  %v308 = vsub.f32 %v103, %v307
  %309 = vmatpush.xpose.msra.mxu0 %v308
  %v310 = vand.u32 %v100, 4294901760
  %v311 = vsub.f32 %v100, %v310
  %312 = vmatpush.xpose.msra.mxu0 %v311
  %v313 = vand.u32 %v97, 4294901760
  %v314 = vsub.f32 %v97, %v313
  %315 = vmatpush.xpose.msra.mxu0 %v314
  %v316 = vand.u32 %v94, 4294901760
  %v317 = vsub.f32 %v94, %v316
  %318 = vmatpush.xpose.msra.mxu0 %v317
  %v319 = vand.u32 %v91, 4294901760
  %v320 = vsub.f32 %v91, %v319
  %321 = vmatpush.xpose.msra.mxu0 %v320
  %v322 = vand.u32 %v88, 4294901760
  %v323 = vsub.f32 %v88, %v322
  %324 = vmatpush.xpose.msra.mxu0 %v323
  %v325 = vand.u32 %v85, 4294901760
  %v326 = vsub.f32 %v85, %v325
  %327 = vmatmul.f32.gmra.mxu0 %v326
  %v328 = vpop.f32.mrf.mxu0
  %v329 = vadd.f32 %v275, %v328
  %330 = vdwg.mxu0
  %v331 = vand.u32 %v133, 4294901760
  %332 = vmatpush.xpose.msra.mxu0 %v331
  %v333 = vand.u32 %v130, 4294901760
  %334 = vmatpush.xpose.msra.mxu0 %v333
  %v335 = vand.u32 %v127, 4294901760
  %336 = vmatpush.xpose.msra.mxu0 %v335
  %v337 = vand.u32 %v124, 4294901760
  %338 = vmatpush.xpose.msra.mxu0 %v337
  %v339 = vand.u32 %v121, 4294901760
  %340 = vmatpush.xpose.msra.mxu0 %v339
  %v341 = vand.u32 %v118, 4294901760
  %342 = vmatpush.xpose.msra.mxu0 %v341
  %v343 = vand.u32 %v115, 4294901760
  %344 = vmatpush.xpose.msra.mxu0 %v343
  %v345 = vand.u32 %v112, 4294901760
  %346 = vmatpush.xpose.msra.mxu0 %v345
  %v347 = vand.u32 %v109, 4294901760
  %348 = vmatpush.xpose.msra.mxu0 %v347
  %v349 = vand.u32 %v106, 4294901760
  %350 = vmatpush.xpose.msra.mxu0 %v349
  %v351 = vand.u32 %v103, 4294901760
  %352 = vmatpush.xpose.msra.mxu0 %v351
  %v353 = vand.u32 %v100, 4294901760
  %354 = vmatpush.xpose.msra.mxu0 %v353
  %v355 = vand.u32 %v97, 4294901760
  %356 = vmatpush.xpose.msra.mxu0 %v355
  %v357 = vand.u32 %v94, 4294901760
  %358 = vmatpush.xpose.msra.mxu0 %v357
  %v359 = vand.u32 %v91, 4294901760
  %360 = vmatpush.xpose.msra.mxu0 %v359
  %v361 = vand.u32 %v88, 4294901760
  %362 = vmatpush.xpose.msra.mxu0 %v361
  %v363 = vand.u32 %v85, 4294901760
  %v364 = vsub.f32 %v85, %v363
  %v365 = vand.u32 %v364, 4294901760
  %366 = vmatmul.f32.gmra.mxu0 %v365
  %v367 = vpop.f32.mrf.mxu0
  %v368 = vadd.f32 %v329, %v367
  %369 = vdwg.mxu0
  %v370 = vand.u32 %v133, 4294901760
  %v371 = vsub.f32 %v133, %v370
  %v372 = vand.u32 %v371, 4294901760
  %373 = vmatpush.xpose.msra.mxu0 %v372
  %v374 = vand.u32 %v130, 4294901760
  %v375 = vsub.f32 %v130, %v374
  %v376 = vand.u32 %v375, 4294901760
  %377 = vmatpush.xpose.msra.mxu0 %v376
  %v378 = vand.u32 %v127, 4294901760
  %v379 = vsub.f32 %v127, %v378
  %v380 = vand.u32 %v379, 4294901760
  %381 = vmatpush.xpose.msra.mxu0 %v380
  %v382 = vand.u32 %v124, 4294901760
  %v383 = vsub.f32 %v124, %v382
  %v384 = vand.u32 %v383, 4294901760
  %385 = vmatpush.xpose.msra.mxu0 %v384
  %v386 = vand.u32 %v121, 4294901760
  %v387 = vsub.f32 %v121, %v386
  %v388 = vand.u32 %v387, 4294901760
  %389 = vmatpush.xpose.msra.mxu0 %v388
  %v390 = vand.u32 %v118, 4294901760
  %v391 = vsub.f32 %v118, %v390
  %v392 = vand.u32 %v391, 4294901760
  %393 = vmatpush.xpose.msra.mxu0 %v392
  %v394 = vand.u32 %v115, 4294901760
  %v395 = vsub.f32 %v115, %v394
  %v396 = vand.u32 %v395, 4294901760
  %397 = vmatpush.xpose.msra.mxu0 %v396
  %v398 = vand.u32 %v112, 4294901760
  %v399 = vsub.f32 %v112, %v398
  %v400 = vand.u32 %v399, 4294901760
  %401 = vmatpush.xpose.msra.mxu0 %v400
  %v402 = vand.u32 %v109, 4294901760
  %v403 = vsub.f32 %v109, %v402
  %v404 = vand.u32 %v403, 4294901760
  %405 = vmatpush.xpose.msra.mxu0 %v404
  %v406 = vand.u32 %v106, 4294901760
  %v407 = vsub.f32 %v106, %v406
  %v408 = vand.u32 %v407, 4294901760
  %409 = vmatpush.xpose.msra.mxu0 %v408
  %v410 = vand.u32 %v103, 4294901760
  %v411 = vsub.f32 %v103, %v410
  %v412 = vand.u32 %v411, 4294901760
  %413 = vmatpush.xpose.msra.mxu0 %v412
  %v414 = vand.u32 %v100, 4294901760
  %v415 = vsub.f32 %v100, %v414
  %v416 = vand.u32 %v415, 4294901760
  %417 = vmatpush.xpose.msra.mxu0 %v416
  %v418 = vand.u32 %v97, 4294901760
  %v419 = vsub.f32 %v97, %v418
  %v420 = vand.u32 %v419, 4294901760
  %421 = vmatpush.xpose.msra.mxu0 %v420
  %v422 = vand.u32 %v94, 4294901760
  %v423 = vsub.f32 %v94, %v422
  %v424 = vand.u32 %v423, 4294901760
  %425 = vmatpush.xpose.msra.mxu0 %v424
  %v426 = vand.u32 %v91, 4294901760
  %v427 = vsub.f32 %v91, %v426
  %v428 = vand.u32 %v427, 4294901760
  %429 = vmatpush.xpose.msra.mxu0 %v428
  %v430 = vand.u32 %v88, 4294901760
  %v431 = vsub.f32 %v88, %v430
  %v432 = vand.u32 %v431, 4294901760
  %433 = vmatpush.xpose.msra.mxu0 %v432
  %v434 = vand.u32 %v85, 4294901760
  %435 = vmatmul.f32.gmra.mxu0 %v434
  %v436 = vpop.f32.mrf.mxu0
  %v437 = vadd.f32 %v368, %v436
  %438 = vdwg.mxu0
  %v439 = vand.u32 %v133, 4294901760
  %440 = vmatpush.xpose.msra.mxu0 %v439
  %v441 = vand.u32 %v130, 4294901760
  %442 = vmatpush.xpose.msra.mxu0 %v441
  %v443 = vand.u32 %v127, 4294901760
  %444 = vmatpush.xpose.msra.mxu0 %v443
  %v445 = vand.u32 %v124, 4294901760
  %446 = vmatpush.xpose.msra.mxu0 %v445
  %v447 = vand.u32 %v121, 4294901760
  %448 = vmatpush.xpose.msra.mxu0 %v447
  %v449 = vand.u32 %v118, 4294901760
  %450 = vmatpush.xpose.msra.mxu0 %v449
  %v451 = vand.u32 %v115, 4294901760
  %452 = vmatpush.xpose.msra.mxu0 %v451
  %v453 = vand.u32 %v112, 4294901760
  %454 = vmatpush.xpose.msra.mxu0 %v453
  %v455 = vand.u32 %v109, 4294901760
  %456 = vmatpush.xpose.msra.mxu0 %v455
  %v457 = vand.u32 %v106, 4294901760
  %458 = vmatpush.xpose.msra.mxu0 %v457
  %v459 = vand.u32 %v103, 4294901760
  %460 = vmatpush.xpose.msra.mxu0 %v459
  %v461 = vand.u32 %v100, 4294901760
  %462 = vmatpush.xpose.msra.mxu0 %v461
  %v463 = vand.u32 %v97, 4294901760
  %464 = vmatpush.xpose.msra.mxu0 %v463
  %v465 = vand.u32 %v94, 4294901760
  %466 = vmatpush.xpose.msra.mxu0 %v465
  %v467 = vand.u32 %v91, 4294901760
  %468 = vmatpush.xpose.msra.mxu0 %v467
  %v469 = vand.u32 %v88, 4294901760
  %470 = vmatpush.xpose.msra.mxu0 %v469
  %v471 = vand.u32 %v85, 4294901760
  %472 = vmatmul.f32.gmra.mxu0 %v471
  %v473 = vpop.f32.mrf.mxu0
  %v474 = vadd.f32 %v437, %v473
  %475 = vdwg.mxu0
  %v476 = vperm.slane %v474, 0
  %v477 = vadd.f32 %v64, %v476
  %v478 = vadd.f32 %v67, %v476
  %v480 = vsel %vm61, %v25, 0
  %v483 = vsel %vm61, %v26, 0
  %v486 = vsel %vm61, %v43, 0
  %v489 = vsel %vm61, %v44, 0
  %v492 = vsel %vm61, %v45, 0
  %v495 = vsel %vm61, %v46, 0
  %v498 = vsel %vm61, %v47, 0
  %v501 = vsel %vm61, %v48, 0
  %v504 = vsel %vm61, %v49, 0
  %v507 = vsel %vm61, %v50, 0
  %v510 = vsel %vm61, %v51, 0
  %v513 = vsel %vm61, %v52, 0
  %v516 = vsel %vm61, %v53, 0
  %v519 = vsel %vm61, %v54, 0
  %v522 = vsel %vm61, %v55, 0
  %v525 = vsel %vm61, %v56, 0
  %v528 = vsel %vm61, %v57, 0
  %v531 = vsel %vm61, %v58, 0
  %v533 = vand.u32 %v531, 4294901760
  %534 = vmatpush.xpose.msra.mxu0 %v533
  %v535 = vand.u32 %v528, 4294901760
  %536 = vmatpush.xpose.msra.mxu0 %v535
  %v537 = vand.u32 %v525, 4294901760
  %538 = vmatpush.xpose.msra.mxu0 %v537
  %v539 = vand.u32 %v522, 4294901760
  %540 = vmatpush.xpose.msra.mxu0 %v539
  %v541 = vand.u32 %v519, 4294901760
  %542 = vmatpush.xpose.msra.mxu0 %v541
  %v543 = vand.u32 %v516, 4294901760
  %544 = vmatpush.xpose.msra.mxu0 %v543
  %v545 = vand.u32 %v513, 4294901760
  %546 = vmatpush.xpose.msra.mxu0 %v545
  %v547 = vand.u32 %v510, 4294901760
  %548 = vmatpush.xpose.msra.mxu0 %v547
  %v549 = vand.u32 %v507, 4294901760
  %550 = vmatpush.xpose.msra.mxu0 %v549
  %v551 = vand.u32 %v504, 4294901760
  %552 = vmatpush.xpose.msra.mxu0 %v551
  %v553 = vand.u32 %v501, 4294901760
  %554 = vmatpush.xpose.msra.mxu0 %v553
  %v555 = vand.u32 %v498, 4294901760
  %556 = vmatpush.xpose.msra.mxu0 %v555
  %v557 = vand.u32 %v495, 4294901760
  %558 = vmatpush.xpose.msra.mxu0 %v557
  %v559 = vand.u32 %v492, 4294901760
  %560 = vmatpush.xpose.msra.mxu0 %v559
  %v561 = vand.u32 %v489, 4294901760
  %562 = vmatpush.xpose.msra.mxu0 %v561
  %v563 = vand.u32 %v486, 4294901760
  %564 = vmatpush.xpose.msra.mxu0 %v563
  %v565 = vand.u32 %v480, 4294901760
  %v566 = vsub.f32 %v480, %v565
  %v567 = vand.u32 %v566, 4294901760
  %v568 = vsub.f32 %v566, %v567
  %v569 = vand.u32 %v568, 4294901760
  %570 = vmatmul.f32.gmra.mxu0 %v569
  %v571 = vpop.f32.mrf.mxu0
  %v572 = vadd.f32 0.0, %v571
  %v573 = vand.u32 %v483, 4294901760
  %v574 = vsub.f32 %v483, %v573
  %v575 = vand.u32 %v574, 4294901760
  %v576 = vsub.f32 %v574, %v575
  %v577 = vand.u32 %v576, 4294901760
  %578 = vmatmul.f32.gmra.mxu0 %v577
  %v579 = vpop.f32.mrf.mxu0
  %v580 = vadd.f32 0.0, %v579
  %581 = vdwg.mxu0
  %v582 = vand.u32 %v531, 4294901760
  %v583 = vsub.f32 %v531, %v582
  %v584 = vand.u32 %v583, 4294901760
  %v585 = vsub.f32 %v583, %v584
  %v586 = vand.u32 %v585, 4294901760
  %587 = vmatpush.xpose.msra.mxu0 %v586
  %v588 = vand.u32 %v528, 4294901760
  %v589 = vsub.f32 %v528, %v588
  %v590 = vand.u32 %v589, 4294901760
  %v591 = vsub.f32 %v589, %v590
  %v592 = vand.u32 %v591, 4294901760
  %593 = vmatpush.xpose.msra.mxu0 %v592
  %v594 = vand.u32 %v525, 4294901760
  %v595 = vsub.f32 %v525, %v594
  %v596 = vand.u32 %v595, 4294901760
  %v597 = vsub.f32 %v595, %v596
  %v598 = vand.u32 %v597, 4294901760
  %599 = vmatpush.xpose.msra.mxu0 %v598
  %v600 = vand.u32 %v522, 4294901760
  %v601 = vsub.f32 %v522, %v600
  %v602 = vand.u32 %v601, 4294901760
  %v603 = vsub.f32 %v601, %v602
  %v604 = vand.u32 %v603, 4294901760
  %605 = vmatpush.xpose.msra.mxu0 %v604
  %v606 = vand.u32 %v519, 4294901760
  %v607 = vsub.f32 %v519, %v606
  %v608 = vand.u32 %v607, 4294901760
  %v609 = vsub.f32 %v607, %v608
  %v610 = vand.u32 %v609, 4294901760
  %611 = vmatpush.xpose.msra.mxu0 %v610
  %v612 = vand.u32 %v516, 4294901760
  %v613 = vsub.f32 %v516, %v612
  %v614 = vand.u32 %v613, 4294901760
  %v615 = vsub.f32 %v613, %v614
  %v616 = vand.u32 %v615, 4294901760
  %617 = vmatpush.xpose.msra.mxu0 %v616
  %v618 = vand.u32 %v513, 4294901760
  %v619 = vsub.f32 %v513, %v618
  %v620 = vand.u32 %v619, 4294901760
  %v621 = vsub.f32 %v619, %v620
  %v622 = vand.u32 %v621, 4294901760
  %623 = vmatpush.xpose.msra.mxu0 %v622
  %v624 = vand.u32 %v510, 4294901760
  %v625 = vsub.f32 %v510, %v624
  %v626 = vand.u32 %v625, 4294901760
  %v627 = vsub.f32 %v625, %v626
  %v628 = vand.u32 %v627, 4294901760
  %629 = vmatpush.xpose.msra.mxu0 %v628
  %v630 = vand.u32 %v507, 4294901760
  %v631 = vsub.f32 %v507, %v630
  %v632 = vand.u32 %v631, 4294901760
  %v633 = vsub.f32 %v631, %v632
  %v634 = vand.u32 %v633, 4294901760
  %635 = vmatpush.xpose.msra.mxu0 %v634
  %v636 = vand.u32 %v504, 4294901760
  %v637 = vsub.f32 %v504, %v636
  %v638 = vand.u32 %v637, 4294901760
  %v639 = vsub.f32 %v637, %v638
  %v640 = vand.u32 %v639, 4294901760
  %641 = vmatpush.xpose.msra.mxu0 %v640
  %v642 = vand.u32 %v501, 4294901760
  %v643 = vsub.f32 %v501, %v642
  %v644 = vand.u32 %v643, 4294901760
  %v645 = vsub.f32 %v643, %v644
  %v646 = vand.u32 %v645, 4294901760
  %647 = vmatpush.xpose.msra.mxu0 %v646
  %v648 = vand.u32 %v498, 4294901760
  %v649 = vsub.f32 %v498, %v648
  %v650 = vand.u32 %v649, 4294901760
  %v651 = vsub.f32 %v649, %v650
  %v652 = vand.u32 %v651, 4294901760
  %653 = vmatpush.xpose.msra.mxu0 %v652
  %v654 = vand.u32 %v495, 4294901760
  %v655 = vsub.f32 %v495, %v654
  %v656 = vand.u32 %v655, 4294901760
  %v657 = vsub.f32 %v655, %v656
  %v658 = vand.u32 %v657, 4294901760
  %659 = vmatpush.xpose.msra.mxu0 %v658
  %v660 = vand.u32 %v492, 4294901760
  %v661 = vsub.f32 %v492, %v660
  %v662 = vand.u32 %v661, 4294901760
  %v663 = vsub.f32 %v661, %v662
  %v664 = vand.u32 %v663, 4294901760
  %665 = vmatpush.xpose.msra.mxu0 %v664
  %v666 = vand.u32 %v489, 4294901760
  %v667 = vsub.f32 %v489, %v666
  %v668 = vand.u32 %v667, 4294901760
  %v669 = vsub.f32 %v667, %v668
  %v670 = vand.u32 %v669, 4294901760
  %671 = vmatpush.xpose.msra.mxu0 %v670
  %v672 = vand.u32 %v486, 4294901760
  %v673 = vsub.f32 %v486, %v672
  %v674 = vand.u32 %v673, 4294901760
  %v675 = vsub.f32 %v673, %v674
  %v676 = vand.u32 %v675, 4294901760
  %677 = vmatpush.xpose.msra.mxu0 %v676
  %v678 = vand.u32 %v480, 4294901760
  %679 = vmatmul.f32.gmra.mxu0 %v678
  %v680 = vpop.f32.mrf.mxu0
  %v681 = vadd.f32 %v572, %v680
  %v682 = vand.u32 %v483, 4294901760
  %683 = vmatmul.f32.gmra.mxu0 %v682
  %v684 = vpop.f32.mrf.mxu0
  %v685 = vadd.f32 %v580, %v684
  %686 = vdwg.mxu0
  %v687 = vand.u32 %v531, 4294901760
  %v688 = vsub.f32 %v531, %v687
  %689 = vmatpush.xpose.msra.mxu0 %v688
  %v690 = vand.u32 %v528, 4294901760
  %v691 = vsub.f32 %v528, %v690
  %692 = vmatpush.xpose.msra.mxu0 %v691
  %v693 = vand.u32 %v525, 4294901760
  %v694 = vsub.f32 %v525, %v693
  %695 = vmatpush.xpose.msra.mxu0 %v694
  %v696 = vand.u32 %v522, 4294901760
  %v697 = vsub.f32 %v522, %v696
  %698 = vmatpush.xpose.msra.mxu0 %v697
  %v699 = vand.u32 %v519, 4294901760
  %v700 = vsub.f32 %v519, %v699
  %701 = vmatpush.xpose.msra.mxu0 %v700
  %v702 = vand.u32 %v516, 4294901760
  %v703 = vsub.f32 %v516, %v702
  %704 = vmatpush.xpose.msra.mxu0 %v703
  %v705 = vand.u32 %v513, 4294901760
  %v706 = vsub.f32 %v513, %v705
  %707 = vmatpush.xpose.msra.mxu0 %v706
  %v708 = vand.u32 %v510, 4294901760
  %v709 = vsub.f32 %v510, %v708
  %710 = vmatpush.xpose.msra.mxu0 %v709
  %v711 = vand.u32 %v507, 4294901760
  %v712 = vsub.f32 %v507, %v711
  %713 = vmatpush.xpose.msra.mxu0 %v712
  %v714 = vand.u32 %v504, 4294901760
  %v715 = vsub.f32 %v504, %v714
  %716 = vmatpush.xpose.msra.mxu0 %v715
  %v717 = vand.u32 %v501, 4294901760
  %v718 = vsub.f32 %v501, %v717
  %719 = vmatpush.xpose.msra.mxu0 %v718
  %v720 = vand.u32 %v498, 4294901760
  %v721 = vsub.f32 %v498, %v720
  %722 = vmatpush.xpose.msra.mxu0 %v721
  %v723 = vand.u32 %v495, 4294901760
  %v724 = vsub.f32 %v495, %v723
  %725 = vmatpush.xpose.msra.mxu0 %v724
  %v726 = vand.u32 %v492, 4294901760
  %v727 = vsub.f32 %v492, %v726
  %728 = vmatpush.xpose.msra.mxu0 %v727
  %v729 = vand.u32 %v489, 4294901760
  %v730 = vsub.f32 %v489, %v729
  %731 = vmatpush.xpose.msra.mxu0 %v730
  %v732 = vand.u32 %v486, 4294901760
  %v733 = vsub.f32 %v486, %v732
  %734 = vmatpush.xpose.msra.mxu0 %v733
  %v735 = vand.u32 %v480, 4294901760
  %v736 = vsub.f32 %v480, %v735
  %737 = vmatmul.f32.gmra.mxu0 %v736
  %v738 = vpop.f32.mrf.mxu0
  %v739 = vadd.f32 %v681, %v738
  %v740 = vand.u32 %v483, 4294901760
  %v741 = vsub.f32 %v483, %v740
  %742 = vmatmul.f32.gmra.mxu0 %v741
  %v743 = vpop.f32.mrf.mxu0
  %v744 = vadd.f32 %v685, %v743
  %745 = vdwg.mxu0
  %v746 = vand.u32 %v531, 4294901760
  %747 = vmatpush.xpose.msra.mxu0 %v746
  %v748 = vand.u32 %v528, 4294901760
  %749 = vmatpush.xpose.msra.mxu0 %v748
  %v750 = vand.u32 %v525, 4294901760
  %751 = vmatpush.xpose.msra.mxu0 %v750
  %v752 = vand.u32 %v522, 4294901760
  %753 = vmatpush.xpose.msra.mxu0 %v752
  %v754 = vand.u32 %v519, 4294901760
  %755 = vmatpush.xpose.msra.mxu0 %v754
  %v756 = vand.u32 %v516, 4294901760
  %757 = vmatpush.xpose.msra.mxu0 %v756
  %v758 = vand.u32 %v513, 4294901760
  %759 = vmatpush.xpose.msra.mxu0 %v758
  %v760 = vand.u32 %v510, 4294901760
  %761 = vmatpush.xpose.msra.mxu0 %v760
  %v762 = vand.u32 %v507, 4294901760
  %763 = vmatpush.xpose.msra.mxu0 %v762
  %v764 = vand.u32 %v504, 4294901760
  %765 = vmatpush.xpose.msra.mxu0 %v764
  %v766 = vand.u32 %v501, 4294901760
  %767 = vmatpush.xpose.msra.mxu0 %v766
  %v768 = vand.u32 %v498, 4294901760
  %769 = vmatpush.xpose.msra.mxu0 %v768
  %v770 = vand.u32 %v495, 4294901760
  %771 = vmatpush.xpose.msra.mxu0 %v770
  %v772 = vand.u32 %v492, 4294901760
  %773 = vmatpush.xpose.msra.mxu0 %v772
  %v774 = vand.u32 %v489, 4294901760
  %775 = vmatpush.xpose.msra.mxu0 %v774
  %v776 = vand.u32 %v486, 4294901760
  %777 = vmatpush.xpose.msra.mxu0 %v776
  %v778 = vand.u32 %v480, 4294901760
  %v779 = vsub.f32 %v480, %v778
  %v780 = vand.u32 %v779, 4294901760
  %781 = vmatmul.f32.gmra.mxu0 %v780
  %v782 = vpop.f32.mrf.mxu0
  %v783 = vadd.f32 %v739, %v782
  %v784 = vand.u32 %v483, 4294901760
  %v785 = vsub.f32 %v483, %v784
  %v786 = vand.u32 %v785, 4294901760
  %787 = vmatmul.f32.gmra.mxu0 %v786
  %v788 = vpop.f32.mrf.mxu0
  %v789 = vadd.f32 %v744, %v788
  %790 = vdwg.mxu0
  %v791 = vand.u32 %v531, 4294901760
  %v792 = vsub.f32 %v531, %v791
  %v793 = vand.u32 %v792, 4294901760
  %794 = vmatpush.xpose.msra.mxu0 %v793
  %v795 = vand.u32 %v528, 4294901760
  %v796 = vsub.f32 %v528, %v795
  %v797 = vand.u32 %v796, 4294901760
  %798 = vmatpush.xpose.msra.mxu0 %v797
  %v799 = vand.u32 %v525, 4294901760
  %v800 = vsub.f32 %v525, %v799
  %v801 = vand.u32 %v800, 4294901760
  %802 = vmatpush.xpose.msra.mxu0 %v801
  %v803 = vand.u32 %v522, 4294901760
  %v804 = vsub.f32 %v522, %v803
  %v805 = vand.u32 %v804, 4294901760
  %806 = vmatpush.xpose.msra.mxu0 %v805
  %v807 = vand.u32 %v519, 4294901760
  %v808 = vsub.f32 %v519, %v807
  %v809 = vand.u32 %v808, 4294901760
  %810 = vmatpush.xpose.msra.mxu0 %v809
  %v811 = vand.u32 %v516, 4294901760
  %v812 = vsub.f32 %v516, %v811
  %v813 = vand.u32 %v812, 4294901760
  %814 = vmatpush.xpose.msra.mxu0 %v813
  %v815 = vand.u32 %v513, 4294901760
  %v816 = vsub.f32 %v513, %v815
  %v817 = vand.u32 %v816, 4294901760
  %818 = vmatpush.xpose.msra.mxu0 %v817
  %v819 = vand.u32 %v510, 4294901760
  %v820 = vsub.f32 %v510, %v819
  %v821 = vand.u32 %v820, 4294901760
  %822 = vmatpush.xpose.msra.mxu0 %v821
  %v823 = vand.u32 %v507, 4294901760
  %v824 = vsub.f32 %v507, %v823
  %v825 = vand.u32 %v824, 4294901760
  %826 = vmatpush.xpose.msra.mxu0 %v825
  %v827 = vand.u32 %v504, 4294901760
  %v828 = vsub.f32 %v504, %v827
  %v829 = vand.u32 %v828, 4294901760
  %830 = vmatpush.xpose.msra.mxu0 %v829
  %v831 = vand.u32 %v501, 4294901760
  %v832 = vsub.f32 %v501, %v831
  %v833 = vand.u32 %v832, 4294901760
  %834 = vmatpush.xpose.msra.mxu0 %v833
  %v835 = vand.u32 %v498, 4294901760
  %v836 = vsub.f32 %v498, %v835
  %v837 = vand.u32 %v836, 4294901760
  %838 = vmatpush.xpose.msra.mxu0 %v837
  %v839 = vand.u32 %v495, 4294901760
  %v840 = vsub.f32 %v495, %v839
  %v841 = vand.u32 %v840, 4294901760
  %842 = vmatpush.xpose.msra.mxu0 %v841
  %v843 = vand.u32 %v492, 4294901760
  %v844 = vsub.f32 %v492, %v843
  %v845 = vand.u32 %v844, 4294901760
  %846 = vmatpush.xpose.msra.mxu0 %v845
  %v847 = vand.u32 %v489, 4294901760
  %v848 = vsub.f32 %v489, %v847
  %v849 = vand.u32 %v848, 4294901760
  %850 = vmatpush.xpose.msra.mxu0 %v849
  %v851 = vand.u32 %v486, 4294901760
  %v852 = vsub.f32 %v486, %v851
  %v853 = vand.u32 %v852, 4294901760
  %854 = vmatpush.xpose.msra.mxu0 %v853
  %v855 = vand.u32 %v480, 4294901760
  %856 = vmatmul.f32.gmra.mxu0 %v855
  %v857 = vpop.f32.mrf.mxu0
  %v858 = vadd.f32 %v783, %v857
  %v859 = vand.u32 %v483, 4294901760
  %860 = vmatmul.f32.gmra.mxu0 %v859
  %v861 = vpop.f32.mrf.mxu0
  %v862 = vadd.f32 %v789, %v861
  %863 = vdwg.mxu0
  %v864 = vand.u32 %v531, 4294901760
  %865 = vmatpush.xpose.msra.mxu0 %v864
  %v866 = vand.u32 %v528, 4294901760
  %867 = vmatpush.xpose.msra.mxu0 %v866
  %v868 = vand.u32 %v525, 4294901760
  %869 = vmatpush.xpose.msra.mxu0 %v868
  %v870 = vand.u32 %v522, 4294901760
  %871 = vmatpush.xpose.msra.mxu0 %v870
  %v872 = vand.u32 %v519, 4294901760
  %873 = vmatpush.xpose.msra.mxu0 %v872
  %v874 = vand.u32 %v516, 4294901760
  %875 = vmatpush.xpose.msra.mxu0 %v874
  %v876 = vand.u32 %v513, 4294901760
  %877 = vmatpush.xpose.msra.mxu0 %v876
  %v878 = vand.u32 %v510, 4294901760
  %879 = vmatpush.xpose.msra.mxu0 %v878
  %v880 = vand.u32 %v507, 4294901760
  %881 = vmatpush.xpose.msra.mxu0 %v880
  %v882 = vand.u32 %v504, 4294901760
  %883 = vmatpush.xpose.msra.mxu0 %v882
  %v884 = vand.u32 %v501, 4294901760
  %885 = vmatpush.xpose.msra.mxu0 %v884
  %v886 = vand.u32 %v498, 4294901760
  %887 = vmatpush.xpose.msra.mxu0 %v886
  %v888 = vand.u32 %v495, 4294901760
  %889 = vmatpush.xpose.msra.mxu0 %v888
  %v890 = vand.u32 %v492, 4294901760
  %891 = vmatpush.xpose.msra.mxu0 %v890
  %v892 = vand.u32 %v489, 4294901760
  %893 = vmatpush.xpose.msra.mxu0 %v892
  %v894 = vand.u32 %v486, 4294901760
  %895 = vmatpush.xpose.msra.mxu0 %v894
  %v896 = vand.u32 %v480, 4294901760
  %897 = vmatmul.f32.gmra.mxu0 %v896
  %v898 = vpop.f32.mrf.mxu0
  %v899 = vadd.f32 %v858, %v898
  %v900 = vand.u32 %v483, 4294901760
  %901 = vmatmul.f32.gmra.mxu0 %v900
  %v902 = vpop.f32.mrf.mxu0
  %v903 = vadd.f32 %v862, %v902
  %904 = vdwg.mxu0
  %v905 = vmul.f32 %v899, 2.0
  %v906 = vmul.f32 %v903, 2.0
  %v907 = vsub.f32 %v477, %v905
  %v908 = vsub.f32 %v478, %v906
  %v909 = vmax.f32 %v907, 0.0
  %v910 = vmax.f32 %v908, 0.0
  %v911 = vsub.f32 0.0, %v909
  %v912 = vsub.f32 0.0, %v910
  %v913 = vmul.f32 %v911, 1.442695
  %v914 = vpow.pop %v913
  %v915 = vmul.f32 %v912, 1.442695
  %v916 = vpow.pop %v915
  %v917 = vstv %s20
  %v918 = vmul.f32 %v917, %v914
  %v919 = vmul.f32 %v917, %v916
  %920 = vst [vmem:[%s3] sm:$0xff] %v918
  %921 = vst [vmem:[%s3 + $0x8] sm:$0xff] %v919
  // Predicated region
  $region10: #{svgp_forward.5} parent=0 // pred_check
    _
  $region11: #{svgp_forward.5} parent=0 // pred_check_branch
    %923 = sbr.rel (0) target = $region13
  $region12: #{svgp_forward.5} parent=0 // pred_region
    _
  $region13: #{svgp_forward.5} parent=0 // pred_fallthru
    _
  // Predicated region
  $region14: #{svgp_forward.5} parent=0 // pred_check
    _
  $region15: #{svgp_forward.5} parent=0 // pred_check_branch
    %925 = sbr.rel (0) target = $region17
  $region16: #{svgp_forward.5} parent=0 // pred_region
    _
  $region17: #{svgp_forward.5} parent=0 // pred_fallthru
    _

// kernel: svgp_forward.4
$region0: #{svgp_forward.4}
  #allocation0 [shape = 'u32[]', space=smem, size = 0x4, offset = 0x4, fixed_abs, tag = 'smem constant byte address 0x4 - core index']
  #allocation1 [shape = 'u32[72,128]{1,0:T(1,128)}', space=vmem, size = 0x9000, scoped, tag = 'internal scratch']
  #allocation2 [shape = 's32[1]{0}', space=sflag, size = 0x4, scoped, tag = 'scoped memory for svgp_forward.4']
  #allocation3 [shape = 'u8[512]{0}', space=smem, size = 0x200, scoped, tag = 'prefetched SMEM operand 0']
  %s0 = inlined_call_operand.vmem [shape: f32[4], index: 0, kind: input, shape index: {}]
  %s1 = inlined_call_operand.vmem [shape: f32[16,4], index: 1, kind: input, shape index: {}]
  %s2 = inlined_call_operand.vmem [shape: f32[128,4], index: 2, kind: input, shape index: {}]
  %s3 = inlined_call_operand.vmem [shape: f32[128,1], index: 3, kind: input, shape index: {}]
  %s4 = inlined_call_operand.vmem [shape: f32[16,16], index: 4, kind: output, shape index: {0}]
  %s5 = inlined_call_operand.vmem [shape: f32[16,16], index: 5, kind: output, shape index: {1}]
  %s6 = inlined_call_operand.vmem [shape: f32[16,1], index: 6, kind: output, shape index: {2}]
  %7 = xla_tuple %s4, %s5, %s6
  %s8 = sld [smem:[#allocation0]]
  $region46: #{svgp_forward.4} parent=0
    _
  %s10 = ssub.s32 1, %s8
  %s11 = scalar_select 0, %s10, %s8
  %s13 = sshll.u32 %s0, 4
  %s14 = int_to_ptr.vmem [resolvable:$true] %s13
  %16 = dma.vmem_to_smem %s14, 16, [#allocation3], [#allocation2]
  %18 = dma.done [#allocation2], 16
  %19 = sfence
  // Predicated region
  $region2: #{svgp_forward.4} parent=0 // pred_check
    _
  $region3: #{svgp_forward.4} parent=0 // pred_check_branch
    %21 = sbr.rel (0) target = $region5
  $region4: #{svgp_forward.4} parent=0 // pred_region
    _
  $region5: #{svgp_forward.4} parent=0 // pred_fallthru
    _
  // Predicated region
  $region6: #{svgp_forward.4} parent=0 // pred_check
    _
  $region7: #{svgp_forward.4} parent=0 // pred_check_branch
    %23 = sbr.rel (0) target = $region9
  $region8: #{svgp_forward.4} parent=0 // pred_region
    _
  $region9: #{svgp_forward.4} parent=0 // pred_fallthru
    _
  // Predicated region
  $region10: #{svgp_forward.4} parent=0 // pred_check
    _
  $region11: #{svgp_forward.4} parent=0 // pred_check_branch
    %25 = sbr.rel (0) target = $region13
  $region12: #{svgp_forward.4} parent=0 // pred_region
    _
  $region13: #{svgp_forward.4} parent=0 // pred_fallthru
    _
  %s26 = sld [smem:[#allocation3]]
  %s27 = sld [smem:[#allocation3 + $0x1]]
  %s28 = sld [smem:[#allocation3 + $0x2]]
  %v29 = vld [vmem:[%s1] sm:$0xff]
  %v30 = vld [vmem:[%s1 + $0x8] sm:$0xff]
  %v31 = vstv %s27
  %v32 = vmul.f32 %v29, %v31
  %v33 = vmul.f32 %v30, %v31
  %v34 = vld [vmem:[%s2] sm:$0xff]
  %v35 = vld [vmem:[%s2 + $0x8] sm:$0xff]
  %v36 = vld [vmem:[%s2 + $0x10] sm:$0xff]
  %v37 = vld [vmem:[%s2 + $0x18] sm:$0xff]
  %v38 = vld [vmem:[%s2 + $0x20] sm:$0xff]
  %v39 = vld [vmem:[%s2 + $0x28] sm:$0xff]
  %v40 = vld [vmem:[%s2 + $0x30] sm:$0xff]
  %v41 = vld [vmem:[%s2 + $0x38] sm:$0xff]
  %v42 = vld [vmem:[%s2 + $0x40] sm:$0xff]
  %v43 = vld [vmem:[%s2 + $0x48] sm:$0xff]
  %v44 = vld [vmem:[%s2 + $0x50] sm:$0xff]
  %v45 = vld [vmem:[%s2 + $0x58] sm:$0xff]
  %v46 = vld [vmem:[%s2 + $0x60] sm:$0xff]
  %v47 = vld [vmem:[%s2 + $0x68] sm:$0xff]
  %v48 = vld [vmem:[%s2 + $0x70] sm:$0xff]
  %v49 = vld [vmem:[%s2 + $0x78] sm:$0xff]
  %v50 = vmul.f32 %v34, %v31
  %v51 = vmul.f32 %v35, %v31
  %v52 = vmul.f32 %v36, %v31
  %v53 = vmul.f32 %v37, %v31
  %v54 = vmul.f32 %v38, %v31
  %v55 = vmul.f32 %v39, %v31
  %v56 = vmul.f32 %v40, %v31
  %v57 = vmul.f32 %v41, %v31
  %v58 = vmul.f32 %v42, %v31
  %v59 = vmul.f32 %v43, %v31
  %v60 = vmul.f32 %v44, %v31
  %v61 = vmul.f32 %v45, %v31
  %v62 = vmul.f32 %v46, %v31
  %v63 = vmul.f32 %v47, %v31
  %v64 = vmul.f32 %v48, %v31
  %v65 = vmul.f32 %v49, %v31
  %v66 = vmul.f32 %v32, %v32
  %v67 = vmul.f32 %v33, %v33
  %vm68 = vcmask 31744
  %v69 = vsel %vm68, %v66, 0.0
  %70 = vadd.xlane.f32.xlu0 %v69
  %v71 = vpop.xlane.xlu0 %70
  %v72 = vsel %vm68, %v67, 0.0
  %73 = vadd.xlane.f32.xlu0 %v72
  %v74 = vpop.xlane.xlu0 %73
  %v75 = vmul.f32 %v50, %v50
  %v76 = vmul.f32 %v51, %v51
  %v77 = vmul.f32 %v52, %v52
  %v78 = vmul.f32 %v53, %v53
  %v79 = vmul.f32 %v54, %v54
  %v80 = vmul.f32 %v55, %v55
  %v81 = vmul.f32 %v56, %v56
  %v82 = vmul.f32 %v57, %v57
  %v83 = vmul.f32 %v58, %v58
  %v84 = vmul.f32 %v59, %v59
  %v85 = vmul.f32 %v60, %v60
  %v86 = vmul.f32 %v61, %v61
  %v87 = vmul.f32 %v62, %v62
  %v88 = vmul.f32 %v63, %v63
  %v89 = vmul.f32 %v64, %v64
  %v90 = vmul.f32 %v65, %v65
  %v92 = vsel %vm68, 1.0, 0
  %v95 = vsel %vm68, %v75, 0
  %v98 = vsel %vm68, %v76, 0
  %v101 = vsel %vm68, %v77, 0
  %v104 = vsel %vm68, %v78, 0
  %v107 = vsel %vm68, %v79, 0
  %v110 = vsel %vm68, %v80, 0
  %v113 = vsel %vm68, %v81, 0
  %v116 = vsel %vm68, %v82, 0
  %v119 = vsel %vm68, %v83, 0
  %v122 = vsel %vm68, %v84, 0
  %v125 = vsel %vm68, %v85, 0
  %v128 = vsel %vm68, %v86, 0
  %v131 = vsel %vm68, %v87, 0
  %v134 = vsel %vm68, %v88, 0
  %v137 = vsel %vm68, %v89, 0
  %v140 = vsel %vm68, %v90, 0
  %v142 = vand.u32 %v140, 4294901760
  %143 = vmatpush.xpose.msra.mxu0 %v142
  %v144 = vand.u32 %v137, 4294901760
  %145 = vmatpush.xpose.msra.mxu0 %v144
  %v146 = vand.u32 %v134, 4294901760
  %147 = vmatpush.xpose.msra.mxu0 %v146
  %v148 = vand.u32 %v131, 4294901760
  %149 = vmatpush.xpose.msra.mxu0 %v148
  %v150 = vand.u32 %v128, 4294901760
  %151 = vmatpush.xpose.msra.mxu0 %v150
  %v152 = vand.u32 %v125, 4294901760
  %153 = vmatpush.xpose.msra.mxu0 %v152
  %v154 = vand.u32 %v122, 4294901760
  %155 = vmatpush.xpose.msra.mxu0 %v154
  %v156 = vand.u32 %v119, 4294901760
  %157 = vmatpush.xpose.msra.mxu0 %v156
  %v158 = vand.u32 %v116, 4294901760
  %159 = vmatpush.xpose.msra.mxu0 %v158
  %v160 = vand.u32 %v113, 4294901760
  %161 = vmatpush.xpose.msra.mxu0 %v160
  %v162 = vand.u32 %v110, 4294901760
  %163 = vmatpush.xpose.msra.mxu0 %v162
  %v164 = vand.u32 %v107, 4294901760
  %165 = vmatpush.xpose.msra.mxu0 %v164
  %v166 = vand.u32 %v104, 4294901760
  %167 = vmatpush.xpose.msra.mxu0 %v166
  %v168 = vand.u32 %v101, 4294901760
  %169 = vmatpush.xpose.msra.mxu0 %v168
  %v170 = vand.u32 %v98, 4294901760
  %171 = vmatpush.xpose.msra.mxu0 %v170
  %v172 = vand.u32 %v95, 4294901760
  %173 = vmatpush.xpose.msra.mxu0 %v172
  %v174 = vand.u32 %v92, 4294901760
  %v175 = vsub.f32 %v92, %v174
  %v176 = vand.u32 %v175, 4294901760
  %v177 = vsub.f32 %v175, %v176
  %v178 = vand.u32 %v177, 4294901760
  %179 = vmatmul.f32.gmra.mxu0 %v178
  %v180 = vpop.f32.mrf.mxu0
  %v181 = vadd.f32 0.0, %v180
  %182 = vdwg.mxu0
  %v183 = vand.u32 %v140, 4294901760
  %v184 = vsub.f32 %v140, %v183
  %v185 = vand.u32 %v184, 4294901760
  %v186 = vsub.f32 %v184, %v185
  %v187 = vand.u32 %v186, 4294901760
  %188 = vmatpush.xpose.msra.mxu0 %v187
  %v189 = vand.u32 %v137, 4294901760
  %v190 = vsub.f32 %v137, %v189
  %v191 = vand.u32 %v190, 4294901760
  %v192 = vsub.f32 %v190, %v191
  %v193 = vand.u32 %v192, 4294901760
  %194 = vmatpush.xpose.msra.mxu0 %v193
  %v195 = vand.u32 %v134, 4294901760
  %v196 = vsub.f32 %v134, %v195
  %v197 = vand.u32 %v196, 4294901760
  %v198 = vsub.f32 %v196, %v197
  %v199 = vand.u32 %v198, 4294901760
  %200 = vmatpush.xpose.msra.mxu0 %v199
  %v201 = vand.u32 %v131, 4294901760
  %v202 = vsub.f32 %v131, %v201
  %v203 = vand.u32 %v202, 4294901760
  %v204 = vsub.f32 %v202, %v203
  %v205 = vand.u32 %v204, 4294901760
  %206 = vmatpush.xpose.msra.mxu0 %v205
  %v207 = vand.u32 %v128, 4294901760
  %v208 = vsub.f32 %v128, %v207
  %v209 = vand.u32 %v208, 4294901760
  %v210 = vsub.f32 %v208, %v209
  %v211 = vand.u32 %v210, 4294901760
  %212 = vmatpush.xpose.msra.mxu0 %v211
  %v213 = vand.u32 %v125, 4294901760
  %v214 = vsub.f32 %v125, %v213
  %v215 = vand.u32 %v214, 4294901760
  %v216 = vsub.f32 %v214, %v215
  %v217 = vand.u32 %v216, 4294901760
  %218 = vmatpush.xpose.msra.mxu0 %v217
  %v219 = vand.u32 %v122, 4294901760
  %v220 = vsub.f32 %v122, %v219
  %v221 = vand.u32 %v220, 4294901760
  %v222 = vsub.f32 %v220, %v221
  %v223 = vand.u32 %v222, 4294901760
  %224 = vmatpush.xpose.msra.mxu0 %v223
  %v225 = vand.u32 %v119, 4294901760
  %v226 = vsub.f32 %v119, %v225
  %v227 = vand.u32 %v226, 4294901760
  %v228 = vsub.f32 %v226, %v227
  %v229 = vand.u32 %v228, 4294901760
  %230 = vmatpush.xpose.msra.mxu0 %v229
  %v231 = vand.u32 %v116, 4294901760
  %v232 = vsub.f32 %v116, %v231
  %v233 = vand.u32 %v232, 4294901760
  %v234 = vsub.f32 %v232, %v233
  %v235 = vand.u32 %v234, 4294901760
  %236 = vmatpush.xpose.msra.mxu0 %v235
  %v237 = vand.u32 %v113, 4294901760
  %v238 = vsub.f32 %v113, %v237
  %v239 = vand.u32 %v238, 4294901760
  %v240 = vsub.f32 %v238, %v239
  %v241 = vand.u32 %v240, 4294901760
  %242 = vmatpush.xpose.msra.mxu0 %v241
  %v243 = vand.u32 %v110, 4294901760
  %v244 = vsub.f32 %v110, %v243
  %v245 = vand.u32 %v244, 4294901760
  %v246 = vsub.f32 %v244, %v245
  %v247 = vand.u32 %v246, 4294901760
  %248 = vmatpush.xpose.msra.mxu0 %v247
  %v249 = vand.u32 %v107, 4294901760
  %v250 = vsub.f32 %v107, %v249
  %v251 = vand.u32 %v250, 4294901760
  %v252 = vsub.f32 %v250, %v251
  %v253 = vand.u32 %v252, 4294901760
  %254 = vmatpush.xpose.msra.mxu0 %v253
  %v255 = vand.u32 %v104, 4294901760
  %v256 = vsub.f32 %v104, %v255
  %v257 = vand.u32 %v256, 4294901760
  %v258 = vsub.f32 %v256, %v257
  %v259 = vand.u32 %v258, 4294901760
  %260 = vmatpush.xpose.msra.mxu0 %v259
  %v261 = vand.u32 %v101, 4294901760
  %v262 = vsub.f32 %v101, %v261
  %v263 = vand.u32 %v262, 4294901760
  %v264 = vsub.f32 %v262, %v263
  %v265 = vand.u32 %v264, 4294901760
  %266 = vmatpush.xpose.msra.mxu0 %v265
  %v267 = vand.u32 %v98, 4294901760
  %v268 = vsub.f32 %v98, %v267
  %v269 = vand.u32 %v268, 4294901760
  %v270 = vsub.f32 %v268, %v269
  %v271 = vand.u32 %v270, 4294901760
  %272 = vmatpush.xpose.msra.mxu0 %v271
  %v273 = vand.u32 %v95, 4294901760
  %v274 = vsub.f32 %v95, %v273
  %v275 = vand.u32 %v274, 4294901760
  %v276 = vsub.f32 %v274, %v275
  %v277 = vand.u32 %v276, 4294901760
  %278 = vmatpush.xpose.msra.mxu0 %v277
  %v279 = vand.u32 %v92, 4294901760
  %280 = vmatmul.f32.gmra.mxu0 %v279
  %v281 = vpop.f32.mrf.mxu0
  %v282 = vadd.f32 %v181, %v281
  %283 = vdwg.mxu0
  %v284 = vand.u32 %v140, 4294901760
  %v285 = vsub.f32 %v140, %v284
  %286 = vmatpush.xpose.msra.mxu0 %v285
  %v287 = vand.u32 %v137, 4294901760
  %v288 = vsub.f32 %v137, %v287
  %289 = vmatpush.xpose.msra.mxu0 %v288
  %v290 = vand.u32 %v134, 4294901760
  %v291 = vsub.f32 %v134, %v290
  %292 = vmatpush.xpose.msra.mxu0 %v291
  %v293 = vand.u32 %v131, 4294901760
  %v294 = vsub.f32 %v131, %v293
  %295 = vmatpush.xpose.msra.mxu0 %v294
  %v296 = vand.u32 %v128, 4294901760
  %v297 = vsub.f32 %v128, %v296
  %298 = vmatpush.xpose.msra.mxu0 %v297
  %v299 = vand.u32 %v125, 4294901760
  %v300 = vsub.f32 %v125, %v299
  %301 = vmatpush.xpose.msra.mxu0 %v300
  %v302 = vand.u32 %v122, 4294901760
  %v303 = vsub.f32 %v122, %v302
  %304 = vmatpush.xpose.msra.mxu0 %v303
  %v305 = vand.u32 %v119, 4294901760
  %v306 = vsub.f32 %v119, %v305
  %307 = vmatpush.xpose.msra.mxu0 %v306
  %v308 = vand.u32 %v116, 4294901760
  %v309 = vsub.f32 %v116, %v308
  %310 = vmatpush.xpose.msra.mxu0 %v309
  %v311 = vand.u32 %v113, 4294901760
  %v312 = vsub.f32 %v113, %v311
  %313 = vmatpush.xpose.msra.mxu0 %v312
  %v314 = vand.u32 %v110, 4294901760
  %v315 = vsub.f32 %v110, %v314
  %316 = vmatpush.xpose.msra.mxu0 %v315
  %v317 = vand.u32 %v107, 4294901760
  %v318 = vsub.f32 %v107, %v317
  %319 = vmatpush.xpose.msra.mxu0 %v318
  %v320 = vand.u32 %v104, 4294901760
  %v321 = vsub.f32 %v104, %v320
  %322 = vmatpush.xpose.msra.mxu0 %v321
  %v323 = vand.u32 %v101, 4294901760
  %v324 = vsub.f32 %v101, %v323
  %325 = vmatpush.xpose.msra.mxu0 %v324
  %v326 = vand.u32 %v98, 4294901760
  %v327 = vsub.f32 %v98, %v326
  %328 = vmatpush.xpose.msra.mxu0 %v327
  %v329 = vand.u32 %v95, 4294901760
  %v330 = vsub.f32 %v95, %v329
  %331 = vmatpush.xpose.msra.mxu0 %v330
  %v332 = vand.u32 %v92, 4294901760
  %v333 = vsub.f32 %v92, %v332
  %334 = vmatmul.f32.gmra.mxu0 %v333
  %v335 = vpop.f32.mrf.mxu0
  %v336 = vadd.f32 %v282, %v335
  %337 = vdwg.mxu0
  %v338 = vand.u32 %v140, 4294901760
  %339 = vmatpush.xpose.msra.mxu0 %v338
  %v340 = vand.u32 %v137, 4294901760
  %341 = vmatpush.xpose.msra.mxu0 %v340
  %v342 = vand.u32 %v134, 4294901760
  %343 = vmatpush.xpose.msra.mxu0 %v342
  %v344 = vand.u32 %v131, 4294901760
  %345 = vmatpush.xpose.msra.mxu0 %v344
  %v346 = vand.u32 %v128, 4294901760
  %347 = vmatpush.xpose.msra.mxu0 %v346
  %v348 = vand.u32 %v125, 4294901760
  %349 = vmatpush.xpose.msra.mxu0 %v348
  %v350 = vand.u32 %v122, 4294901760
  %351 = vmatpush.xpose.msra.mxu0 %v350
  %v352 = vand.u32 %v119, 4294901760
  %353 = vmatpush.xpose.msra.mxu0 %v352
  %v354 = vand.u32 %v116, 4294901760
  %355 = vmatpush.xpose.msra.mxu0 %v354
  %v356 = vand.u32 %v113, 4294901760
  %357 = vmatpush.xpose.msra.mxu0 %v356
  %v358 = vand.u32 %v110, 4294901760
  %359 = vmatpush.xpose.msra.mxu0 %v358
  %v360 = vand.u32 %v107, 4294901760
  %361 = vmatpush.xpose.msra.mxu0 %v360
  %v362 = vand.u32 %v104, 4294901760
  %363 = vmatpush.xpose.msra.mxu0 %v362
  %v364 = vand.u32 %v101, 4294901760
  %365 = vmatpush.xpose.msra.mxu0 %v364
  %v366 = vand.u32 %v98, 4294901760
  %367 = vmatpush.xpose.msra.mxu0 %v366
  %v368 = vand.u32 %v95, 4294901760
  %369 = vmatpush.xpose.msra.mxu0 %v368
  %v370 = vand.u32 %v92, 4294901760
  %v371 = vsub.f32 %v92, %v370
  %v372 = vand.u32 %v371, 4294901760
  %373 = vmatmul.f32.gmra.mxu0 %v372
  %v374 = vpop.f32.mrf.mxu0
  %v375 = vadd.f32 %v336, %v374
  %376 = vdwg.mxu0
  %v377 = vand.u32 %v140, 4294901760
  %v378 = vsub.f32 %v140, %v377
  %v379 = vand.u32 %v378, 4294901760
  %380 = vmatpush.xpose.msra.mxu0 %v379
  %v381 = vand.u32 %v137, 4294901760
  %v382 = vsub.f32 %v137, %v381
  %v383 = vand.u32 %v382, 4294901760
  %384 = vmatpush.xpose.msra.mxu0 %v383
  %v385 = vand.u32 %v134, 4294901760
  %v386 = vsub.f32 %v134, %v385
  %v387 = vand.u32 %v386, 4294901760
  %388 = vmatpush.xpose.msra.mxu0 %v387
  %v389 = vand.u32 %v131, 4294901760
  %v390 = vsub.f32 %v131, %v389
  %v391 = vand.u32 %v390, 4294901760
  %392 = vmatpush.xpose.msra.mxu0 %v391
  %v393 = vand.u32 %v128, 4294901760
  %v394 = vsub.f32 %v128, %v393
  %v395 = vand.u32 %v394, 4294901760
  %396 = vmatpush.xpose.msra.mxu0 %v395
  %v397 = vand.u32 %v125, 4294901760
  %v398 = vsub.f32 %v125, %v397
  %v399 = vand.u32 %v398, 4294901760
  %400 = vmatpush.xpose.msra.mxu0 %v399
  %v401 = vand.u32 %v122, 4294901760
  %v402 = vsub.f32 %v122, %v401
  %v403 = vand.u32 %v402, 4294901760
  %404 = vmatpush.xpose.msra.mxu0 %v403
  %v405 = vand.u32 %v119, 4294901760
  %v406 = vsub.f32 %v119, %v405
  %v407 = vand.u32 %v406, 4294901760
  %408 = vmatpush.xpose.msra.mxu0 %v407
  %v409 = vand.u32 %v116, 4294901760
  %v410 = vsub.f32 %v116, %v409
  %v411 = vand.u32 %v410, 4294901760
  %412 = vmatpush.xpose.msra.mxu0 %v411
  %v413 = vand.u32 %v113, 4294901760
  %v414 = vsub.f32 %v113, %v413
  %v415 = vand.u32 %v414, 4294901760
  %416 = vmatpush.xpose.msra.mxu0 %v415
  %v417 = vand.u32 %v110, 4294901760
  %v418 = vsub.f32 %v110, %v417
  %v419 = vand.u32 %v418, 4294901760
  %420 = vmatpush.xpose.msra.mxu0 %v419
  %v421 = vand.u32 %v107, 4294901760
  %v422 = vsub.f32 %v107, %v421
  %v423 = vand.u32 %v422, 4294901760
  %424 = vmatpush.xpose.msra.mxu0 %v423
  %v425 = vand.u32 %v104, 4294901760
  %v426 = vsub.f32 %v104, %v425
  %v427 = vand.u32 %v426, 4294901760
  %428 = vmatpush.xpose.msra.mxu0 %v427
  %v429 = vand.u32 %v101, 4294901760
  %v430 = vsub.f32 %v101, %v429
  %v431 = vand.u32 %v430, 4294901760
  %432 = vmatpush.xpose.msra.mxu0 %v431
  %v433 = vand.u32 %v98, 4294901760
  %v434 = vsub.f32 %v98, %v433
  %v435 = vand.u32 %v434, 4294901760
  %436 = vmatpush.xpose.msra.mxu0 %v435
  %v437 = vand.u32 %v95, 4294901760
  %v438 = vsub.f32 %v95, %v437
  %v439 = vand.u32 %v438, 4294901760
  %440 = vmatpush.xpose.msra.mxu0 %v439
  %v441 = vand.u32 %v92, 4294901760
  %442 = vmatmul.f32.gmra.mxu0 %v441
  %v443 = vpop.f32.mrf.mxu0
  %v444 = vadd.f32 %v375, %v443
  %445 = vdwg.mxu0
  %v446 = vand.u32 %v140, 4294901760
  %447 = vmatpush.xpose.msra.mxu0 %v446
  %v448 = vand.u32 %v137, 4294901760
  %449 = vmatpush.xpose.msra.mxu0 %v448
  %v450 = vand.u32 %v134, 4294901760
  %451 = vmatpush.xpose.msra.mxu0 %v450
  %v452 = vand.u32 %v131, 4294901760
  %453 = vmatpush.xpose.msra.mxu0 %v452
  %v454 = vand.u32 %v128, 4294901760
  %455 = vmatpush.xpose.msra.mxu0 %v454
  %v456 = vand.u32 %v125, 4294901760
  %457 = vmatpush.xpose.msra.mxu0 %v456
  %v458 = vand.u32 %v122, 4294901760
  %459 = vmatpush.xpose.msra.mxu0 %v458
  %v460 = vand.u32 %v119, 4294901760
  %461 = vmatpush.xpose.msra.mxu0 %v460
  %v462 = vand.u32 %v116, 4294901760
  %463 = vmatpush.xpose.msra.mxu0 %v462
  %v464 = vand.u32 %v113, 4294901760
  %465 = vmatpush.xpose.msra.mxu0 %v464
  %v466 = vand.u32 %v110, 4294901760
  %467 = vmatpush.xpose.msra.mxu0 %v466
  %v468 = vand.u32 %v107, 4294901760
  %469 = vmatpush.xpose.msra.mxu0 %v468
  %v470 = vand.u32 %v104, 4294901760
  %471 = vmatpush.xpose.msra.mxu0 %v470
  %v472 = vand.u32 %v101, 4294901760
  %473 = vmatpush.xpose.msra.mxu0 %v472
  %v474 = vand.u32 %v98, 4294901760
  %475 = vmatpush.xpose.msra.mxu0 %v474
  %v476 = vand.u32 %v95, 4294901760
  %477 = vmatpush.xpose.msra.mxu0 %v476
  %v478 = vand.u32 %v92, 4294901760
  %479 = vmatmul.f32.gmra.mxu0 %v478
  %v480 = vpop.f32.mrf.mxu0
  %v481 = vadd.f32 %v444, %v480
  %482 = vdwg.mxu0
  %v483 = vperm.slane %v481, 0
  %v484 = vadd.f32 %v71, %v483
  %v485 = vadd.f32 %v74, %v483
  %v487 = vsel %vm68, %v32, 0
  %v490 = vsel %vm68, %v33, 0
  %v493 = vsel %vm68, %v50, 0
  %v496 = vsel %vm68, %v51, 0
  %v499 = vsel %vm68, %v52, 0
  %v502 = vsel %vm68, %v53, 0
  %v505 = vsel %vm68, %v54, 0
  %v508 = vsel %vm68, %v55, 0
  %v511 = vsel %vm68, %v56, 0
  %v514 = vsel %vm68, %v57, 0
  %v517 = vsel %vm68, %v58, 0
  %v520 = vsel %vm68, %v59, 0
  %v523 = vsel %vm68, %v60, 0
  %v526 = vsel %vm68, %v61, 0
  %v529 = vsel %vm68, %v62, 0
  %v532 = vsel %vm68, %v63, 0
  %v535 = vsel %vm68, %v64, 0
  %v538 = vsel %vm68, %v65, 0
  %v540 = vand.u32 %v538, 4294901760
  %541 = vmatpush.xpose.msra.mxu0 %v540
  %v542 = vand.u32 %v535, 4294901760
  %543 = vmatpush.xpose.msra.mxu0 %v542
  %v544 = vand.u32 %v532, 4294901760
  %545 = vmatpush.xpose.msra.mxu0 %v544
  %v546 = vand.u32 %v529, 4294901760
  %547 = vmatpush.xpose.msra.mxu0 %v546
  %v548 = vand.u32 %v526, 4294901760
  %549 = vmatpush.xpose.msra.mxu0 %v548
  %v550 = vand.u32 %v523, 4294901760
  %551 = vmatpush.xpose.msra.mxu0 %v550
  %v552 = vand.u32 %v520, 4294901760
  %553 = vmatpush.xpose.msra.mxu0 %v552
  %v554 = vand.u32 %v517, 4294901760
  %555 = vmatpush.xpose.msra.mxu0 %v554
  %v556 = vand.u32 %v514, 4294901760
  %557 = vmatpush.xpose.msra.mxu0 %v556
  %v558 = vand.u32 %v511, 4294901760
  %559 = vmatpush.xpose.msra.mxu0 %v558
  %v560 = vand.u32 %v508, 4294901760
  %561 = vmatpush.xpose.msra.mxu0 %v560
  %v562 = vand.u32 %v505, 4294901760
  %563 = vmatpush.xpose.msra.mxu0 %v562
  %v564 = vand.u32 %v502, 4294901760
  %565 = vmatpush.xpose.msra.mxu0 %v564
  %v566 = vand.u32 %v499, 4294901760
  %567 = vmatpush.xpose.msra.mxu0 %v566
  %v568 = vand.u32 %v496, 4294901760
  %569 = vmatpush.xpose.msra.mxu0 %v568
  %v570 = vand.u32 %v493, 4294901760
  %571 = vmatpush.xpose.msra.mxu0 %v570
  %v572 = vand.u32 %v487, 4294901760
  %v573 = vsub.f32 %v487, %v572
  %v574 = vand.u32 %v573, 4294901760
  %v575 = vsub.f32 %v573, %v574
  %v576 = vand.u32 %v575, 4294901760
  %577 = vmatmul.f32.gmra.mxu0 %v576
  %v578 = vpop.f32.mrf.mxu0
  %v579 = vadd.f32 0.0, %v578
  %v580 = vand.u32 %v490, 4294901760
  %v581 = vsub.f32 %v490, %v580
  %v582 = vand.u32 %v581, 4294901760
  %v583 = vsub.f32 %v581, %v582
  %v584 = vand.u32 %v583, 4294901760
  %585 = vmatmul.f32.gmra.mxu0 %v584
  %v586 = vpop.f32.mrf.mxu0
  %v587 = vadd.f32 0.0, %v586
  %588 = vdwg.mxu0
  %v589 = vand.u32 %v538, 4294901760
  %v590 = vsub.f32 %v538, %v589
  %v591 = vand.u32 %v590, 4294901760
  %v592 = vsub.f32 %v590, %v591
  %v593 = vand.u32 %v592, 4294901760
  %594 = vmatpush.xpose.msra.mxu0 %v593
  %v595 = vand.u32 %v535, 4294901760
  %v596 = vsub.f32 %v535, %v595
  %v597 = vand.u32 %v596, 4294901760
  %v598 = vsub.f32 %v596, %v597
  %v599 = vand.u32 %v598, 4294901760
  %600 = vmatpush.xpose.msra.mxu0 %v599
  %v601 = vand.u32 %v532, 4294901760
  %v602 = vsub.f32 %v532, %v601
  %v603 = vand.u32 %v602, 4294901760
  %v604 = vsub.f32 %v602, %v603
  %v605 = vand.u32 %v604, 4294901760
  %606 = vmatpush.xpose.msra.mxu0 %v605
  %v607 = vand.u32 %v529, 4294901760
  %v608 = vsub.f32 %v529, %v607
  %v609 = vand.u32 %v608, 4294901760
  %v610 = vsub.f32 %v608, %v609
  %v611 = vand.u32 %v610, 4294901760
  %612 = vmatpush.xpose.msra.mxu0 %v611
  %v613 = vand.u32 %v526, 4294901760
  %v614 = vsub.f32 %v526, %v613
  %v615 = vand.u32 %v614, 4294901760
  %v616 = vsub.f32 %v614, %v615
  %v617 = vand.u32 %v616, 4294901760
  %618 = vmatpush.xpose.msra.mxu0 %v617
  %v619 = vand.u32 %v523, 4294901760
  %v620 = vsub.f32 %v523, %v619
  %v621 = vand.u32 %v620, 4294901760
  %v622 = vsub.f32 %v620, %v621
  %v623 = vand.u32 %v622, 4294901760
  %624 = vmatpush.xpose.msra.mxu0 %v623
  %v625 = vand.u32 %v520, 4294901760
  %v626 = vsub.f32 %v520, %v625
  %v627 = vand.u32 %v626, 4294901760
  %v628 = vsub.f32 %v626, %v627
  %v629 = vand.u32 %v628, 4294901760
  %630 = vmatpush.xpose.msra.mxu0 %v629
  %v631 = vand.u32 %v517, 4294901760
  %v632 = vsub.f32 %v517, %v631
  %v633 = vand.u32 %v632, 4294901760
  %v634 = vsub.f32 %v632, %v633
  %v635 = vand.u32 %v634, 4294901760
  %636 = vmatpush.xpose.msra.mxu0 %v635
  %v637 = vand.u32 %v514, 4294901760
  %v638 = vsub.f32 %v514, %v637
  %v639 = vand.u32 %v638, 4294901760
  %v640 = vsub.f32 %v638, %v639
  %v641 = vand.u32 %v640, 4294901760
  %642 = vmatpush.xpose.msra.mxu0 %v641
  %v643 = vand.u32 %v511, 4294901760
  %v644 = vsub.f32 %v511, %v643
  %v645 = vand.u32 %v644, 4294901760
  %v646 = vsub.f32 %v644, %v645
  %v647 = vand.u32 %v646, 4294901760
  %648 = vmatpush.xpose.msra.mxu0 %v647
  %v649 = vand.u32 %v508, 4294901760
  %v650 = vsub.f32 %v508, %v649
  %v651 = vand.u32 %v650, 4294901760
  %v652 = vsub.f32 %v650, %v651
  %v653 = vand.u32 %v652, 4294901760
  %654 = vmatpush.xpose.msra.mxu0 %v653
  %v655 = vand.u32 %v505, 4294901760
  %v656 = vsub.f32 %v505, %v655
  %v657 = vand.u32 %v656, 4294901760
  %v658 = vsub.f32 %v656, %v657
  %v659 = vand.u32 %v658, 4294901760
  %660 = vmatpush.xpose.msra.mxu0 %v659
  %v661 = vand.u32 %v502, 4294901760
  %v662 = vsub.f32 %v502, %v661
  %v663 = vand.u32 %v662, 4294901760
  %v664 = vsub.f32 %v662, %v663
  %v665 = vand.u32 %v664, 4294901760
  %666 = vmatpush.xpose.msra.mxu0 %v665
  %v667 = vand.u32 %v499, 4294901760
  %v668 = vsub.f32 %v499, %v667
  %v669 = vand.u32 %v668, 4294901760
  %v670 = vsub.f32 %v668, %v669
  %v671 = vand.u32 %v670, 4294901760
  %672 = vmatpush.xpose.msra.mxu0 %v671
  %v673 = vand.u32 %v496, 4294901760
  %v674 = vsub.f32 %v496, %v673
  %v675 = vand.u32 %v674, 4294901760
  %v676 = vsub.f32 %v674, %v675
  %v677 = vand.u32 %v676, 4294901760
  %678 = vmatpush.xpose.msra.mxu0 %v677
  %v679 = vand.u32 %v493, 4294901760
  %v680 = vsub.f32 %v493, %v679
  %v681 = vand.u32 %v680, 4294901760
  %v682 = vsub.f32 %v680, %v681
  %v683 = vand.u32 %v682, 4294901760
  %684 = vmatpush.xpose.msra.mxu0 %v683
  %v685 = vand.u32 %v487, 4294901760
  %686 = vmatmul.f32.gmra.mxu0 %v685
  %v687 = vpop.f32.mrf.mxu0
  %v688 = vadd.f32 %v579, %v687
  %v689 = vand.u32 %v490, 4294901760
  %690 = vmatmul.f32.gmra.mxu0 %v689
  %v691 = vpop.f32.mrf.mxu0
  %v692 = vadd.f32 %v587, %v691
  %693 = vdwg.mxu0
  %v694 = vand.u32 %v538, 4294901760
  %v695 = vsub.f32 %v538, %v694
  %696 = vmatpush.xpose.msra.mxu0 %v695
  %v697 = vand.u32 %v535, 4294901760
  %v698 = vsub.f32 %v535, %v697
  %699 = vmatpush.xpose.msra.mxu0 %v698
  %v700 = vand.u32 %v532, 4294901760
  %v701 = vsub.f32 %v532, %v700
  %702 = vmatpush.xpose.msra.mxu0 %v701
  %v703 = vand.u32 %v529, 4294901760
  %v704 = vsub.f32 %v529, %v703
  %705 = vmatpush.xpose.msra.mxu0 %v704
  %v706 = vand.u32 %v526, 4294901760
  %v707 = vsub.f32 %v526, %v706
  %708 = vmatpush.xpose.msra.mxu0 %v707
  %v709 = vand.u32 %v523, 4294901760
  %v710 = vsub.f32 %v523, %v709
  %711 = vmatpush.xpose.msra.mxu0 %v710
  %v712 = vand.u32 %v520, 4294901760
  %v713 = vsub.f32 %v520, %v712
  %714 = vmatpush.xpose.msra.mxu0 %v713
  %v715 = vand.u32 %v517, 4294901760
  %v716 = vsub.f32 %v517, %v715
  %717 = vmatpush.xpose.msra.mxu0 %v716
  %v718 = vand.u32 %v514, 4294901760
  %v719 = vsub.f32 %v514, %v718
  %720 = vmatpush.xpose.msra.mxu0 %v719
  %v721 = vand.u32 %v511, 4294901760
  %v722 = vsub.f32 %v511, %v721
  %723 = vmatpush.xpose.msra.mxu0 %v722
  %v724 = vand.u32 %v508, 4294901760
  %v725 = vsub.f32 %v508, %v724
  %726 = vmatpush.xpose.msra.mxu0 %v725
  %v727 = vand.u32 %v505, 4294901760
  %v728 = vsub.f32 %v505, %v727
  %729 = vmatpush.xpose.msra.mxu0 %v728
  %v730 = vand.u32 %v502, 4294901760
  %v731 = vsub.f32 %v502, %v730
  %732 = vmatpush.xpose.msra.mxu0 %v731
  %v733 = vand.u32 %v499, 4294901760
  %v734 = vsub.f32 %v499, %v733
  %735 = vmatpush.xpose.msra.mxu0 %v734
  %v736 = vand.u32 %v496, 4294901760
  %v737 = vsub.f32 %v496, %v736
  %738 = vmatpush.xpose.msra.mxu0 %v737
  %v739 = vand.u32 %v493, 4294901760
  %v740 = vsub.f32 %v493, %v739
  %741 = vmatpush.xpose.msra.mxu0 %v740
  %v742 = vand.u32 %v487, 4294901760
  %v743 = vsub.f32 %v487, %v742
  %744 = vmatmul.f32.gmra.mxu0 %v743
  %v745 = vpop.f32.mrf.mxu0
  %v746 = vadd.f32 %v688, %v745
  %v747 = vand.u32 %v490, 4294901760
  %v748 = vsub.f32 %v490, %v747
  %749 = vmatmul.f32.gmra.mxu0 %v748
  %v750 = vpop.f32.mrf.mxu0
  %v751 = vadd.f32 %v692, %v750
  %752 = vdwg.mxu0
  %v753 = vand.u32 %v538, 4294901760
  %754 = vmatpush.xpose.msra.mxu0 %v753
  %v755 = vand.u32 %v535, 4294901760
  %756 = vmatpush.xpose.msra.mxu0 %v755
  %v757 = vand.u32 %v532, 4294901760
  %758 = vmatpush.xpose.msra.mxu0 %v757
  %v759 = vand.u32 %v529, 4294901760
  %760 = vmatpush.xpose.msra.mxu0 %v759
  %v761 = vand.u32 %v526, 4294901760
  %762 = vmatpush.xpose.msra.mxu0 %v761
  %v763 = vand.u32 %v523, 4294901760
  %764 = vmatpush.xpose.msra.mxu0 %v763
  %v765 = vand.u32 %v520, 4294901760
  %766 = vmatpush.xpose.msra.mxu0 %v765
  %v767 = vand.u32 %v517, 4294901760
  %768 = vmatpush.xpose.msra.mxu0 %v767
  %v769 = vand.u32 %v514, 4294901760
  %770 = vmatpush.xpose.msra.mxu0 %v769
  %v771 = vand.u32 %v511, 4294901760
  %772 = vmatpush.xpose.msra.mxu0 %v771
  %v773 = vand.u32 %v508, 4294901760
  %774 = vmatpush.xpose.msra.mxu0 %v773
  %v775 = vand.u32 %v505, 4294901760
  %776 = vmatpush.xpose.msra.mxu0 %v775
  %v777 = vand.u32 %v502, 4294901760
  %778 = vmatpush.xpose.msra.mxu0 %v777
  %v779 = vand.u32 %v499, 4294901760
  %780 = vmatpush.xpose.msra.mxu0 %v779
  %v781 = vand.u32 %v496, 4294901760
  %782 = vmatpush.xpose.msra.mxu0 %v781
  %v783 = vand.u32 %v493, 4294901760
  %784 = vmatpush.xpose.msra.mxu0 %v783
  %v785 = vand.u32 %v487, 4294901760
  %v786 = vsub.f32 %v487, %v785
  %v787 = vand.u32 %v786, 4294901760
  %788 = vmatmul.f32.gmra.mxu0 %v787
  %v789 = vpop.f32.mrf.mxu0
  %v790 = vadd.f32 %v746, %v789
  %v791 = vand.u32 %v490, 4294901760
  %v792 = vsub.f32 %v490, %v791
  %v793 = vand.u32 %v792, 4294901760
  %794 = vmatmul.f32.gmra.mxu0 %v793
  %v795 = vpop.f32.mrf.mxu0
  %v796 = vadd.f32 %v751, %v795
  %797 = vdwg.mxu0
  %v798 = vand.u32 %v538, 4294901760
  %v799 = vsub.f32 %v538, %v798
  %v800 = vand.u32 %v799, 4294901760
  %801 = vmatpush.xpose.msra.mxu0 %v800
  %v802 = vand.u32 %v535, 4294901760
  %v803 = vsub.f32 %v535, %v802
  %v804 = vand.u32 %v803, 4294901760
  %805 = vmatpush.xpose.msra.mxu0 %v804
  %v806 = vand.u32 %v532, 4294901760
  %v807 = vsub.f32 %v532, %v806
  %v808 = vand.u32 %v807, 4294901760
  %809 = vmatpush.xpose.msra.mxu0 %v808
  %v810 = vand.u32 %v529, 4294901760
  %v811 = vsub.f32 %v529, %v810
  %v812 = vand.u32 %v811, 4294901760
  %813 = vmatpush.xpose.msra.mxu0 %v812
  %v814 = vand.u32 %v526, 4294901760
  %v815 = vsub.f32 %v526, %v814
  %v816 = vand.u32 %v815, 4294901760
  %817 = vmatpush.xpose.msra.mxu0 %v816
  %v818 = vand.u32 %v523, 4294901760
  %v819 = vsub.f32 %v523, %v818
  %v820 = vand.u32 %v819, 4294901760
  %821 = vmatpush.xpose.msra.mxu0 %v820
  %v822 = vand.u32 %v520, 4294901760
  %v823 = vsub.f32 %v520, %v822
  %v824 = vand.u32 %v823, 4294901760
  %825 = vmatpush.xpose.msra.mxu0 %v824
  %v826 = vand.u32 %v517, 4294901760
  %v827 = vsub.f32 %v517, %v826
  %v828 = vand.u32 %v827, 4294901760
  %829 = vmatpush.xpose.msra.mxu0 %v828
  %v830 = vand.u32 %v514, 4294901760
  %v831 = vsub.f32 %v514, %v830
  %v832 = vand.u32 %v831, 4294901760
  %833 = vmatpush.xpose.msra.mxu0 %v832
  %v834 = vand.u32 %v511, 4294901760
  %v835 = vsub.f32 %v511, %v834
  %v836 = vand.u32 %v835, 4294901760
  %837 = vmatpush.xpose.msra.mxu0 %v836
  %v838 = vand.u32 %v508, 4294901760
  %v839 = vsub.f32 %v508, %v838
  %v840 = vand.u32 %v839, 4294901760
  %841 = vmatpush.xpose.msra.mxu0 %v840
  %v842 = vand.u32 %v505, 4294901760
  %v843 = vsub.f32 %v505, %v842
  %v844 = vand.u32 %v843, 4294901760
  %845 = vmatpush.xpose.msra.mxu0 %v844
  %v846 = vand.u32 %v502, 4294901760
  %v847 = vsub.f32 %v502, %v846
  %v848 = vand.u32 %v847, 4294901760
  %849 = vmatpush.xpose.msra.mxu0 %v848
  %v850 = vand.u32 %v499, 4294901760
  %v851 = vsub.f32 %v499, %v850
  %v852 = vand.u32 %v851, 4294901760
  %853 = vmatpush.xpose.msra.mxu0 %v852
  %v854 = vand.u32 %v496, 4294901760
  %v855 = vsub.f32 %v496, %v854
  %v856 = vand.u32 %v855, 4294901760
  %857 = vmatpush.xpose.msra.mxu0 %v856
  %v858 = vand.u32 %v493, 4294901760
  %v859 = vsub.f32 %v493, %v858
  %v860 = vand.u32 %v859, 4294901760
  %861 = vmatpush.xpose.msra.mxu0 %v860
  %v862 = vand.u32 %v487, 4294901760
  %863 = vmatmul.f32.gmra.mxu0 %v862
  %v864 = vpop.f32.mrf.mxu0
  %v865 = vadd.f32 %v790, %v864
  %v866 = vand.u32 %v490, 4294901760
  %867 = vmatmul.f32.gmra.mxu0 %v866
  %v868 = vpop.f32.mrf.mxu0
  %v869 = vadd.f32 %v796, %v868
  %870 = vdwg.mxu0
  %v871 = vand.u32 %v538, 4294901760
  %872 = vmatpush.xpose.msra.mxu0 %v871
  %v873 = vand.u32 %v535, 4294901760
  %874 = vmatpush.xpose.msra.mxu0 %v873
  %v875 = vand.u32 %v532, 4294901760
  %876 = vmatpush.xpose.msra.mxu0 %v875
  %v877 = vand.u32 %v529, 4294901760
  %878 = vmatpush.xpose.msra.mxu0 %v877
  %v879 = vand.u32 %v526, 4294901760
  %880 = vmatpush.xpose.msra.mxu0 %v879
  %v881 = vand.u32 %v523, 4294901760
  %882 = vmatpush.xpose.msra.mxu0 %v881
  %v883 = vand.u32 %v520, 4294901760
  %884 = vmatpush.xpose.msra.mxu0 %v883
  %v885 = vand.u32 %v517, 4294901760
  %886 = vmatpush.xpose.msra.mxu0 %v885
  %v887 = vand.u32 %v514, 4294901760
  %888 = vmatpush.xpose.msra.mxu0 %v887
  %v889 = vand.u32 %v511, 4294901760
  %890 = vmatpush.xpose.msra.mxu0 %v889
  %v891 = vand.u32 %v508, 4294901760
  %892 = vmatpush.xpose.msra.mxu0 %v891
  %v893 = vand.u32 %v505, 4294901760
  %894 = vmatpush.xpose.msra.mxu0 %v893
  %v895 = vand.u32 %v502, 4294901760
  %896 = vmatpush.xpose.msra.mxu0 %v895
  %v897 = vand.u32 %v499, 4294901760
  %898 = vmatpush.xpose.msra.mxu0 %v897
  %v899 = vand.u32 %v496, 4294901760
  %900 = vmatpush.xpose.msra.mxu0 %v899
  %v901 = vand.u32 %v493, 4294901760
  %902 = vmatpush.xpose.msra.mxu0 %v901
  %v903 = vand.u32 %v487, 4294901760
  %904 = vmatmul.f32.gmra.mxu0 %v903
  %v905 = vpop.f32.mrf.mxu0
  %v906 = vadd.f32 %v865, %v905
  %v907 = vand.u32 %v490, 4294901760
  %908 = vmatmul.f32.gmra.mxu0 %v907
  %v909 = vpop.f32.mrf.mxu0
  %v910 = vadd.f32 %v869, %v909
  %911 = vdwg.mxu0
  %v912 = vmul.f32 %v906, 2.0
  %v913 = vmul.f32 %v910, 2.0
  %v914 = vsub.f32 %v484, %v912
  %v915 = vsub.f32 %v485, %v913
  %v916 = vmax.f32 %v914, 0.0
  %v917 = vmax.f32 %v915, 0.0
  %v918 = vsub.f32 0.0, %v916
  %v919 = vsub.f32 0.0, %v917
  %v920 = vmul.f32 %v918, 1.442695
  %v921 = vpow.pop %v920
  %v922 = vmul.f32 %v919, 1.442695
  %v923 = vpow.pop %v922
  %v924 = vstv %s26
  %v925 = vmul.f32 %v924, %v921
  %v926 = vmul.f32 %v924, %v923
  %s927 = smul.u32 0, 128
  %v928 = vlaneseq
  %v929 = vand.u32 %v928, 127
  %v930 = vstv %s927
  %v931 = vadd.s32 %v930, %v929
  %vm932 = vcmp.lt.s32.totalorder %v931, 48
  %v933 = vsel %vm932, 1, 0
  %vm934 = vcmp.eq.s32.totalorder %v933, 1
  %v935 = vsel %vm934, %v925, 0.0
  %v936 = vsel %vm934, %v926, 0.0
  %p937 = scmp.eq.s32.totalorder 0, 0
  // Predicated region
  $region14: #{svgp_forward.4} parent=0 // pred_check
    %p938 = pneg %p937
  $region15: #{svgp_forward.4} parent=0 // pred_check_branch
    %940 = sbr.rel (%p938) target = $region17
  $region16: #{svgp_forward.4} parent=0 // pred_region
    %vm941 = vcmask 130048
    %942 = vst.msk [vmem:[%s5] sm:$0xff] %vm941, 0.0
    %943 = vst.msk [vmem:[%s5 + $0x8] sm:$0xff] %vm941, 0.0
    %vm944 = vcmask 7168
    %945 = vst.msk [vmem:[%s6] sm:$0xff] %vm944, 0.0
    %946 = vst.msk [vmem:[%s6 + $0x8] sm:$0xff] %vm944, 0.0
  $region17: #{svgp_forward.4} parent=0 // pred_fallthru
    _
  %v947 = vld [vmem:[%s5] sm:$0xff]
  %v948 = vld [vmem:[%s5 + $0x8] sm:$0xff]
  %949 = vmatpush.xpose.msra.mxu0 0.0
  %950 = vmatpush.xpose.msra.mxu0 0.0
  %951 = vmatpush.xpose.msra.mxu0 0.0
  %952 = vmatpush.xpose.msra.mxu0 0.0
  %953 = vmatpush.xpose.msra.mxu0 0.0
  %954 = vmatpush.xpose.msra.mxu0 0.0
  %955 = vmatpush.xpose.msra.mxu0 0.0
  %956 = vmatpush.xpose.msra.mxu0 0.0
  %957 = vmatpush.xpose.msra.mxu0 0.0
  %958 = vmatpush.xpose.msra.mxu0 0.0
  %959 = vmatpush.xpose.msra.mxu0 0.0
  %960 = vmatpush.xpose.msra.mxu0 0.0
  %961 = vmatpush.xpose.msra.mxu0 0.0
  %962 = vmatpush.xpose.msra.mxu0 0.0
  %v963 = vand.u32 %v936, 4294901760
  %964 = vmatpush.xpose.msra.mxu0 %v963
  %v965 = vand.u32 %v935, 4294901760
  %966 = vmatpush.xpose.msra.mxu0 %v965
  %v967 = vand.u32 %v935, 4294901760
  %v968 = vsub.f32 %v935, %v967
  %v969 = vand.u32 %v968, 4294901760
  %v970 = vsub.f32 %v968, %v969
  %v971 = vand.u32 %v970, 4294901760
  %972 = vmatmul.f32.gmra.mxu0 %v971
  %v973 = vpop.f32.mrf.mxu0
  %v974 = vadd.f32 0.0, %v973
  %v975 = vand.u32 %v936, 4294901760
  %v976 = vsub.f32 %v936, %v975
  %v977 = vand.u32 %v976, 4294901760
  %v978 = vsub.f32 %v976, %v977
  %v979 = vand.u32 %v978, 4294901760
  %980 = vmatmul.f32.gmra.mxu0 %v979
  %v981 = vpop.f32.mrf.mxu0
  %v982 = vadd.f32 0.0, %v981
  %983 = vdwg.mxu0
  %984 = vmatpush.xpose.msra.mxu0 0.0
  %985 = vmatpush.xpose.msra.mxu0 0.0
  %986 = vmatpush.xpose.msra.mxu0 0.0
  %987 = vmatpush.xpose.msra.mxu0 0.0
  %988 = vmatpush.xpose.msra.mxu0 0.0
  %989 = vmatpush.xpose.msra.mxu0 0.0
  %990 = vmatpush.xpose.msra.mxu0 0.0
  %991 = vmatpush.xpose.msra.mxu0 0.0
  %992 = vmatpush.xpose.msra.mxu0 0.0
  %993 = vmatpush.xpose.msra.mxu0 0.0
  %994 = vmatpush.xpose.msra.mxu0 0.0
  %995 = vmatpush.xpose.msra.mxu0 0.0
  %996 = vmatpush.xpose.msra.mxu0 0.0
  %997 = vmatpush.xpose.msra.mxu0 0.0
  %v998 = vand.u32 %v936, 4294901760
  %v999 = vsub.f32 %v936, %v998
  %v1000 = vand.u32 %v999, 4294901760
  %v1001 = vsub.f32 %v999, %v1000
  %v1002 = vand.u32 %v1001, 4294901760
  %1003 = vmatpush.xpose.msra.mxu0 %v1002
  %v1004 = vand.u32 %v935, 4294901760
  %v1005 = vsub.f32 %v935, %v1004
  %v1006 = vand.u32 %v1005, 4294901760
  %v1007 = vsub.f32 %v1005, %v1006
  %v1008 = vand.u32 %v1007, 4294901760
  %1009 = vmatpush.xpose.msra.mxu0 %v1008
  %v1010 = vand.u32 %v935, 4294901760
  %1011 = vmatmul.f32.gmra.mxu0 %v1010
  %v1012 = vpop.f32.mrf.mxu0
  %v1013 = vadd.f32 %v974, %v1012
  %v1014 = vand.u32 %v936, 4294901760
  %1015 = vmatmul.f32.gmra.mxu0 %v1014
  %v1016 = vpop.f32.mrf.mxu0
  %v1017 = vadd.f32 %v982, %v1016
  %1018 = vdwg.mxu0
  %1019 = vmatpush.xpose.msra.mxu0 0.0
  %1020 = vmatpush.xpose.msra.mxu0 0.0
  %1021 = vmatpush.xpose.msra.mxu0 0.0
  %1022 = vmatpush.xpose.msra.mxu0 0.0
  %1023 = vmatpush.xpose.msra.mxu0 0.0
  %1024 = vmatpush.xpose.msra.mxu0 0.0
  %1025 = vmatpush.xpose.msra.mxu0 0.0
  %1026 = vmatpush.xpose.msra.mxu0 0.0
  %1027 = vmatpush.xpose.msra.mxu0 0.0
  %1028 = vmatpush.xpose.msra.mxu0 0.0
  %1029 = vmatpush.xpose.msra.mxu0 0.0
  %1030 = vmatpush.xpose.msra.mxu0 0.0
  %1031 = vmatpush.xpose.msra.mxu0 0.0
  %1032 = vmatpush.xpose.msra.mxu0 0.0
  %v1033 = vand.u32 %v936, 4294901760
  %v1034 = vsub.f32 %v936, %v1033
  %1035 = vmatpush.xpose.msra.mxu0 %v1034
  %v1036 = vand.u32 %v935, 4294901760
  %v1037 = vsub.f32 %v935, %v1036
  %1038 = vmatpush.xpose.msra.mxu0 %v1037
  %v1039 = vand.u32 %v935, 4294901760
  %v1040 = vsub.f32 %v935, %v1039
  %1041 = vmatmul.f32.gmra.mxu0 %v1040
  %v1042 = vpop.f32.mrf.mxu0
  %v1043 = vadd.f32 %v1013, %v1042
  %v1044 = vand.u32 %v936, 4294901760
  %v1045 = vsub.f32 %v936, %v1044
  %1046 = vmatmul.f32.gmra.mxu0 %v1045
  %v1047 = vpop.f32.mrf.mxu0
  %v1048 = vadd.f32 %v1017, %v1047
  %1049 = vdwg.mxu0
  %1050 = vmatpush.xpose.msra.mxu0 0.0
  %1051 = vmatpush.xpose.msra.mxu0 0.0
  %1052 = vmatpush.xpose.msra.mxu0 0.0
  %1053 = vmatpush.xpose.msra.mxu0 0.0
  %1054 = vmatpush.xpose.msra.mxu0 0.0
  %1055 = vmatpush.xpose.msra.mxu0 0.0
  %1056 = vmatpush.xpose.msra.mxu0 0.0
  %1057 = vmatpush.xpose.msra.mxu0 0.0
  %1058 = vmatpush.xpose.msra.mxu0 0.0
  %1059 = vmatpush.xpose.msra.mxu0 0.0
  %1060 = vmatpush.xpose.msra.mxu0 0.0
  %1061 = vmatpush.xpose.msra.mxu0 0.0
  %1062 = vmatpush.xpose.msra.mxu0 0.0
  %1063 = vmatpush.xpose.msra.mxu0 0.0
  %v1064 = vand.u32 %v936, 4294901760
  %1065 = vmatpush.xpose.msra.mxu0 %v1064
  %v1066 = vand.u32 %v935, 4294901760
  %1067 = vmatpush.xpose.msra.mxu0 %v1066
  %v1068 = vand.u32 %v935, 4294901760
  %v1069 = vsub.f32 %v935, %v1068
  %v1070 = vand.u32 %v1069, 4294901760
  %1071 = vmatmul.f32.gmra.mxu0 %v1070
  %v1072 = vpop.f32.mrf.mxu0
  %v1073 = vadd.f32 %v1043, %v1072
  %v1074 = vand.u32 %v936, 4294901760
  %v1075 = vsub.f32 %v936, %v1074
  %v1076 = vand.u32 %v1075, 4294901760
  %1077 = vmatmul.f32.gmra.mxu0 %v1076
  %v1078 = vpop.f32.mrf.mxu0
  %v1079 = vadd.f32 %v1048, %v1078
  %1080 = vdwg.mxu0
  %1081 = vmatpush.xpose.msra.mxu0 0.0
  %1082 = vmatpush.xpose.msra.mxu0 0.0
  %1083 = vmatpush.xpose.msra.mxu0 0.0
  %1084 = vmatpush.xpose.msra.mxu0 0.0
  %1085 = vmatpush.xpose.msra.mxu0 0.0
  %1086 = vmatpush.xpose.msra.mxu0 0.0
  %1087 = vmatpush.xpose.msra.mxu0 0.0
  %1088 = vmatpush.xpose.msra.mxu0 0.0
  %1089 = vmatpush.xpose.msra.mxu0 0.0
  %1090 = vmatpush.xpose.msra.mxu0 0.0
  %1091 = vmatpush.xpose.msra.mxu0 0.0
  %1092 = vmatpush.xpose.msra.mxu0 0.0
  %1093 = vmatpush.xpose.msra.mxu0 0.0
  %1094 = vmatpush.xpose.msra.mxu0 0.0
  %v1095 = vand.u32 %v936, 4294901760
  %v1096 = vsub.f32 %v936, %v1095
  %v1097 = vand.u32 %v1096, 4294901760
  %1098 = vmatpush.xpose.msra.mxu0 %v1097
  %v1099 = vand.u32 %v935, 4294901760
  %v1100 = vsub.f32 %v935, %v1099
  %v1101 = vand.u32 %v1100, 4294901760
  %1102 = vmatpush.xpose.msra.mxu0 %v1101
  %v1103 = vand.u32 %v935, 4294901760
  %1104 = vmatmul.f32.gmra.mxu0 %v1103
  %v1105 = vpop.f32.mrf.mxu0
  %v1106 = vadd.f32 %v1073, %v1105
  %v1107 = vand.u32 %v936, 4294901760
  %1108 = vmatmul.f32.gmra.mxu0 %v1107
  %v1109 = vpop.f32.mrf.mxu0
  %v1110 = vadd.f32 %v1079, %v1109
  %1111 = vdwg.mxu0
  %1112 = vmatpush.xpose.msra.mxu0 0.0
  %1113 = vmatpush.xpose.msra.mxu0 0.0
  %1114 = vmatpush.xpose.msra.mxu0 0.0
  %1115 = vmatpush.xpose.msra.mxu0 0.0
  %1116 = vmatpush.xpose.msra.mxu0 0.0
  %1117 = vmatpush.xpose.msra.mxu0 0.0
  %1118 = vmatpush.xpose.msra.mxu0 0.0
  %1119 = vmatpush.xpose.msra.mxu0 0.0
  %1120 = vmatpush.xpose.msra.mxu0 0.0
  %1121 = vmatpush.xpose.msra.mxu0 0.0
  %1122 = vmatpush.xpose.msra.mxu0 0.0
  %1123 = vmatpush.xpose.msra.mxu0 0.0
  %1124 = vmatpush.xpose.msra.mxu0 0.0
  %1125 = vmatpush.xpose.msra.mxu0 0.0
  %v1126 = vand.u32 %v936, 4294901760
  %1127 = vmatpush.xpose.msra.mxu0 %v1126
  %v1128 = vand.u32 %v935, 4294901760
  %1129 = vmatpush.xpose.msra.mxu0 %v1128
  %v1130 = vand.u32 %v935, 4294901760
  %1131 = vmatmul.f32.gmra.mxu0 %v1130
  %v1132 = vpop.f32.mrf.mxu0
  %v1133 = vadd.f32 %v1106, %v1132
  %v1134 = vand.u32 %v936, 4294901760
  %1135 = vmatmul.f32.gmra.mxu0 %v1134
  %v1136 = vpop.f32.mrf.mxu0
  %v1137 = vadd.f32 %v1110, %v1136
  %1138 = vdwg.mxu0
  %v1139 = vstv %s28
  %v1140 = vmul.f32 %v1139, %v1133
  %v1141 = vmul.f32 %v1139, %v1137
  %v1142 = vadd.f32 %v947, %v1140
  %v1143 = vadd.f32 %v948, %v1141
  %vm1144 = vcmask 130048
  %1145 = vst.msk [vmem:[%s5] sm:$0xff] %vm1144, %v1142
  %1146 = vst.msk [vmem:[%s5 + $0x8] sm:$0xff] %vm1144, %v1143
  %v1147 = vld [vmem:[%s6] sm:$0xff]
  %v1148 = vld [vmem:[%s6 + $0x8] sm:$0xff]
  %v1149 = vld [vmem:[%s3] sm:$0xff]
  %v1150 = vld [vmem:[%s3 + $0x8] sm:$0xff]
  %v1151 = vld [vmem:[%s3 + $0x10] sm:$0xff]
  %v1152 = vld [vmem:[%s3 + $0x18] sm:$0xff]
  %v1153 = vld [vmem:[%s3 + $0x20] sm:$0xff]
  %v1154 = vld [vmem:[%s3 + $0x28] sm:$0xff]
  %v1155 = vld [vmem:[%s3 + $0x30] sm:$0xff]
  %v1156 = vld [vmem:[%s3 + $0x38] sm:$0xff]
  %v1157 = vld [vmem:[%s3 + $0x40] sm:$0xff]
  %v1158 = vld [vmem:[%s3 + $0x48] sm:$0xff]
  %v1159 = vld [vmem:[%s3 + $0x50] sm:$0xff]
  %v1160 = vld [vmem:[%s3 + $0x58] sm:$0xff]
  %v1161 = vld [vmem:[%s3 + $0x60] sm:$0xff]
  %v1162 = vld [vmem:[%s3 + $0x68] sm:$0xff]
  %v1163 = vld [vmem:[%s3 + $0x70] sm:$0xff]
  %v1164 = vld [vmem:[%s3 + $0x78] sm:$0xff]
  %v1165 = vand.u32 %v1164, 4294901760
  %1166 = vmatpush.msra.mxu0 %v1165
  %v1167 = vand.u32 %v1163, 4294901760
  %1168 = vmatpush.msra.mxu0 %v1167
  %v1169 = vand.u32 %v1162, 4294901760
  %1170 = vmatpush.msra.mxu0 %v1169
  %v1171 = vand.u32 %v1161, 4294901760
  %1172 = vmatpush.msra.mxu0 %v1171
  %v1173 = vand.u32 %v1160, 4294901760
  %1174 = vmatpush.msra.mxu0 %v1173
  %v1175 = vand.u32 %v1159, 4294901760
  %1176 = vmatpush.msra.mxu0 %v1175
  %v1177 = vand.u32 %v1158, 4294901760
  %1178 = vmatpush.msra.mxu0 %v1177
  %v1179 = vand.u32 %v1157, 4294901760
  %1180 = vmatpush.msra.mxu0 %v1179
  %v1181 = vand.u32 %v1156, 4294901760
  %1182 = vmatpush.msra.mxu0 %v1181
  %v1183 = vand.u32 %v1155, 4294901760
  %1184 = vmatpush.msra.mxu0 %v1183
  %v1185 = vand.u32 %v1154, 4294901760
  %1186 = vmatpush.msra.mxu0 %v1185
  %v1187 = vand.u32 %v1153, 4294901760
  %1188 = vmatpush.msra.mxu0 %v1187
  %v1189 = vand.u32 %v1152, 4294901760
  %1190 = vmatpush.msra.mxu0 %v1189
  %v1191 = vand.u32 %v1151, 4294901760
  %1192 = vmatpush.msra.mxu0 %v1191
  %v1193 = vand.u32 %v1150, 4294901760
  %1194 = vmatpush.msra.mxu0 %v1193
  %v1195 = vand.u32 %v1149, 4294901760
  %1196 = vmatpush.msra.mxu0 %v1195
  %v1197 = vand.u32 %v935, 4294901760
  %v1198 = vsub.f32 %v935, %v1197
  %v1199 = vand.u32 %v1198, 4294901760
  %v1200 = vsub.f32 %v1198, %v1199
  %v1201 = vand.u32 %v1200, 4294901760
  %1202 = vmatmul.f32.gmra.mxu0 %v1201
  %v1203 = vpop.f32.mrf.mxu0
  %v1204 = vadd.f32 0.0, %v1203
  %v1205 = vand.u32 %v936, 4294901760
  %v1206 = vsub.f32 %v936, %v1205
  %v1207 = vand.u32 %v1206, 4294901760
  %v1208 = vsub.f32 %v1206, %v1207
  %v1209 = vand.u32 %v1208, 4294901760
  %1210 = vmatmul.f32.gmra.mxu0 %v1209
  %v1211 = vpop.f32.mrf.mxu0
  %v1212 = vadd.f32 0.0, %v1211
  %1213 = vdwg.mxu0
  %v1214 = vand.u32 %v1164, 4294901760
  %v1215 = vsub.f32 %v1164, %v1214
  %v1216 = vand.u32 %v1215, 4294901760
  %v1217 = vsub.f32 %v1215, %v1216
  %v1218 = vand.u32 %v1217, 4294901760
  %1219 = vmatpush.msra.mxu0 %v1218
  %v1220 = vand.u32 %v1163, 4294901760
  %v1221 = vsub.f32 %v1163, %v1220
  %v1222 = vand.u32 %v1221, 4294901760
  %v1223 = vsub.f32 %v1221, %v1222
  %v1224 = vand.u32 %v1223, 4294901760
  %1225 = vmatpush.msra.mxu0 %v1224
  %v1226 = vand.u32 %v1162, 4294901760
  %v1227 = vsub.f32 %v1162, %v1226
  %v1228 = vand.u32 %v1227, 4294901760
  %v1229 = vsub.f32 %v1227, %v1228
  %v1230 = vand.u32 %v1229, 4294901760
  %1231 = vmatpush.msra.mxu0 %v1230
  %v1232 = vand.u32 %v1161, 4294901760
  %v1233 = vsub.f32 %v1161, %v1232
  %v1234 = vand.u32 %v1233, 4294901760
  %v1235 = vsub.f32 %v1233, %v1234
  %v1236 = vand.u32 %v1235, 4294901760
  %1237 = vmatpush.msra.mxu0 %v1236
  %v1238 = vand.u32 %v1160, 4294901760
  %v1239 = vsub.f32 %v1160, %v1238
  %v1240 = vand.u32 %v1239, 4294901760
  %v1241 = vsub.f32 %v1239, %v1240
  %v1242 = vand.u32 %v1241, 4294901760
  %1243 = vmatpush.msra.mxu0 %v1242
  %v1244 = vand.u32 %v1159, 4294901760
  %v1245 = vsub.f32 %v1159, %v1244
  %v1246 = vand.u32 %v1245, 4294901760
  %v1247 = vsub.f32 %v1245, %v1246
  %v1248 = vand.u32 %v1247, 4294901760
  %1249 = vmatpush.msra.mxu0 %v1248
  %v1250 = vand.u32 %v1158, 4294901760
  %v1251 = vsub.f32 %v1158, %v1250
  %v1252 = vand.u32 %v1251, 4294901760
  %v1253 = vsub.f32 %v1251, %v1252
  %v1254 = vand.u32 %v1253, 4294901760
  %1255 = vmatpush.msra.mxu0 %v1254
  %v1256 = vand.u32 %v1157, 4294901760
  %v1257 = vsub.f32 %v1157, %v1256
  %v1258 = vand.u32 %v1257, 4294901760
  %v1259 = vsub.f32 %v1257, %v1258
  %v1260 = vand.u32 %v1259, 4294901760
  %1261 = vmatpush.msra.mxu0 %v1260
  %v1262 = vand.u32 %v1156, 4294901760
  %v1263 = vsub.f32 %v1156, %v1262
  %v1264 = vand.u32 %v1263, 4294901760
  %v1265 = vsub.f32 %v1263, %v1264
  %v1266 = vand.u32 %v1265, 4294901760
  %1267 = vmatpush.msra.mxu0 %v1266
  %v1268 = vand.u32 %v1155, 4294901760
  %v1269 = vsub.f32 %v1155, %v1268
  %v1270 = vand.u32 %v1269, 4294901760
  %v1271 = vsub.f32 %v1269, %v1270
  %v1272 = vand.u32 %v1271, 4294901760
  %1273 = vmatpush.msra.mxu0 %v1272
  %v1274 = vand.u32 %v1154, 4294901760
  %v1275 = vsub.f32 %v1154, %v1274
  %v1276 = vand.u32 %v1275, 4294901760
  %v1277 = vsub.f32 %v1275, %v1276
  %v1278 = vand.u32 %v1277, 4294901760
  %1279 = vmatpush.msra.mxu0 %v1278
  %v1280 = vand.u32 %v1153, 4294901760
  %v1281 = vsub.f32 %v1153, %v1280
  %v1282 = vand.u32 %v1281, 4294901760
  %v1283 = vsub.f32 %v1281, %v1282
  %v1284 = vand.u32 %v1283, 4294901760
  %1285 = vmatpush.msra.mxu0 %v1284
  %v1286 = vand.u32 %v1152, 4294901760
  %v1287 = vsub.f32 %v1152, %v1286
  %v1288 = vand.u32 %v1287, 4294901760
  %v1289 = vsub.f32 %v1287, %v1288
  %v1290 = vand.u32 %v1289, 4294901760
  %1291 = vmatpush.msra.mxu0 %v1290
  %v1292 = vand.u32 %v1151, 4294901760
  %v1293 = vsub.f32 %v1151, %v1292
  %v1294 = vand.u32 %v1293, 4294901760
  %v1295 = vsub.f32 %v1293, %v1294
  %v1296 = vand.u32 %v1295, 4294901760
  %1297 = vmatpush.msra.mxu0 %v1296
  %v1298 = vand.u32 %v1150, 4294901760
  %v1299 = vsub.f32 %v1150, %v1298
  %v1300 = vand.u32 %v1299, 4294901760
  %v1301 = vsub.f32 %v1299, %v1300
  %v1302 = vand.u32 %v1301, 4294901760
  %1303 = vmatpush.msra.mxu0 %v1302
  %v1304 = vand.u32 %v1149, 4294901760
  %v1305 = vsub.f32 %v1149, %v1304
  %v1306 = vand.u32 %v1305, 4294901760
  %v1307 = vsub.f32 %v1305, %v1306
  %v1308 = vand.u32 %v1307, 4294901760
  %1309 = vmatpush.msra.mxu0 %v1308
  %v1310 = vand.u32 %v935, 4294901760
  %1311 = vmatmul.f32.gmra.mxu0 %v1310
  %v1312 = vpop.f32.mrf.mxu0
  %v1313 = vadd.f32 %v1204, %v1312
  %v1314 = vand.u32 %v936, 4294901760
  %1315 = vmatmul.f32.gmra.mxu0 %v1314
  %v1316 = vpop.f32.mrf.mxu0
  %v1317 = vadd.f32 %v1212, %v1316
  %1318 = vdwg.mxu0
  %v1319 = vand.u32 %v1164, 4294901760
  %v1320 = vsub.f32 %v1164, %v1319
  %1321 = vmatpush.msra.mxu0 %v1320
  %v1322 = vand.u32 %v1163, 4294901760
  %v1323 = vsub.f32 %v1163, %v1322
  %1324 = vmatpush.msra.mxu0 %v1323
  %v1325 = vand.u32 %v1162, 4294901760
  %v1326 = vsub.f32 %v1162, %v1325
  %1327 = vmatpush.msra.mxu0 %v1326
  %v1328 = vand.u32 %v1161, 4294901760
  %v1329 = vsub.f32 %v1161, %v1328
  %1330 = vmatpush.msra.mxu0 %v1329
  %v1331 = vand.u32 %v1160, 4294901760
  %v1332 = vsub.f32 %v1160, %v1331
  %1333 = vmatpush.msra.mxu0 %v1332
  %v1334 = vand.u32 %v1159, 4294901760
  %v1335 = vsub.f32 %v1159, %v1334
  %1336 = vmatpush.msra.mxu0 %v1335
  %v1337 = vand.u32 %v1158, 4294901760
  %v1338 = vsub.f32 %v1158, %v1337
  %1339 = vmatpush.msra.mxu0 %v1338
  %v1340 = vand.u32 %v1157, 4294901760
  %v1341 = vsub.f32 %v1157, %v1340
  %1342 = vmatpush.msra.mxu0 %v1341
  %v1343 = vand.u32 %v1156, 4294901760
  %v1344 = vsub.f32 %v1156, %v1343
  %1345 = vmatpush.msra.mxu0 %v1344
  %v1346 = vand.u32 %v1155, 4294901760
  %v1347 = vsub.f32 %v1155, %v1346
  %1348 = vmatpush.msra.mxu0 %v1347
  %v1349 = vand.u32 %v1154, 4294901760
  %v1350 = vsub.f32 %v1154, %v1349
  %1351 = vmatpush.msra.mxu0 %v1350
  %v1352 = vand.u32 %v1153, 4294901760
  %v1353 = vsub.f32 %v1153, %v1352
  %1354 = vmatpush.msra.mxu0 %v1353
  %v1355 = vand.u32 %v1152, 4294901760
  %v1356 = vsub.f32 %v1152, %v1355
  %1357 = vmatpush.msra.mxu0 %v1356
  %v1358 = vand.u32 %v1151, 4294901760
  %v1359 = vsub.f32 %v1151, %v1358
  %1360 = vmatpush.msra.mxu0 %v1359
  %v1361 = vand.u32 %v1150, 4294901760
  %v1362 = vsub.f32 %v1150, %v1361
  %1363 = vmatpush.msra.mxu0 %v1362
  %v1364 = vand.u32 %v1149, 4294901760
  %v1365 = vsub.f32 %v1149, %v1364
  %1366 = vmatpush.msra.mxu0 %v1365
  %v1367 = vand.u32 %v935, 4294901760
  %v1368 = vsub.f32 %v935, %v1367
  %1369 = vmatmul.f32.gmra.mxu0 %v1368
  %v1370 = vpop.f32.mrf.mxu0
  %v1371 = vadd.f32 %v1313, %v1370
  %v1372 = vand.u32 %v936, 4294901760
  %v1373 = vsub.f32 %v936, %v1372
  %1374 = vmatmul.f32.gmra.mxu0 %v1373
  %v1375 = vpop.f32.mrf.mxu0
  %v1376 = vadd.f32 %v1317, %v1375
  %1377 = vdwg.mxu0
  %v1378 = vand.u32 %v1164, 4294901760
  %1379 = vmatpush.msra.mxu0 %v1378
  %v1380 = vand.u32 %v1163, 4294901760
  %1381 = vmatpush.msra.mxu0 %v1380
  %v1382 = vand.u32 %v1162, 4294901760
  %1383 = vmatpush.msra.mxu0 %v1382
  %v1384 = vand.u32 %v1161, 4294901760
  %1385 = vmatpush.msra.mxu0 %v1384
  %v1386 = vand.u32 %v1160, 4294901760
  %1387 = vmatpush.msra.mxu0 %v1386
  %v1388 = vand.u32 %v1159, 4294901760
  %1389 = vmatpush.msra.mxu0 %v1388
  %v1390 = vand.u32 %v1158, 4294901760
  %1391 = vmatpush.msra.mxu0 %v1390
  %v1392 = vand.u32 %v1157, 4294901760
  %1393 = vmatpush.msra.mxu0 %v1392
  %v1394 = vand.u32 %v1156, 4294901760
  %1395 = vmatpush.msra.mxu0 %v1394
  %v1396 = vand.u32 %v1155, 4294901760
  %1397 = vmatpush.msra.mxu0 %v1396
  %v1398 = vand.u32 %v1154, 4294901760
  %1399 = vmatpush.msra.mxu0 %v1398
  %v1400 = vand.u32 %v1153, 4294901760
  %1401 = vmatpush.msra.mxu0 %v1400
  %v1402 = vand.u32 %v1152, 4294901760
  %1403 = vmatpush.msra.mxu0 %v1402
  %v1404 = vand.u32 %v1151, 4294901760
  %1405 = vmatpush.msra.mxu0 %v1404
  %v1406 = vand.u32 %v1150, 4294901760
  %1407 = vmatpush.msra.mxu0 %v1406
  %v1408 = vand.u32 %v1149, 4294901760
  %1409 = vmatpush.msra.mxu0 %v1408
  %v1410 = vand.u32 %v935, 4294901760
  %v1411 = vsub.f32 %v935, %v1410
  %v1412 = vand.u32 %v1411, 4294901760
  %1413 = vmatmul.f32.gmra.mxu0 %v1412
  %v1414 = vpop.f32.mrf.mxu0
  %v1415 = vadd.f32 %v1371, %v1414
  %v1416 = vand.u32 %v936, 4294901760
  %v1417 = vsub.f32 %v936, %v1416
  %v1418 = vand.u32 %v1417, 4294901760
  %1419 = vmatmul.f32.gmra.mxu0 %v1418
  %v1420 = vpop.f32.mrf.mxu0
  %v1421 = vadd.f32 %v1376, %v1420
  %1422 = vdwg.mxu0
  %v1423 = vand.u32 %v1164, 4294901760
  %v1424 = vsub.f32 %v1164, %v1423
  %v1425 = vand.u32 %v1424, 4294901760
  %1426 = vmatpush.msra.mxu0 %v1425
  %v1427 = vand.u32 %v1163, 4294901760
  %v1428 = vsub.f32 %v1163, %v1427
  %v1429 = vand.u32 %v1428, 4294901760
  %1430 = vmatpush.msra.mxu0 %v1429
  %v1431 = vand.u32 %v1162, 4294901760
  %v1432 = vsub.f32 %v1162, %v1431
  %v1433 = vand.u32 %v1432, 4294901760
  %1434 = vmatpush.msra.mxu0 %v1433
  %v1435 = vand.u32 %v1161, 4294901760
  %v1436 = vsub.f32 %v1161, %v1435
  %v1437 = vand.u32 %v1436, 4294901760
  %1438 = vmatpush.msra.mxu0 %v1437
  %v1439 = vand.u32 %v1160, 4294901760
  %v1440 = vsub.f32 %v1160, %v1439
  %v1441 = vand.u32 %v1440, 4294901760
  %1442 = vmatpush.msra.mxu0 %v1441
  %v1443 = vand.u32 %v1159, 4294901760
  %v1444 = vsub.f32 %v1159, %v1443
  %v1445 = vand.u32 %v1444, 4294901760
  %1446 = vmatpush.msra.mxu0 %v1445
  %v1447 = vand.u32 %v1158, 4294901760
  %v1448 = vsub.f32 %v1158, %v1447
  %v1449 = vand.u32 %v1448, 4294901760
  %1450 = vmatpush.msra.mxu0 %v1449
  %v1451 = vand.u32 %v1157, 4294901760
  %v1452 = vsub.f32 %v1157, %v1451
  %v1453 = vand.u32 %v1452, 4294901760
  %1454 = vmatpush.msra.mxu0 %v1453
  %v1455 = vand.u32 %v1156, 4294901760
  %v1456 = vsub.f32 %v1156, %v1455
  %v1457 = vand.u32 %v1456, 4294901760
  %1458 = vmatpush.msra.mxu0 %v1457
  %v1459 = vand.u32 %v1155, 4294901760
  %v1460 = vsub.f32 %v1155, %v1459
  %v1461 = vand.u32 %v1460, 4294901760
  %1462 = vmatpush.msra.mxu0 %v1461
  %v1463 = vand.u32 %v1154, 4294901760
  %v1464 = vsub.f32 %v1154, %v1463
  %v1465 = vand.u32 %v1464, 4294901760
  %1466 = vmatpush.msra.mxu0 %v1465
  %v1467 = vand.u32 %v1153, 4294901760
  %v1468 = vsub.f32 %v1153, %v1467
  %v1469 = vand.u32 %v1468, 4294901760
  %1470 = vmatpush.msra.mxu0 %v1469
  %v1471 = vand.u32 %v1152, 4294901760
  %v1472 = vsub.f32 %v1152, %v1471
  %v1473 = vand.u32 %v1472, 4294901760
  %1474 = vmatpush.msra.mxu0 %v1473
  %v1475 = vand.u32 %v1151, 4294901760
  %v1476 = vsub.f32 %v1151, %v1475
  %v1477 = vand.u32 %v1476, 4294901760
  %1478 = vmatpush.msra.mxu0 %v1477
  %v1479 = vand.u32 %v1150, 4294901760
  %v1480 = vsub.f32 %v1150, %v1479
  %v1481 = vand.u32 %v1480, 4294901760
  %1482 = vmatpush.msra.mxu0 %v1481
  %v1483 = vand.u32 %v1149, 4294901760
  %v1484 = vsub.f32 %v1149, %v1483
  %v1485 = vand.u32 %v1484, 4294901760
  %1486 = vmatpush.msra.mxu0 %v1485
  %v1487 = vand.u32 %v935, 4294901760
  %1488 = vmatmul.f32.gmra.mxu0 %v1487
  %v1489 = vpop.f32.mrf.mxu0
  %v1490 = vadd.f32 %v1415, %v1489
  %v1491 = vand.u32 %v936, 4294901760
  %1492 = vmatmul.f32.gmra.mxu0 %v1491
  %v1493 = vpop.f32.mrf.mxu0
  %v1494 = vadd.f32 %v1421, %v1493
  %1495 = vdwg.mxu0
  %v1496 = vand.u32 %v1164, 4294901760
  %1497 = vmatpush.msra.mxu0 %v1496
  %v1498 = vand.u32 %v1163, 4294901760
  %1499 = vmatpush.msra.mxu0 %v1498
  %v1500 = vand.u32 %v1162, 4294901760
  %1501 = vmatpush.msra.mxu0 %v1500
  %v1502 = vand.u32 %v1161, 4294901760
  %1503 = vmatpush.msra.mxu0 %v1502
  %v1504 = vand.u32 %v1160, 4294901760
  %1505 = vmatpush.msra.mxu0 %v1504
  %v1506 = vand.u32 %v1159, 4294901760
  %1507 = vmatpush.msra.mxu0 %v1506
  %v1508 = vand.u32 %v1158, 4294901760
  %1509 = vmatpush.msra.mxu0 %v1508
  %v1510 = vand.u32 %v1157, 4294901760
  %1511 = vmatpush.msra.mxu0 %v1510
  %v1512 = vand.u32 %v1156, 4294901760
  %1513 = vmatpush.msra.mxu0 %v1512
  %v1514 = vand.u32 %v1155, 4294901760
  %1515 = vmatpush.msra.mxu0 %v1514
  %v1516 = vand.u32 %v1154, 4294901760
  %1517 = vmatpush.msra.mxu0 %v1516
  %v1518 = vand.u32 %v1153, 4294901760
  %1519 = vmatpush.msra.mxu0 %v1518
  %v1520 = vand.u32 %v1152, 4294901760
  %1521 = vmatpush.msra.mxu0 %v1520
  %v1522 = vand.u32 %v1151, 4294901760
  %1523 = vmatpush.msra.mxu0 %v1522
  %v1524 = vand.u32 %v1150, 4294901760
  %1525 = vmatpush.msra.mxu0 %v1524
  %v1526 = vand.u32 %v1149, 4294901760
  %1527 = vmatpush.msra.mxu0 %v1526
  %v1528 = vand.u32 %v935, 4294901760
  %1529 = vmatmul.f32.gmra.mxu0 %v1528
  %v1530 = vpop.f32.mrf.mxu0
  %v1531 = vadd.f32 %v1490, %v1530
  %v1532 = vand.u32 %v936, 4294901760
  %1533 = vmatmul.f32.gmra.mxu0 %v1532
  %v1534 = vpop.f32.mrf.mxu0
  %v1535 = vadd.f32 %v1494, %v1534
  %1536 = vdwg.mxu0
  %v1537 = vadd.f32 %v1147, %v1531
  %v1538 = vadd.f32 %v1148, %v1535
  %vm1539 = vcmask 7168
  %1540 = vst.msk [vmem:[%s6] sm:$0xff] %vm1539, %v1537
  %1541 = vst.msk [vmem:[%s6 + $0x8] sm:$0xff] %vm1539, %v1538
  // Predicated region
  $region18: #{svgp_forward.4} parent=0 // pred_check
    %p1542 = pneg %p937
  $region19: #{svgp_forward.4} parent=0 // pred_check_branch
    %1544 = sbr.rel (%p1542) target = $region21
  $region20: #{svgp_forward.4} parent=0 // pred_region
    %v1546 = vsel %vm68, %v66, 0
    %v1549 = vsel %vm68, %v67, 0
    %1551 = vmatpush.xpose.msra.mxu0 0.0
    %1552 = vmatpush.xpose.msra.mxu0 0.0
    %1553 = vmatpush.xpose.msra.mxu0 0.0
    %1554 = vmatpush.xpose.msra.mxu0 0.0
    %1555 = vmatpush.xpose.msra.mxu0 0.0
    %1556 = vmatpush.xpose.msra.mxu0 0.0
    %1557 = vmatpush.xpose.msra.mxu0 0.0
    %1558 = vmatpush.xpose.msra.mxu0 0.0
    %1559 = vmatpush.xpose.msra.mxu0 0.0
    %1560 = vmatpush.xpose.msra.mxu0 0.0
    %1561 = vmatpush.xpose.msra.mxu0 0.0
    %1562 = vmatpush.xpose.msra.mxu0 0.0
    %1563 = vmatpush.xpose.msra.mxu0 0.0
    %1564 = vmatpush.xpose.msra.mxu0 0.0
    %v1565 = vand.u32 %v1549, 4294901760
    %1566 = vmatpush.xpose.msra.mxu0 %v1565
    %v1567 = vand.u32 %v1546, 4294901760
    %1568 = vmatpush.xpose.msra.mxu0 %v1567
    %v1569 = vand.u32 %v92, 4294901760
    %v1570 = vsub.f32 %v92, %v1569
    %v1571 = vand.u32 %v1570, 4294901760
    %v1572 = vsub.f32 %v1570, %v1571
    %v1573 = vand.u32 %v1572, 4294901760
    %1574 = vmatmul.f32.gmra.mxu0 %v1573
    %v1575 = vpop.f32.mrf.mxu0
    %v1576 = vadd.f32 0.0, %v1575
    %1577 = vdwg.mxu0
    %1578 = vmatpush.xpose.msra.mxu0 0.0
    %1579 = vmatpush.xpose.msra.mxu0 0.0
    %1580 = vmatpush.xpose.msra.mxu0 0.0
    %1581 = vmatpush.xpose.msra.mxu0 0.0
    %1582 = vmatpush.xpose.msra.mxu0 0.0
    %1583 = vmatpush.xpose.msra.mxu0 0.0
    %1584 = vmatpush.xpose.msra.mxu0 0.0
    %1585 = vmatpush.xpose.msra.mxu0 0.0
    %1586 = vmatpush.xpose.msra.mxu0 0.0
    %1587 = vmatpush.xpose.msra.mxu0 0.0
    %1588 = vmatpush.xpose.msra.mxu0 0.0
    %1589 = vmatpush.xpose.msra.mxu0 0.0
    %1590 = vmatpush.xpose.msra.mxu0 0.0
    %1591 = vmatpush.xpose.msra.mxu0 0.0
    %v1592 = vand.u32 %v1549, 4294901760
    %v1593 = vsub.f32 %v1549, %v1592
    %v1594 = vand.u32 %v1593, 4294901760
    %v1595 = vsub.f32 %v1593, %v1594
    %v1596 = vand.u32 %v1595, 4294901760
    %1597 = vmatpush.xpose.msra.mxu0 %v1596
    %v1598 = vand.u32 %v1546, 4294901760
    %v1599 = vsub.f32 %v1546, %v1598
    %v1600 = vand.u32 %v1599, 4294901760
    %v1601 = vsub.f32 %v1599, %v1600
    %v1602 = vand.u32 %v1601, 4294901760
    %1603 = vmatpush.xpose.msra.mxu0 %v1602
    %v1604 = vand.u32 %v92, 4294901760
    %1605 = vmatmul.f32.gmra.mxu0 %v1604
    %v1606 = vpop.f32.mrf.mxu0
    %v1607 = vadd.f32 %v1576, %v1606
    %1608 = vdwg.mxu0
    %1609 = vmatpush.xpose.msra.mxu0 0.0
    %1610 = vmatpush.xpose.msra.mxu0 0.0
    %1611 = vmatpush.xpose.msra.mxu0 0.0
    %1612 = vmatpush.xpose.msra.mxu0 0.0
    %1613 = vmatpush.xpose.msra.mxu0 0.0
    %1614 = vmatpush.xpose.msra.mxu0 0.0
    %1615 = vmatpush.xpose.msra.mxu0 0.0
    %1616 = vmatpush.xpose.msra.mxu0 0.0
    %1617 = vmatpush.xpose.msra.mxu0 0.0
    %1618 = vmatpush.xpose.msra.mxu0 0.0
    %1619 = vmatpush.xpose.msra.mxu0 0.0
    %1620 = vmatpush.xpose.msra.mxu0 0.0
    %1621 = vmatpush.xpose.msra.mxu0 0.0
    %1622 = vmatpush.xpose.msra.mxu0 0.0
    %v1623 = vand.u32 %v1549, 4294901760
    %v1624 = vsub.f32 %v1549, %v1623
    %1625 = vmatpush.xpose.msra.mxu0 %v1624
    %v1626 = vand.u32 %v1546, 4294901760
    %v1627 = vsub.f32 %v1546, %v1626
    %1628 = vmatpush.xpose.msra.mxu0 %v1627
    %v1629 = vand.u32 %v92, 4294901760
    %v1630 = vsub.f32 %v92, %v1629
    %1631 = vmatmul.f32.gmra.mxu0 %v1630
    %v1632 = vpop.f32.mrf.mxu0
    %v1633 = vadd.f32 %v1607, %v1632
    %1634 = vdwg.mxu0
    %1635 = vmatpush.xpose.msra.mxu0 0.0
    %1636 = vmatpush.xpose.msra.mxu0 0.0
    %1637 = vmatpush.xpose.msra.mxu0 0.0
    %1638 = vmatpush.xpose.msra.mxu0 0.0
    %1639 = vmatpush.xpose.msra.mxu0 0.0
    %1640 = vmatpush.xpose.msra.mxu0 0.0
    %1641 = vmatpush.xpose.msra.mxu0 0.0
    %1642 = vmatpush.xpose.msra.mxu0 0.0
    %1643 = vmatpush.xpose.msra.mxu0 0.0
    %1644 = vmatpush.xpose.msra.mxu0 0.0
    %1645 = vmatpush.xpose.msra.mxu0 0.0
    %1646 = vmatpush.xpose.msra.mxu0 0.0
    %1647 = vmatpush.xpose.msra.mxu0 0.0
    %1648 = vmatpush.xpose.msra.mxu0 0.0
    %v1649 = vand.u32 %v1549, 4294901760
    %1650 = vmatpush.xpose.msra.mxu0 %v1649
    %v1651 = vand.u32 %v1546, 4294901760
    %1652 = vmatpush.xpose.msra.mxu0 %v1651
    %v1653 = vand.u32 %v92, 4294901760
    %v1654 = vsub.f32 %v92, %v1653
    %v1655 = vand.u32 %v1654, 4294901760
    %1656 = vmatmul.f32.gmra.mxu0 %v1655
    %v1657 = vpop.f32.mrf.mxu0
    %v1658 = vadd.f32 %v1633, %v1657
    %1659 = vdwg.mxu0
    %1660 = vmatpush.xpose.msra.mxu0 0.0
    %1661 = vmatpush.xpose.msra.mxu0 0.0
    %1662 = vmatpush.xpose.msra.mxu0 0.0
    %1663 = vmatpush.xpose.msra.mxu0 0.0
    %1664 = vmatpush.xpose.msra.mxu0 0.0
    %1665 = vmatpush.xpose.msra.mxu0 0.0
    %1666 = vmatpush.xpose.msra.mxu0 0.0
    %1667 = vmatpush.xpose.msra.mxu0 0.0
    %1668 = vmatpush.xpose.msra.mxu0 0.0
    %1669 = vmatpush.xpose.msra.mxu0 0.0
    %1670 = vmatpush.xpose.msra.mxu0 0.0
    %1671 = vmatpush.xpose.msra.mxu0 0.0
    %1672 = vmatpush.xpose.msra.mxu0 0.0
    %1673 = vmatpush.xpose.msra.mxu0 0.0
    %v1674 = vand.u32 %v1549, 4294901760
    %v1675 = vsub.f32 %v1549, %v1674
    %v1676 = vand.u32 %v1675, 4294901760
    %1677 = vmatpush.xpose.msra.mxu0 %v1676
    %v1678 = vand.u32 %v1546, 4294901760
    %v1679 = vsub.f32 %v1546, %v1678
    %v1680 = vand.u32 %v1679, 4294901760
    %1681 = vmatpush.xpose.msra.mxu0 %v1680
    %v1682 = vand.u32 %v92, 4294901760
    %1683 = vmatmul.f32.gmra.mxu0 %v1682
    %v1684 = vpop.f32.mrf.mxu0
    %v1685 = vadd.f32 %v1658, %v1684
    %1686 = vdwg.mxu0
    %1687 = vmatpush.xpose.msra.mxu0 0.0
    %1688 = vmatpush.xpose.msra.mxu0 0.0
    %1689 = vmatpush.xpose.msra.mxu0 0.0
    %1690 = vmatpush.xpose.msra.mxu0 0.0
    %1691 = vmatpush.xpose.msra.mxu0 0.0
    %1692 = vmatpush.xpose.msra.mxu0 0.0
    %1693 = vmatpush.xpose.msra.mxu0 0.0
    %1694 = vmatpush.xpose.msra.mxu0 0.0
    %1695 = vmatpush.xpose.msra.mxu0 0.0
    %1696 = vmatpush.xpose.msra.mxu0 0.0
    %1697 = vmatpush.xpose.msra.mxu0 0.0
    %1698 = vmatpush.xpose.msra.mxu0 0.0
    %1699 = vmatpush.xpose.msra.mxu0 0.0
    %1700 = vmatpush.xpose.msra.mxu0 0.0
    %v1701 = vand.u32 %v1549, 4294901760
    %1702 = vmatpush.xpose.msra.mxu0 %v1701
    %v1703 = vand.u32 %v1546, 4294901760
    %1704 = vmatpush.xpose.msra.mxu0 %v1703
    %v1705 = vand.u32 %v92, 4294901760
    %1706 = vmatmul.f32.gmra.mxu0 %v1705
    %v1707 = vpop.f32.mrf.mxu0
    %v1708 = vadd.f32 %v1685, %v1707
    %1709 = vdwg.mxu0
    %v1710 = vperm.slane %v1708, 0
    %v1711 = vadd.f32 %v71, %v1710
    %v1712 = vadd.f32 %v74, %v1710
    %1713 = vmatpush.xpose.msra.mxu0 0.0
    %1714 = vmatpush.xpose.msra.mxu0 0.0
    %1715 = vmatpush.xpose.msra.mxu0 0.0
    %1716 = vmatpush.xpose.msra.mxu0 0.0
    %1717 = vmatpush.xpose.msra.mxu0 0.0
    %1718 = vmatpush.xpose.msra.mxu0 0.0
    %1719 = vmatpush.xpose.msra.mxu0 0.0
    %1720 = vmatpush.xpose.msra.mxu0 0.0
    %1721 = vmatpush.xpose.msra.mxu0 0.0
    %1722 = vmatpush.xpose.msra.mxu0 0.0
    %1723 = vmatpush.xpose.msra.mxu0 0.0
    %1724 = vmatpush.xpose.msra.mxu0 0.0
    %1725 = vmatpush.xpose.msra.mxu0 0.0
    %1726 = vmatpush.xpose.msra.mxu0 0.0
    %v1727 = vand.u32 %v490, 4294901760
    %1728 = vmatpush.xpose.msra.mxu0 %v1727
    %v1729 = vand.u32 %v487, 4294901760
    %1730 = vmatpush.xpose.msra.mxu0 %v1729
    %v1731 = vand.u32 %v487, 4294901760
    %v1732 = vsub.f32 %v487, %v1731
    %v1733 = vand.u32 %v1732, 4294901760
    %v1734 = vsub.f32 %v1732, %v1733
    %v1735 = vand.u32 %v1734, 4294901760
    %1736 = vmatmul.f32.gmra.mxu0 %v1735
    %v1737 = vpop.f32.mrf.mxu0
    %v1738 = vadd.f32 0.0, %v1737
    %v1739 = vand.u32 %v490, 4294901760
    %v1740 = vsub.f32 %v490, %v1739
    %v1741 = vand.u32 %v1740, 4294901760
    %v1742 = vsub.f32 %v1740, %v1741
    %v1743 = vand.u32 %v1742, 4294901760
    %1744 = vmatmul.f32.gmra.mxu0 %v1743
    %v1745 = vpop.f32.mrf.mxu0
    %v1746 = vadd.f32 0.0, %v1745
    %1747 = vdwg.mxu0
    %1748 = vmatpush.xpose.msra.mxu0 0.0
    %1749 = vmatpush.xpose.msra.mxu0 0.0
    %1750 = vmatpush.xpose.msra.mxu0 0.0
    %1751 = vmatpush.xpose.msra.mxu0 0.0
    %1752 = vmatpush.xpose.msra.mxu0 0.0
    %1753 = vmatpush.xpose.msra.mxu0 0.0
    %1754 = vmatpush.xpose.msra.mxu0 0.0
    %1755 = vmatpush.xpose.msra.mxu0 0.0
    %1756 = vmatpush.xpose.msra.mxu0 0.0
    %1757 = vmatpush.xpose.msra.mxu0 0.0
    %1758 = vmatpush.xpose.msra.mxu0 0.0
    %1759 = vmatpush.xpose.msra.mxu0 0.0
    %1760 = vmatpush.xpose.msra.mxu0 0.0
    %1761 = vmatpush.xpose.msra.mxu0 0.0
    %v1762 = vand.u32 %v490, 4294901760
    %v1763 = vsub.f32 %v490, %v1762
    %v1764 = vand.u32 %v1763, 4294901760
    %v1765 = vsub.f32 %v1763, %v1764
    %v1766 = vand.u32 %v1765, 4294901760
    %1767 = vmatpush.xpose.msra.mxu0 %v1766
    %v1768 = vand.u32 %v487, 4294901760
    %v1769 = vsub.f32 %v487, %v1768
    %v1770 = vand.u32 %v1769, 4294901760
    %v1771 = vsub.f32 %v1769, %v1770
    %v1772 = vand.u32 %v1771, 4294901760
    %1773 = vmatpush.xpose.msra.mxu0 %v1772
    %v1774 = vand.u32 %v487, 4294901760
    %1775 = vmatmul.f32.gmra.mxu0 %v1774
    %v1776 = vpop.f32.mrf.mxu0
    %v1777 = vadd.f32 %v1738, %v1776
    %v1778 = vand.u32 %v490, 4294901760
    %1779 = vmatmul.f32.gmra.mxu0 %v1778
    %v1780 = vpop.f32.mrf.mxu0
    %v1781 = vadd.f32 %v1746, %v1780
    %1782 = vdwg.mxu0
    %1783 = vmatpush.xpose.msra.mxu0 0.0
    %1784 = vmatpush.xpose.msra.mxu0 0.0
    %1785 = vmatpush.xpose.msra.mxu0 0.0
    %1786 = vmatpush.xpose.msra.mxu0 0.0
    %1787 = vmatpush.xpose.msra.mxu0 0.0
    %1788 = vmatpush.xpose.msra.mxu0 0.0
    %1789 = vmatpush.xpose.msra.mxu0 0.0
    %1790 = vmatpush.xpose.msra.mxu0 0.0
    %1791 = vmatpush.xpose.msra.mxu0 0.0
    %1792 = vmatpush.xpose.msra.mxu0 0.0
    %1793 = vmatpush.xpose.msra.mxu0 0.0
    %1794 = vmatpush.xpose.msra.mxu0 0.0
    %1795 = vmatpush.xpose.msra.mxu0 0.0
    %1796 = vmatpush.xpose.msra.mxu0 0.0
    %v1797 = vand.u32 %v490, 4294901760
    %v1798 = vsub.f32 %v490, %v1797
    %1799 = vmatpush.xpose.msra.mxu0 %v1798
    %v1800 = vand.u32 %v487, 4294901760
    %v1801 = vsub.f32 %v487, %v1800
    %1802 = vmatpush.xpose.msra.mxu0 %v1801
    %v1803 = vand.u32 %v487, 4294901760
    %v1804 = vsub.f32 %v487, %v1803
    %1805 = vmatmul.f32.gmra.mxu0 %v1804
    %v1806 = vpop.f32.mrf.mxu0
    %v1807 = vadd.f32 %v1777, %v1806
    %v1808 = vand.u32 %v490, 4294901760
    %v1809 = vsub.f32 %v490, %v1808
    %1810 = vmatmul.f32.gmra.mxu0 %v1809
    %v1811 = vpop.f32.mrf.mxu0
    %v1812 = vadd.f32 %v1781, %v1811
    %1813 = vdwg.mxu0
    %1814 = vmatpush.xpose.msra.mxu0 0.0
    %1815 = vmatpush.xpose.msra.mxu0 0.0
    %1816 = vmatpush.xpose.msra.mxu0 0.0
    %1817 = vmatpush.xpose.msra.mxu0 0.0
    %1818 = vmatpush.xpose.msra.mxu0 0.0
    %1819 = vmatpush.xpose.msra.mxu0 0.0
    %1820 = vmatpush.xpose.msra.mxu0 0.0
    %1821 = vmatpush.xpose.msra.mxu0 0.0
    %1822 = vmatpush.xpose.msra.mxu0 0.0
    %1823 = vmatpush.xpose.msra.mxu0 0.0
    %1824 = vmatpush.xpose.msra.mxu0 0.0
    %1825 = vmatpush.xpose.msra.mxu0 0.0
    %1826 = vmatpush.xpose.msra.mxu0 0.0
    %1827 = vmatpush.xpose.msra.mxu0 0.0
    %v1828 = vand.u32 %v490, 4294901760
    %1829 = vmatpush.xpose.msra.mxu0 %v1828
    %v1830 = vand.u32 %v487, 4294901760
    %1831 = vmatpush.xpose.msra.mxu0 %v1830
    %v1832 = vand.u32 %v487, 4294901760
    %v1833 = vsub.f32 %v487, %v1832
    %v1834 = vand.u32 %v1833, 4294901760
    %1835 = vmatmul.f32.gmra.mxu0 %v1834
    %v1836 = vpop.f32.mrf.mxu0
    %v1837 = vadd.f32 %v1807, %v1836
    %v1838 = vand.u32 %v490, 4294901760
    %v1839 = vsub.f32 %v490, %v1838
    %v1840 = vand.u32 %v1839, 4294901760
    %1841 = vmatmul.f32.gmra.mxu0 %v1840
    %v1842 = vpop.f32.mrf.mxu0
    %v1843 = vadd.f32 %v1812, %v1842
    %1844 = vdwg.mxu0
    %1845 = vmatpush.xpose.msra.mxu0 0.0
    %1846 = vmatpush.xpose.msra.mxu0 0.0
    %1847 = vmatpush.xpose.msra.mxu0 0.0
    %1848 = vmatpush.xpose.msra.mxu0 0.0
    %1849 = vmatpush.xpose.msra.mxu0 0.0
    %1850 = vmatpush.xpose.msra.mxu0 0.0
    %1851 = vmatpush.xpose.msra.mxu0 0.0
    %1852 = vmatpush.xpose.msra.mxu0 0.0
    %1853 = vmatpush.xpose.msra.mxu0 0.0
    %1854 = vmatpush.xpose.msra.mxu0 0.0
    %1855 = vmatpush.xpose.msra.mxu0 0.0
    %1856 = vmatpush.xpose.msra.mxu0 0.0
    %1857 = vmatpush.xpose.msra.mxu0 0.0
    %1858 = vmatpush.xpose.msra.mxu0 0.0
    %v1859 = vand.u32 %v490, 4294901760
    %v1860 = vsub.f32 %v490, %v1859
    %v1861 = vand.u32 %v1860, 4294901760
    %1862 = vmatpush.xpose.msra.mxu0 %v1861
    %v1863 = vand.u32 %v487, 4294901760
    %v1864 = vsub.f32 %v487, %v1863
    %v1865 = vand.u32 %v1864, 4294901760
    %1866 = vmatpush.xpose.msra.mxu0 %v1865
    %v1867 = vand.u32 %v487, 4294901760
    %1868 = vmatmul.f32.gmra.mxu0 %v1867
    %v1869 = vpop.f32.mrf.mxu0
    %v1870 = vadd.f32 %v1837, %v1869
    %v1871 = vand.u32 %v490, 4294901760
    %1872 = vmatmul.f32.gmra.mxu0 %v1871
    %v1873 = vpop.f32.mrf.mxu0
    %v1874 = vadd.f32 %v1843, %v1873
    %1875 = vdwg.mxu0
    %1876 = vmatpush.xpose.msra.mxu0 0.0
    %1877 = vmatpush.xpose.msra.mxu0 0.0
    %1878 = vmatpush.xpose.msra.mxu0 0.0
    %1879 = vmatpush.xpose.msra.mxu0 0.0
    %1880 = vmatpush.xpose.msra.mxu0 0.0
    %1881 = vmatpush.xpose.msra.mxu0 0.0
    %1882 = vmatpush.xpose.msra.mxu0 0.0
    %1883 = vmatpush.xpose.msra.mxu0 0.0
    %1884 = vmatpush.xpose.msra.mxu0 0.0
    %1885 = vmatpush.xpose.msra.mxu0 0.0
    %1886 = vmatpush.xpose.msra.mxu0 0.0
    %1887 = vmatpush.xpose.msra.mxu0 0.0
    %1888 = vmatpush.xpose.msra.mxu0 0.0
    %1889 = vmatpush.xpose.msra.mxu0 0.0
    %v1890 = vand.u32 %v490, 4294901760
    %1891 = vmatpush.xpose.msra.mxu0 %v1890
    %v1892 = vand.u32 %v487, 4294901760
    %1893 = vmatpush.xpose.msra.mxu0 %v1892
    %v1894 = vand.u32 %v487, 4294901760
    %1895 = vmatmul.f32.gmra.mxu0 %v1894
    %v1896 = vpop.f32.mrf.mxu0
    %v1897 = vadd.f32 %v1870, %v1896
    %v1898 = vand.u32 %v490, 4294901760
    %1899 = vmatmul.f32.gmra.mxu0 %v1898
    %v1900 = vpop.f32.mrf.mxu0
    %v1901 = vadd.f32 %v1874, %v1900
    %1902 = vdwg.mxu0
    %v1903 = vmul.f32 %v1897, 2.0
    %v1904 = vmul.f32 %v1901, 2.0
    %v1905 = vsub.f32 %v1711, %v1903
    %v1906 = vsub.f32 %v1712, %v1904
    %v1907 = vmax.f32 %v1905, 0.0
    %v1908 = vmax.f32 %v1906, 0.0
    %v1909 = vsub.f32 0.0, %v1907
    %v1910 = vsub.f32 0.0, %v1908
    %v1911 = vmul.f32 %v1909, 1.442695
    %v1912 = vpow.pop %v1911
    %v1913 = vmul.f32 %v1910, 1.442695
    %v1914 = vpow.pop %v1913
    %v1915 = vmul.f32 %v924, %v1912
    %v1916 = vmul.f32 %v924, %v1914
    %1917 = vst.msk [vmem:[%s4] sm:$0xff] %vm1144, %v1915
    %1918 = vst.msk [vmem:[%s4 + $0x8] sm:$0xff] %vm1144, %v1916
    %v1919 = vld [vmem:[%s5] sm:$0xff]
    %v1920 = vld [vmem:[%s5 + $0x8] sm:$0xff]
    %v1921 = vlaneseq
    %v1922 = vshrl.u32 %v1921, 7
    %v1923 = vadd.s32 %v1922, 8
    %vm1924 = vcmp.eq.s32.totalorder %v1922, %v929
    %vm1925 = vcmp.eq.s32.totalorder %v1923, %v929
    %v1926 = vsel %vm1924, 1, 0
    %v1927 = vsel %vm1925, 1, 0
    %v1928 = vcvt.s32.f32 %v1926
    %v1929 = vcvt.s32.f32 %v1927
    %v1930 = vmul.f32 %v1928, 0.0001
    %v1931 = vmul.f32 %v1929, 0.0001
    %v1932 = vadd.f32 %v1915, %v1930
    %v1933 = vadd.f32 %v1916, %v1931
    %v1934 = vadd.f32 %v1919, %v1932
    %v1935 = vadd.f32 %v1920, %v1933
    %1936 = vst.msk [vmem:[%s5] sm:$0xff] %vm1144, %v1934
    %1937 = vst.msk [vmem:[%s5 + $0x8] sm:$0xff] %vm1144, %v1935
  $region21: #{svgp_forward.4} parent=0 // pred_fallthru
    _
  // Predicated region
  $region22: #{svgp_forward.4} parent=0 // pred_check
    _
  $region23: #{svgp_forward.4} parent=0 // pred_check_branch
    %1939 = sbr.rel (0) target = $region25
  $region24: #{svgp_forward.4} parent=0 // pred_region
    _
  $region25: #{svgp_forward.4} parent=0 // pred_fallthru
    _
  // Predicated region
  $region26: #{svgp_forward.4} parent=0 // pred_check
    _
  $region27: #{svgp_forward.4} parent=0 // pred_check_branch
    %1941 = sbr.rel (0) target = $region29
  $region28: #{svgp_forward.4} parent=0 // pred_region
    _
  $region29: #{svgp_forward.4} parent=0 // pred_fallthru
    _
  // Predicated region
  $region30: #{svgp_forward.4} parent=0 // pred_check
    _
  $region31: #{svgp_forward.4} parent=0 // pred_check_branch
    %1943 = sbr.rel (0) target = $region33
  $region32: #{svgp_forward.4} parent=0 // pred_region
    _
  $region33: #{svgp_forward.4} parent=0 // pred_fallthru
    _
  // Predicated region
  $region34: #{svgp_forward.4} parent=0 // pred_check
    _
  $region35: #{svgp_forward.4} parent=0 // pred_check_branch
    %1945 = sbr.rel (0) target = $region37
  $region36: #{svgp_forward.4} parent=0 // pred_region
    _
  $region37: #{svgp_forward.4} parent=0 // pred_fallthru
    _
  // Predicated region
  $region38: #{svgp_forward.4} parent=0 // pred_check
    _
  $region39: #{svgp_forward.4} parent=0 // pred_check_branch
    %1947 = sbr.rel (0) target = $region41
  $region40: #{svgp_forward.4} parent=0 // pred_region
    _
  $region41: #{svgp_forward.4} parent=0 // pred_fallthru
    _
  // Predicated region
  $region42: #{svgp_forward.4} parent=0 // pred_check
    _
  $region43: #{svgp_forward.4} parent=0 // pred_check_branch
    %1949 = sbr.rel (0) target = $region45
  $region44: #{svgp_forward.4} parent=0 // pred_region
    _
  $region45: #{svgp_forward.4} parent=0 // pred_fallthru
    _

// kernel: svgp_forward.6
$region0: #{svgp_forward.6}
  #allocation0 [shape = 'u32[]', space=smem, size = 0x4, offset = 0x4, fixed_abs, tag = 'smem constant byte address 0x4 - core index']
  #allocation1 [shape = 'u32[72,128]{1,0:T(1,128)}', space=vmem, size = 0x9000, scoped, tag = 'internal scratch']
  %s0 = inlined_call_operand.vmem [shape: f32[4], index: 0, kind: input, shape index: {}]
  %s1 = inlined_call_operand.vmem [shape: f32[16,16], index: 1, kind: input, shape index: {}]
  %s2 = inlined_call_operand.vmem [shape: f32[16,16], index: 2, kind: input, shape index: {}]
  %s3 = inlined_call_operand.vmem [shape: f32[16,1], index: 3, kind: input, shape index: {}]
  %s4 = inlined_call_operand.vmem [shape: f32[16,16], index: 4, kind: output, shape index: {0}]
  %s5 = inlined_call_operand.vmem [shape: f32[16,1], index: 5, kind: output, shape index: {1}]
  %6 = xla_tuple %s4, %s5
  %s7 = sld [smem:[#allocation0]]
  $region38: #{svgp_forward.6} parent=0
    _
  %s9 = ssub.s32 1, %s7
  %s10 = scalar_select 0, %s9, %s7
  $region1: #{svgp_forward.6} parent=0
    #allocation2 [shape = 'u8[512]{0}', space=smem, size = 0x200, scoped, tag = 'input window, operand 0, single buffered']
    #allocation3 [shape = 's32[1]{0}', space=sflag, size = 0x4, scoped, tag = 'scoped memory for svgp_forward.6']
    %11 = vsyncpa [#allocation3], 0
    // Predicated region
    $region2: #{svgp_forward.6} parent=1 // pred_check
      _
    $region3: #{svgp_forward.6} parent=1 // pred_check_branch
      %13 = sbr.rel (0) target = $region5
    $region4: #{svgp_forward.6} parent=1 // pred_region
      %15 = vsyncadd [#allocation3], 0
      %s17 = sshll.u32 %s0, 4
      %s18 = int_to_ptr.vmem [resolvable:$true] %s17
      %20 = dma.vmem_to_smem %s18, 16, [#allocation2], [#allocation3]
    $region5: #{svgp_forward.6} parent=1 // pred_fallthru
      _
    // Predicated region
    $region6: #{svgp_forward.6} parent=1 // pred_check
      _
    $region7: #{svgp_forward.6} parent=1 // pred_check_branch
      %22 = sbr.rel (0) target = $region9
    $region8: #{svgp_forward.6} parent=1 // pred_region
      _
    $region9: #{svgp_forward.6} parent=1 // pred_fallthru
      _
    // Predicated region
    $region10: #{svgp_forward.6} parent=1 // pred_check
      _
    $region11: #{svgp_forward.6} parent=1 // pred_check_branch
      %24 = sbr.rel (0) target = $region13
    $region12: #{svgp_forward.6} parent=1 // pred_region
      _
    $region13: #{svgp_forward.6} parent=1 // pred_fallthru
      _
    // Predicated region
    $region14: #{svgp_forward.6} parent=1 // pred_check
      _
    $region15: #{svgp_forward.6} parent=1 // pred_check_branch
      %26 = sbr.rel (0) target = $region17
    $region16: #{svgp_forward.6} parent=1 // pred_region
      _
    $region17: #{svgp_forward.6} parent=1 // pred_fallthru
      _
    // Predicated region
    $region18: #{svgp_forward.6} parent=1 // pred_check
      _
    $region19: #{svgp_forward.6} parent=1 // pred_check_branch
      %28 = sbr.rel (0) target = $region21
    $region20: #{svgp_forward.6} parent=1 // pred_region
      %30 = dma.done [#allocation3], 16
    $region21: #{svgp_forward.6} parent=1 // pred_fallthru
      _
    %31 = sfence
    %s32 = sld [smem:[#allocation2 + $0x2]]
    %v33 = vld [vmem:[%s2] sm:$0xff]
    %v34 = vld [vmem:[%s2 + $0x8] sm:$0xff]
    %v35 = vld [vmem:[%s1] sm:$0xff]
    %v36 = vld [vmem:[%s1 + $0x8] sm:$0xff]
    %37 = vxpose.xlu0.b32.start [1/16] %v33, 128
    %38 = vxpose.xlu0.b32.cont [2/16] %v34, 128
    %39 = vxpose.xlu0.b32.cont [3/16] 0.0, 128
    %40 = vxpose.xlu0.b32.cont [4/16] 0.0, 128
    %41 = vxpose.xlu0.b32.cont [5/16] 0.0, 128
    %42 = vxpose.xlu0.b32.cont [6/16] 0.0, 128
    %43 = vxpose.xlu0.b32.cont [7/16] 0.0, 128
    %44 = vxpose.xlu0.b32.cont [8/16] 0.0, 128
    %45 = vxpose.xlu0.b32.cont [9/16] 0.0, 128
    %46 = vxpose.xlu0.b32.cont [10/16] 0.0, 128
    %47 = vxpose.xlu0.b32.cont [11/16] 0.0, 128
    %48 = vxpose.xlu0.b32.cont [12/16] 0.0, 128
    %49 = vxpose.xlu0.b32.cont [13/16] 0.0, 128
    %50 = vxpose.xlu0.b32.cont [14/16] 0.0, 128
    %51 = vxpose.xlu0.b32.cont [15/16] 0.0, 128
    %52 = vxpose.xlu0.b32.end [16/16] 0.0, 128
    %v53 = vpop.trf.xlu0
    %v54 = vpop.trf.xlu0
    %v55 = vpop.trf.xlu0
    %v56 = vpop.trf.xlu0
    %v57 = vpop.trf.xlu0
    %v58 = vpop.trf.xlu0
    %v59 = vpop.trf.xlu0
    %v60 = vpop.trf.xlu0
    %v61 = vpop.trf.xlu0
    %v62 = vpop.trf.xlu0
    %v63 = vpop.trf.xlu0
    %v64 = vpop.trf.xlu0
    %v65 = vpop.trf.xlu0
    %v66 = vpop.trf.xlu0
    %v67 = vpop.trf.xlu0
    %v68 = vpop.trf.xlu0
    %vm69 = vcmask 130048
    %v71 = vsel %vm69, %v53, 0
    %v74 = vsel %vm69, %v54, 0
    %76 = vmatpush.msra.mxu0 0.0
    %77 = vmatpush.msra.mxu0 0.0
    %78 = vmatpush.msra.mxu0 0.0
    %79 = vmatpush.msra.mxu0 0.0
    %80 = vmatpush.msra.mxu0 0.0
    %81 = vmatpush.msra.mxu0 0.0
    %82 = vmatpush.msra.mxu0 0.0
    %83 = vmatpush.msra.mxu0 0.0
    %84 = vmatpush.msra.mxu0 0.0
    %85 = vmatpush.msra.mxu0 0.0
    %86 = vmatpush.msra.mxu0 0.0
    %87 = vmatpush.msra.mxu0 0.0
    %88 = vmatpush.msra.mxu0 0.0
    %89 = vmatpush.msra.mxu0 0.0
    %v90 = vand.u32 %v34, 4294901760
    %91 = vmatpush.msra.mxu0 %v90
    %v92 = vand.u32 %v33, 4294901760
    %93 = vmatpush.msra.mxu0 %v92
    %v94 = vand.u32 %v71, 4294901760
    %v95 = vsub.f32 %v71, %v94
    %v96 = vand.u32 %v95, 4294901760
    %v97 = vsub.f32 %v95, %v96
    %v98 = vand.u32 %v97, 4294901760
    %99 = vmatmul.f32.gmra.mxu0 %v98
    %v100 = vpop.f32.mrf.mxu0
    %v101 = vadd.f32 0.0, %v100
    %v102 = vand.u32 %v74, 4294901760
    %v103 = vsub.f32 %v74, %v102
    %v104 = vand.u32 %v103, 4294901760
    %v105 = vsub.f32 %v103, %v104
    %v106 = vand.u32 %v105, 4294901760
    %107 = vmatmul.f32.gmra.mxu0 %v106
    %v108 = vpop.f32.mrf.mxu0
    %v109 = vadd.f32 0.0, %v108
    %110 = vdwg.mxu0
    %111 = vmatpush.msra.mxu0 0.0
    %112 = vmatpush.msra.mxu0 0.0
    %113 = vmatpush.msra.mxu0 0.0
    %114 = vmatpush.msra.mxu0 0.0
    %115 = vmatpush.msra.mxu0 0.0
    %116 = vmatpush.msra.mxu0 0.0
    %117 = vmatpush.msra.mxu0 0.0
    %118 = vmatpush.msra.mxu0 0.0
    %119 = vmatpush.msra.mxu0 0.0
    %120 = vmatpush.msra.mxu0 0.0
    %121 = vmatpush.msra.mxu0 0.0
    %122 = vmatpush.msra.mxu0 0.0
    %123 = vmatpush.msra.mxu0 0.0
    %124 = vmatpush.msra.mxu0 0.0
    %v125 = vand.u32 %v34, 4294901760
    %v126 = vsub.f32 %v34, %v125
    %v127 = vand.u32 %v126, 4294901760
    %v128 = vsub.f32 %v126, %v127
    %v129 = vand.u32 %v128, 4294901760
    %130 = vmatpush.msra.mxu0 %v129
    %v131 = vand.u32 %v33, 4294901760
    %v132 = vsub.f32 %v33, %v131
    %v133 = vand.u32 %v132, 4294901760
    %v134 = vsub.f32 %v132, %v133
    %v135 = vand.u32 %v134, 4294901760
    %136 = vmatpush.msra.mxu0 %v135
    %v137 = vand.u32 %v71, 4294901760
    %138 = vmatmul.f32.gmra.mxu0 %v137
    %v139 = vpop.f32.mrf.mxu0
    %v140 = vadd.f32 %v101, %v139
    %v141 = vand.u32 %v74, 4294901760
    %142 = vmatmul.f32.gmra.mxu0 %v141
    %v143 = vpop.f32.mrf.mxu0
    %v144 = vadd.f32 %v109, %v143
    %145 = vdwg.mxu0
    %146 = vmatpush.msra.mxu0 0.0
    %147 = vmatpush.msra.mxu0 0.0
    %148 = vmatpush.msra.mxu0 0.0
    %149 = vmatpush.msra.mxu0 0.0
    %150 = vmatpush.msra.mxu0 0.0
    %151 = vmatpush.msra.mxu0 0.0
    %152 = vmatpush.msra.mxu0 0.0
    %153 = vmatpush.msra.mxu0 0.0
    %154 = vmatpush.msra.mxu0 0.0
    %155 = vmatpush.msra.mxu0 0.0
    %156 = vmatpush.msra.mxu0 0.0
    %157 = vmatpush.msra.mxu0 0.0
    %158 = vmatpush.msra.mxu0 0.0
    %159 = vmatpush.msra.mxu0 0.0
    %v160 = vand.u32 %v34, 4294901760
    %v161 = vsub.f32 %v34, %v160
    %162 = vmatpush.msra.mxu0 %v161
    %v163 = vand.u32 %v33, 4294901760
    %v164 = vsub.f32 %v33, %v163
    %165 = vmatpush.msra.mxu0 %v164
    %v166 = vand.u32 %v71, 4294901760
    %v167 = vsub.f32 %v71, %v166
    %168 = vmatmul.f32.gmra.mxu0 %v167
    %v169 = vpop.f32.mrf.mxu0
    %v170 = vadd.f32 %v140, %v169
    %v171 = vand.u32 %v74, 4294901760
    %v172 = vsub.f32 %v74, %v171
    %173 = vmatmul.f32.gmra.mxu0 %v172
    %v174 = vpop.f32.mrf.mxu0
    %v175 = vadd.f32 %v144, %v174
    %176 = vdwg.mxu0
    %177 = vmatpush.msra.mxu0 0.0
    %178 = vmatpush.msra.mxu0 0.0
    %179 = vmatpush.msra.mxu0 0.0
    %180 = vmatpush.msra.mxu0 0.0
    %181 = vmatpush.msra.mxu0 0.0
    %182 = vmatpush.msra.mxu0 0.0
    %183 = vmatpush.msra.mxu0 0.0
    %184 = vmatpush.msra.mxu0 0.0
    %185 = vmatpush.msra.mxu0 0.0
    %186 = vmatpush.msra.mxu0 0.0
    %187 = vmatpush.msra.mxu0 0.0
    %188 = vmatpush.msra.mxu0 0.0
    %189 = vmatpush.msra.mxu0 0.0
    %190 = vmatpush.msra.mxu0 0.0
    %v191 = vand.u32 %v34, 4294901760
    %192 = vmatpush.msra.mxu0 %v191
    %v193 = vand.u32 %v33, 4294901760
    %194 = vmatpush.msra.mxu0 %v193
    %v195 = vand.u32 %v71, 4294901760
    %v196 = vsub.f32 %v71, %v195
    %v197 = vand.u32 %v196, 4294901760
    %198 = vmatmul.f32.gmra.mxu0 %v197
    %v199 = vpop.f32.mrf.mxu0
    %v200 = vadd.f32 %v170, %v199
    %v201 = vand.u32 %v74, 4294901760
    %v202 = vsub.f32 %v74, %v201
    %v203 = vand.u32 %v202, 4294901760
    %204 = vmatmul.f32.gmra.mxu0 %v203
    %v205 = vpop.f32.mrf.mxu0
    %v206 = vadd.f32 %v175, %v205
    %207 = vdwg.mxu0
    %208 = vmatpush.msra.mxu0 0.0
    %209 = vmatpush.msra.mxu0 0.0
    %210 = vmatpush.msra.mxu0 0.0
    %211 = vmatpush.msra.mxu0 0.0
    %212 = vmatpush.msra.mxu0 0.0
    %213 = vmatpush.msra.mxu0 0.0
    %214 = vmatpush.msra.mxu0 0.0
    %215 = vmatpush.msra.mxu0 0.0
    %216 = vmatpush.msra.mxu0 0.0
    %217 = vmatpush.msra.mxu0 0.0
    %218 = vmatpush.msra.mxu0 0.0
    %219 = vmatpush.msra.mxu0 0.0
    %220 = vmatpush.msra.mxu0 0.0
    %221 = vmatpush.msra.mxu0 0.0
    %v222 = vand.u32 %v34, 4294901760
    %v223 = vsub.f32 %v34, %v222
    %v224 = vand.u32 %v223, 4294901760
    %225 = vmatpush.msra.mxu0 %v224
    %v226 = vand.u32 %v33, 4294901760
    %v227 = vsub.f32 %v33, %v226
    %v228 = vand.u32 %v227, 4294901760
    %229 = vmatpush.msra.mxu0 %v228
    %v230 = vand.u32 %v71, 4294901760
    %231 = vmatmul.f32.gmra.mxu0 %v230
    %v232 = vpop.f32.mrf.mxu0
    %v233 = vadd.f32 %v200, %v232
    %v234 = vand.u32 %v74, 4294901760
    %235 = vmatmul.f32.gmra.mxu0 %v234
    %v236 = vpop.f32.mrf.mxu0
    %v237 = vadd.f32 %v206, %v236
    %238 = vdwg.mxu0
    %239 = vmatpush.msra.mxu0 0.0
    %240 = vmatpush.msra.mxu0 0.0
    %241 = vmatpush.msra.mxu0 0.0
    %242 = vmatpush.msra.mxu0 0.0
    %243 = vmatpush.msra.mxu0 0.0
    %244 = vmatpush.msra.mxu0 0.0
    %245 = vmatpush.msra.mxu0 0.0
    %246 = vmatpush.msra.mxu0 0.0
    %247 = vmatpush.msra.mxu0 0.0
    %248 = vmatpush.msra.mxu0 0.0
    %249 = vmatpush.msra.mxu0 0.0
    %250 = vmatpush.msra.mxu0 0.0
    %251 = vmatpush.msra.mxu0 0.0
    %252 = vmatpush.msra.mxu0 0.0
    %v253 = vand.u32 %v34, 4294901760
    %254 = vmatpush.msra.mxu0 %v253
    %v255 = vand.u32 %v33, 4294901760
    %256 = vmatpush.msra.mxu0 %v255
    %v257 = vand.u32 %v71, 4294901760
    %258 = vmatmul.f32.gmra.mxu0 %v257
    %v259 = vpop.f32.mrf.mxu0
    %v260 = vadd.f32 %v233, %v259
    %v261 = vand.u32 %v74, 4294901760
    %262 = vmatmul.f32.gmra.mxu0 %v261
    %v263 = vpop.f32.mrf.mxu0
    %v264 = vadd.f32 %v237, %v263
    %265 = vdwg.mxu0
    %v266 = vsub.f32 %v35, %v260
    %v267 = vsub.f32 %v36, %v264
    %v268 = vlaneseq
    %v269 = vshrl.u32 %v268, 7
    %v270 = vadd.s32 %v269, 8
    %v271 = vlaneseq
    %v272 = vand.u32 %v271, 127
    %vm273 = vcmp.eq.s32.totalorder %v269, %v272
    %vm274 = vcmp.eq.s32.totalorder %v270, %v272
    %v275 = vsel %vm273, 1, 0
    %v276 = vsel %vm274, 1, 0
    %v277 = vcvt.s32.f32 %v275
    %v278 = vcvt.s32.f32 %v276
    %v279 = vmul.f32 %v277, 0.0001
    %v280 = vmul.f32 %v278, 0.0001
    %v281 = vsub.f32 %v266, %v279
    %v282 = vsub.f32 %v267, %v280
    %283 = vst.msk [vmem:[%s4] sm:$0xff] %vm69, %v281
    %284 = vst.msk [vmem:[%s4 + $0x8] sm:$0xff] %vm69, %v282
    %v285 = vld [vmem:[%s3] sm:$0xff]
    %v286 = vld [vmem:[%s3 + $0x8] sm:$0xff]
    %287 = vmatpush.msra.mxu0 0.0
    %288 = vmatpush.msra.mxu0 0.0
    %289 = vmatpush.msra.mxu0 0.0
    %290 = vmatpush.msra.mxu0 0.0
    %291 = vmatpush.msra.mxu0 0.0
    %292 = vmatpush.msra.mxu0 0.0
    %293 = vmatpush.msra.mxu0 0.0
    %294 = vmatpush.msra.mxu0 0.0
    %295 = vmatpush.msra.mxu0 0.0
    %296 = vmatpush.msra.mxu0 0.0
    %297 = vmatpush.msra.mxu0 0.0
    %298 = vmatpush.msra.mxu0 0.0
    %299 = vmatpush.msra.mxu0 0.0
    %300 = vmatpush.msra.mxu0 0.0
    %v301 = vand.u32 %v286, 4294901760
    %302 = vmatpush.msra.mxu0 %v301
    %v303 = vand.u32 %v285, 4294901760
    %304 = vmatpush.msra.mxu0 %v303
    %v305 = vand.u32 %v71, 4294901760
    %v306 = vsub.f32 %v71, %v305
    %v307 = vand.u32 %v306, 4294901760
    %v308 = vsub.f32 %v306, %v307
    %v309 = vand.u32 %v308, 4294901760
    %310 = vmatmul.f32.gmra.mxu0 %v309
    %v311 = vpop.f32.mrf.mxu0
    %v312 = vadd.f32 0.0, %v311
    %v313 = vand.u32 %v74, 4294901760
    %v314 = vsub.f32 %v74, %v313
    %v315 = vand.u32 %v314, 4294901760
    %v316 = vsub.f32 %v314, %v315
    %v317 = vand.u32 %v316, 4294901760
    %318 = vmatmul.f32.gmra.mxu0 %v317
    %v319 = vpop.f32.mrf.mxu0
    %v320 = vadd.f32 0.0, %v319
    %321 = vdwg.mxu0
    %322 = vmatpush.msra.mxu0 0.0
    %323 = vmatpush.msra.mxu0 0.0
    %324 = vmatpush.msra.mxu0 0.0
    %325 = vmatpush.msra.mxu0 0.0
    %326 = vmatpush.msra.mxu0 0.0
    %327 = vmatpush.msra.mxu0 0.0
    %328 = vmatpush.msra.mxu0 0.0
    %329 = vmatpush.msra.mxu0 0.0
    %330 = vmatpush.msra.mxu0 0.0
    %331 = vmatpush.msra.mxu0 0.0
    %332 = vmatpush.msra.mxu0 0.0
    %333 = vmatpush.msra.mxu0 0.0
    %334 = vmatpush.msra.mxu0 0.0
    %335 = vmatpush.msra.mxu0 0.0
    %v336 = vand.u32 %v286, 4294901760
    %v337 = vsub.f32 %v286, %v336
    %v338 = vand.u32 %v337, 4294901760
    %v339 = vsub.f32 %v337, %v338
    %v340 = vand.u32 %v339, 4294901760
    %341 = vmatpush.msra.mxu0 %v340
    %v342 = vand.u32 %v285, 4294901760
    %v343 = vsub.f32 %v285, %v342
    %v344 = vand.u32 %v343, 4294901760
    %v345 = vsub.f32 %v343, %v344
    %v346 = vand.u32 %v345, 4294901760
    %347 = vmatpush.msra.mxu0 %v346
    %v348 = vand.u32 %v71, 4294901760
    %349 = vmatmul.f32.gmra.mxu0 %v348
    %v350 = vpop.f32.mrf.mxu0
    %v351 = vadd.f32 %v312, %v350
    %v352 = vand.u32 %v74, 4294901760
    %353 = vmatmul.f32.gmra.mxu0 %v352
    %v354 = vpop.f32.mrf.mxu0
    %v355 = vadd.f32 %v320, %v354
    %356 = vdwg.mxu0
    %357 = vmatpush.msra.mxu0 0.0
    %358 = vmatpush.msra.mxu0 0.0
    %359 = vmatpush.msra.mxu0 0.0
    %360 = vmatpush.msra.mxu0 0.0
    %361 = vmatpush.msra.mxu0 0.0
    %362 = vmatpush.msra.mxu0 0.0
    %363 = vmatpush.msra.mxu0 0.0
    %364 = vmatpush.msra.mxu0 0.0
    %365 = vmatpush.msra.mxu0 0.0
    %366 = vmatpush.msra.mxu0 0.0
    %367 = vmatpush.msra.mxu0 0.0
    %368 = vmatpush.msra.mxu0 0.0
    %369 = vmatpush.msra.mxu0 0.0
    %370 = vmatpush.msra.mxu0 0.0
    %v371 = vand.u32 %v286, 4294901760
    %v372 = vsub.f32 %v286, %v371
    %373 = vmatpush.msra.mxu0 %v372
    %v374 = vand.u32 %v285, 4294901760
    %v375 = vsub.f32 %v285, %v374
    %376 = vmatpush.msra.mxu0 %v375
    %v377 = vand.u32 %v71, 4294901760
    %v378 = vsub.f32 %v71, %v377
    %379 = vmatmul.f32.gmra.mxu0 %v378
    %v380 = vpop.f32.mrf.mxu0
    %v381 = vadd.f32 %v351, %v380
    %v382 = vand.u32 %v74, 4294901760
    %v383 = vsub.f32 %v74, %v382
    %384 = vmatmul.f32.gmra.mxu0 %v383
    %v385 = vpop.f32.mrf.mxu0
    %v386 = vadd.f32 %v355, %v385
    %387 = vdwg.mxu0
    %388 = vmatpush.msra.mxu0 0.0
    %389 = vmatpush.msra.mxu0 0.0
    %390 = vmatpush.msra.mxu0 0.0
    %391 = vmatpush.msra.mxu0 0.0
    %392 = vmatpush.msra.mxu0 0.0
    %393 = vmatpush.msra.mxu0 0.0
    %394 = vmatpush.msra.mxu0 0.0
    %395 = vmatpush.msra.mxu0 0.0
    %396 = vmatpush.msra.mxu0 0.0
    %397 = vmatpush.msra.mxu0 0.0
    %398 = vmatpush.msra.mxu0 0.0
    %399 = vmatpush.msra.mxu0 0.0
    %400 = vmatpush.msra.mxu0 0.0
    %401 = vmatpush.msra.mxu0 0.0
    %v402 = vand.u32 %v286, 4294901760
    %403 = vmatpush.msra.mxu0 %v402
    %v404 = vand.u32 %v285, 4294901760
    %405 = vmatpush.msra.mxu0 %v404
    %v406 = vand.u32 %v71, 4294901760
    %v407 = vsub.f32 %v71, %v406
    %v408 = vand.u32 %v407, 4294901760
    %409 = vmatmul.f32.gmra.mxu0 %v408
    %v410 = vpop.f32.mrf.mxu0
    %v411 = vadd.f32 %v381, %v410
    %v412 = vand.u32 %v74, 4294901760
    %v413 = vsub.f32 %v74, %v412
    %v414 = vand.u32 %v413, 4294901760
    %415 = vmatmul.f32.gmra.mxu0 %v414
    %v416 = vpop.f32.mrf.mxu0
    %v417 = vadd.f32 %v386, %v416
    %418 = vdwg.mxu0
    %419 = vmatpush.msra.mxu0 0.0
    %420 = vmatpush.msra.mxu0 0.0
    %421 = vmatpush.msra.mxu0 0.0
    %422 = vmatpush.msra.mxu0 0.0
    %423 = vmatpush.msra.mxu0 0.0
    %424 = vmatpush.msra.mxu0 0.0
    %425 = vmatpush.msra.mxu0 0.0
    %426 = vmatpush.msra.mxu0 0.0
    %427 = vmatpush.msra.mxu0 0.0
    %428 = vmatpush.msra.mxu0 0.0
    %429 = vmatpush.msra.mxu0 0.0
    %430 = vmatpush.msra.mxu0 0.0
    %431 = vmatpush.msra.mxu0 0.0
    %432 = vmatpush.msra.mxu0 0.0
    %v433 = vand.u32 %v286, 4294901760
    %v434 = vsub.f32 %v286, %v433
    %v435 = vand.u32 %v434, 4294901760
    %436 = vmatpush.msra.mxu0 %v435
    %v437 = vand.u32 %v285, 4294901760
    %v438 = vsub.f32 %v285, %v437
    %v439 = vand.u32 %v438, 4294901760
    %440 = vmatpush.msra.mxu0 %v439
    %v441 = vand.u32 %v71, 4294901760
    %442 = vmatmul.f32.gmra.mxu0 %v441
    %v443 = vpop.f32.mrf.mxu0
    %v444 = vadd.f32 %v411, %v443
    %v445 = vand.u32 %v74, 4294901760
    %446 = vmatmul.f32.gmra.mxu0 %v445
    %v447 = vpop.f32.mrf.mxu0
    %v448 = vadd.f32 %v417, %v447
    %449 = vdwg.mxu0
    %450 = vmatpush.msra.mxu0 0.0
    %451 = vmatpush.msra.mxu0 0.0
    %452 = vmatpush.msra.mxu0 0.0
    %453 = vmatpush.msra.mxu0 0.0
    %454 = vmatpush.msra.mxu0 0.0
    %455 = vmatpush.msra.mxu0 0.0
    %456 = vmatpush.msra.mxu0 0.0
    %457 = vmatpush.msra.mxu0 0.0
    %458 = vmatpush.msra.mxu0 0.0
    %459 = vmatpush.msra.mxu0 0.0
    %460 = vmatpush.msra.mxu0 0.0
    %461 = vmatpush.msra.mxu0 0.0
    %462 = vmatpush.msra.mxu0 0.0
    %463 = vmatpush.msra.mxu0 0.0
    %v464 = vand.u32 %v286, 4294901760
    %465 = vmatpush.msra.mxu0 %v464
    %v466 = vand.u32 %v285, 4294901760
    %467 = vmatpush.msra.mxu0 %v466
    %v468 = vand.u32 %v71, 4294901760
    %469 = vmatmul.f32.gmra.mxu0 %v468
    %v470 = vpop.f32.mrf.mxu0
    %v471 = vadd.f32 %v444, %v470
    %v472 = vand.u32 %v74, 4294901760
    %473 = vmatmul.f32.gmra.mxu0 %v472
    %v474 = vpop.f32.mrf.mxu0
    %v475 = vadd.f32 %v448, %v474
    %476 = vdwg.mxu0
    %v477 = vstv %s32
    %v478 = vmul.f32 %v477, %v471
    %v479 = vmul.f32 %v477, %v475
    %vm480 = vcmask 7168
    %481 = vst.msk [vmem:[%s5] sm:$0xff] %vm480, %v478
    %482 = vst.msk [vmem:[%s5 + $0x8] sm:$0xff] %vm480, %v479
    // Predicated region
    $region22: #{svgp_forward.6} parent=1 // pred_check
      _
    $region23: #{svgp_forward.6} parent=1 // pred_check_branch
      %484 = sbr.rel (0) target = $region25
    $region24: #{svgp_forward.6} parent=1 // pred_region
      _
    $region25: #{svgp_forward.6} parent=1 // pred_fallthru
      _
    // Predicated region
    $region26: #{svgp_forward.6} parent=1 // pred_check
      _
    $region27: #{svgp_forward.6} parent=1 // pred_check_branch
      %486 = sbr.rel (0) target = $region29
    $region28: #{svgp_forward.6} parent=1 // pred_region
      _
    $region29: #{svgp_forward.6} parent=1 // pred_fallthru
      _
    // Predicated region
    $region30: #{svgp_forward.6} parent=1 // pred_check
      _
    $region31: #{svgp_forward.6} parent=1 // pred_check_branch
      %488 = sbr.rel (0) target = $region33
    $region32: #{svgp_forward.6} parent=1 // pred_region
      _
    $region33: #{svgp_forward.6} parent=1 // pred_fallthru
      _
    // Predicated region
    $region34: #{svgp_forward.6} parent=1 // pred_check
      _
    $region35: #{svgp_forward.6} parent=1 // pred_check_branch
      %490 = sbr.rel (0) target = $region37
    $region36: #{svgp_forward.6} parent=1 // pred_region
      _
    $region37: #{svgp_forward.6} parent=1 // pred_fallthru
      _
    %491 = vsyncpa [#allocation3], 1

// kernel: svgp_forward.7
$region0: #{svgp_forward.7}
  #allocation0 [shape = 'u32[]', space=smem, size = 0x4, offset = 0x4, fixed_abs, tag = 'smem constant byte address 0x4 - core index']
  #allocation1 [shape = 'u32[72,128]{1,0:T(1,128)}', space=vmem, size = 0x9000, scoped, tag = 'internal scratch']
  #allocation2 [shape = 's32[1]{0}', space=sflag, size = 0x4, scoped, tag = 'scoped memory for svgp_forward.7']
  #allocation3 [shape = 'u8[512]{0}', space=smem, size = 0x200, scoped, tag = 'prefetched SMEM operand 0']
  %s0 = inlined_call_operand.vmem [shape: f32[4], index: 0, kind: input, shape index: {}]
  %s1 = inlined_call_operand.vmem [shape: f32[16,16], index: 1, kind: input, shape index: {}]
  %s2 = inlined_call_operand.vmem [shape: f32[16,1], index: 2, kind: input, shape index: {}]
  %s3 = inlined_call_operand.vmem [shape: f32[16,128], index: 3, kind: input, shape index: {}]
  %s4 = inlined_call_operand.vmem [shape: f32[1,128], index: 4, kind: output, shape index: {0}]
  %s5 = inlined_call_operand.vmem [shape: f32[1,128], index: 5, kind: output, shape index: {1}]
  %6 = xla_tuple %s4, %s5
  %s7 = sld [smem:[#allocation0]]
  $region30: #{svgp_forward.7} parent=0
    _
  %s9 = ssub.s32 1, %s7
  %s10 = scalar_select 0, %s9, %s7
  %s12 = sshll.u32 %s0, 4
  %s13 = int_to_ptr.vmem [resolvable:$true] %s12
  %15 = dma.vmem_to_smem %s13, 16, [#allocation3], [#allocation2]
  %17 = dma.done [#allocation2], 16
  %18 = sfence
  // Predicated region
  $region2: #{svgp_forward.7} parent=0 // pred_check
    _
  $region3: #{svgp_forward.7} parent=0 // pred_check_branch
    %20 = sbr.rel (0) target = $region5
  $region4: #{svgp_forward.7} parent=0 // pred_region
    _
  $region5: #{svgp_forward.7} parent=0 // pred_fallthru
    _
  // Predicated region
  $region6: #{svgp_forward.7} parent=0 // pred_check
    _
  $region7: #{svgp_forward.7} parent=0 // pred_check_branch
    %22 = sbr.rel (0) target = $region9
  $region8: #{svgp_forward.7} parent=0 // pred_region
    _
  $region9: #{svgp_forward.7} parent=0 // pred_fallthru
    _
  // Predicated region
  $region10: #{svgp_forward.7} parent=0 // pred_check
    _
  $region11: #{svgp_forward.7} parent=0 // pred_check_branch
    %24 = sbr.rel (0) target = $region13
  $region12: #{svgp_forward.7} parent=0 // pred_region
    _
  $region13: #{svgp_forward.7} parent=0 // pred_fallthru
    _
  %s25 = sld [smem:[#allocation3]]
  %s26 = sld [smem:[#allocation3 + $0x3]]
  %v27 = vld [vmem:[%s3] sm:$0xff]
  %v28 = vld [vmem:[%s3 + $0x8] sm:$0xff]
  %v29 = vld [vmem:[%s2] sm:$0xff]
  %v30 = vld [vmem:[%s2 + $0x8] sm:$0xff]
  %32 = vset.pattern.permute.xlu0 0
  %33 = vperm.xlu0 %32, %v29
  %v34 = vpop.permute.xlu0 %33
  %37 = vset.pattern.permute.xlu0 0
  %38 = vperm.xlu0 %37, %v30
  %v39 = vpop.permute.xlu0 %38
  %v41 = vmul.f32 %v34, %v27
  %v42 = vmul.f32 %v39, %v28
  %v43 = vadd.f32 %v41, %v42
  %v44 = vrot.slane %v43, 4
  %v45 = vadd.f32 %v43, %v44
  %v46 = vrot.slane %v45, 2
  %v47 = vadd.f32 %v45, %v46
  %v48 = vrot.slane %v47, 1
  %v49 = vadd.f32 %v47, %v48
  %v50 = vld [vmem:[%s1] sm:$0xff]
  %v51 = vld [vmem:[%s1 + $0x8] sm:$0xff]
  %vm52 = vcmask 130048
  %v54 = vsel %vm52, %v50, 0
  %v57 = vsel %vm52, %v51, 0
  %59 = vmatpush.msra.mxu0 0.0
  %60 = vmatpush.msra.mxu0 0.0
  %61 = vmatpush.msra.mxu0 0.0
  %62 = vmatpush.msra.mxu0 0.0
  %63 = vmatpush.msra.mxu0 0.0
  %64 = vmatpush.msra.mxu0 0.0
  %65 = vmatpush.msra.mxu0 0.0
  %66 = vmatpush.msra.mxu0 0.0
  %67 = vmatpush.msra.mxu0 0.0
  %68 = vmatpush.msra.mxu0 0.0
  %69 = vmatpush.msra.mxu0 0.0
  %70 = vmatpush.msra.mxu0 0.0
  %71 = vmatpush.msra.mxu0 0.0
  %72 = vmatpush.msra.mxu0 0.0
  %v73 = vand.u32 %v28, 4294901760
  %74 = vmatpush.msra.mxu0 %v73
  %v75 = vand.u32 %v27, 4294901760
  %76 = vmatpush.msra.mxu0 %v75
  %v77 = vand.u32 %v54, 4294901760
  %v78 = vsub.f32 %v54, %v77
  %v79 = vand.u32 %v78, 4294901760
  %v80 = vsub.f32 %v78, %v79
  %v81 = vand.u32 %v80, 4294901760
  %82 = vmatmul.f32.gmra.mxu0 %v81
  %v83 = vpop.f32.mrf.mxu0
  %v84 = vadd.f32 0.0, %v83
  %v85 = vand.u32 %v57, 4294901760
  %v86 = vsub.f32 %v57, %v85
  %v87 = vand.u32 %v86, 4294901760
  %v88 = vsub.f32 %v86, %v87
  %v89 = vand.u32 %v88, 4294901760
  %90 = vmatmul.f32.gmra.mxu0 %v89
  %v91 = vpop.f32.mrf.mxu0
  %v92 = vadd.f32 0.0, %v91
  %93 = vdwg.mxu0
  %94 = vmatpush.msra.mxu0 0.0
  %95 = vmatpush.msra.mxu0 0.0
  %96 = vmatpush.msra.mxu0 0.0
  %97 = vmatpush.msra.mxu0 0.0
  %98 = vmatpush.msra.mxu0 0.0
  %99 = vmatpush.msra.mxu0 0.0
  %100 = vmatpush.msra.mxu0 0.0
  %101 = vmatpush.msra.mxu0 0.0
  %102 = vmatpush.msra.mxu0 0.0
  %103 = vmatpush.msra.mxu0 0.0
  %104 = vmatpush.msra.mxu0 0.0
  %105 = vmatpush.msra.mxu0 0.0
  %106 = vmatpush.msra.mxu0 0.0
  %107 = vmatpush.msra.mxu0 0.0
  %v108 = vand.u32 %v28, 4294901760
  %v109 = vsub.f32 %v28, %v108
  %v110 = vand.u32 %v109, 4294901760
  %v111 = vsub.f32 %v109, %v110
  %v112 = vand.u32 %v111, 4294901760
  %113 = vmatpush.msra.mxu0 %v112
  %v114 = vand.u32 %v27, 4294901760
  %v115 = vsub.f32 %v27, %v114
  %v116 = vand.u32 %v115, 4294901760
  %v117 = vsub.f32 %v115, %v116
  %v118 = vand.u32 %v117, 4294901760
  %119 = vmatpush.msra.mxu0 %v118
  %v120 = vand.u32 %v54, 4294901760
  %121 = vmatmul.f32.gmra.mxu0 %v120
  %v122 = vpop.f32.mrf.mxu0
  %v123 = vadd.f32 %v84, %v122
  %v124 = vand.u32 %v57, 4294901760
  %125 = vmatmul.f32.gmra.mxu0 %v124
  %v126 = vpop.f32.mrf.mxu0
  %v127 = vadd.f32 %v92, %v126
  %128 = vdwg.mxu0
  %129 = vmatpush.msra.mxu0 0.0
  %130 = vmatpush.msra.mxu0 0.0
  %131 = vmatpush.msra.mxu0 0.0
  %132 = vmatpush.msra.mxu0 0.0
  %133 = vmatpush.msra.mxu0 0.0
  %134 = vmatpush.msra.mxu0 0.0
  %135 = vmatpush.msra.mxu0 0.0
  %136 = vmatpush.msra.mxu0 0.0
  %137 = vmatpush.msra.mxu0 0.0
  %138 = vmatpush.msra.mxu0 0.0
  %139 = vmatpush.msra.mxu0 0.0
  %140 = vmatpush.msra.mxu0 0.0
  %141 = vmatpush.msra.mxu0 0.0
  %142 = vmatpush.msra.mxu0 0.0
  %v143 = vand.u32 %v28, 4294901760
  %v144 = vsub.f32 %v28, %v143
  %145 = vmatpush.msra.mxu0 %v144
  %v146 = vand.u32 %v27, 4294901760
  %v147 = vsub.f32 %v27, %v146
  %148 = vmatpush.msra.mxu0 %v147
  %v149 = vand.u32 %v54, 4294901760
  %v150 = vsub.f32 %v54, %v149
  %151 = vmatmul.f32.gmra.mxu0 %v150
  %v152 = vpop.f32.mrf.mxu0
  %v153 = vadd.f32 %v123, %v152
  %v154 = vand.u32 %v57, 4294901760
  %v155 = vsub.f32 %v57, %v154
  %156 = vmatmul.f32.gmra.mxu0 %v155
  %v157 = vpop.f32.mrf.mxu0
  %v158 = vadd.f32 %v127, %v157
  %159 = vdwg.mxu0
  %160 = vmatpush.msra.mxu0 0.0
  %161 = vmatpush.msra.mxu0 0.0
  %162 = vmatpush.msra.mxu0 0.0
  %163 = vmatpush.msra.mxu0 0.0
  %164 = vmatpush.msra.mxu0 0.0
  %165 = vmatpush.msra.mxu0 0.0
  %166 = vmatpush.msra.mxu0 0.0
  %167 = vmatpush.msra.mxu0 0.0
  %168 = vmatpush.msra.mxu0 0.0
  %169 = vmatpush.msra.mxu0 0.0
  %170 = vmatpush.msra.mxu0 0.0
  %171 = vmatpush.msra.mxu0 0.0
  %172 = vmatpush.msra.mxu0 0.0
  %173 = vmatpush.msra.mxu0 0.0
  %v174 = vand.u32 %v28, 4294901760
  %175 = vmatpush.msra.mxu0 %v174
  %v176 = vand.u32 %v27, 4294901760
  %177 = vmatpush.msra.mxu0 %v176
  %v178 = vand.u32 %v54, 4294901760
  %v179 = vsub.f32 %v54, %v178
  %v180 = vand.u32 %v179, 4294901760
  %181 = vmatmul.f32.gmra.mxu0 %v180
  %v182 = vpop.f32.mrf.mxu0
  %v183 = vadd.f32 %v153, %v182
  %v184 = vand.u32 %v57, 4294901760
  %v185 = vsub.f32 %v57, %v184
  %v186 = vand.u32 %v185, 4294901760
  %187 = vmatmul.f32.gmra.mxu0 %v186
  %v188 = vpop.f32.mrf.mxu0
  %v189 = vadd.f32 %v158, %v188
  %190 = vdwg.mxu0
  %191 = vmatpush.msra.mxu0 0.0
  %192 = vmatpush.msra.mxu0 0.0
  %193 = vmatpush.msra.mxu0 0.0
  %194 = vmatpush.msra.mxu0 0.0
  %195 = vmatpush.msra.mxu0 0.0
  %196 = vmatpush.msra.mxu0 0.0
  %197 = vmatpush.msra.mxu0 0.0
  %198 = vmatpush.msra.mxu0 0.0
  %199 = vmatpush.msra.mxu0 0.0
  %200 = vmatpush.msra.mxu0 0.0
  %201 = vmatpush.msra.mxu0 0.0
  %202 = vmatpush.msra.mxu0 0.0
  %203 = vmatpush.msra.mxu0 0.0
  %204 = vmatpush.msra.mxu0 0.0
  %v205 = vand.u32 %v28, 4294901760
  %v206 = vsub.f32 %v28, %v205
  %v207 = vand.u32 %v206, 4294901760
  %208 = vmatpush.msra.mxu0 %v207
  %v209 = vand.u32 %v27, 4294901760
  %v210 = vsub.f32 %v27, %v209
  %v211 = vand.u32 %v210, 4294901760
  %212 = vmatpush.msra.mxu0 %v211
  %v213 = vand.u32 %v54, 4294901760
  %214 = vmatmul.f32.gmra.mxu0 %v213
  %v215 = vpop.f32.mrf.mxu0
  %v216 = vadd.f32 %v183, %v215
  %v217 = vand.u32 %v57, 4294901760
  %218 = vmatmul.f32.gmra.mxu0 %v217
  %v219 = vpop.f32.mrf.mxu0
  %v220 = vadd.f32 %v189, %v219
  %221 = vdwg.mxu0
  %222 = vmatpush.msra.mxu0 0.0
  %223 = vmatpush.msra.mxu0 0.0
  %224 = vmatpush.msra.mxu0 0.0
  %225 = vmatpush.msra.mxu0 0.0
  %226 = vmatpush.msra.mxu0 0.0
  %227 = vmatpush.msra.mxu0 0.0
  %228 = vmatpush.msra.mxu0 0.0
  %229 = vmatpush.msra.mxu0 0.0
  %230 = vmatpush.msra.mxu0 0.0
  %231 = vmatpush.msra.mxu0 0.0
  %232 = vmatpush.msra.mxu0 0.0
  %233 = vmatpush.msra.mxu0 0.0
  %234 = vmatpush.msra.mxu0 0.0
  %235 = vmatpush.msra.mxu0 0.0
  %v236 = vand.u32 %v28, 4294901760
  %237 = vmatpush.msra.mxu0 %v236
  %v238 = vand.u32 %v27, 4294901760
  %239 = vmatpush.msra.mxu0 %v238
  %v240 = vand.u32 %v54, 4294901760
  %241 = vmatmul.f32.gmra.mxu0 %v240
  %v242 = vpop.f32.mrf.mxu0
  %v243 = vadd.f32 %v216, %v242
  %v244 = vand.u32 %v57, 4294901760
  %245 = vmatmul.f32.gmra.mxu0 %v244
  %v246 = vpop.f32.mrf.mxu0
  %v247 = vadd.f32 %v220, %v246
  %248 = vdwg.mxu0
  %v249 = vmul.f32 %v27, %v243
  %v250 = vmul.f32 %v28, %v247
  %v251 = vadd.f32 %v249, %v250
  %v252 = vrot.slane %v251, 4
  %v253 = vadd.f32 %v251, %v252
  %v254 = vrot.slane %v253, 2
  %v255 = vadd.f32 %v253, %v254
  %v256 = vrot.slane %v255, 1
  %v257 = vadd.f32 %v255, %v256
  %v258 = vstv %s25
  %v259 = vsub.f32 %v258, %v257
  %260 = vst [vmem:[%s4] sm:$0x1] %v49
  %v261 = vmax.f32 %v259, 1e-08
  %v262 = vstv %s26
  %v263 = vadd.f32 %v261, %v262
  %v264 = vrsqrt.pop %v263
  %v265 = vmul.f32 %v264, %v263
  %v266 = vmul.f32 %v265, %v264
  %v267 = vmul.f32 0.5, %v266
  %v268 = vsub.f32 1.5, %v267
  %v269 = vmul.f32 %v264, %v268
  %v270 = vmul.f32 %v263, %v269
  %vm271 = vcmp.eq.f32.partialorder %v263, inf
  %v272 = vsel %vm271, %v263, %v270
  %vm273 = vcmp.eq.f32.partialorder %v263, 0.0
  %v274 = vand.u32 %v263, 2147483648
  %v275 = vsel %vm273, %v274, %v272
  %276 = vst [vmem:[%s5] sm:$0x1] %v275
  // Predicated region
  $region14: #{svgp_forward.7} parent=0 // pred_check
    _
  $region15: #{svgp_forward.7} parent=0 // pred_check_branch
    %278 = sbr.rel (0) target = $region17
  $region16: #{svgp_forward.7} parent=0 // pred_region
    _
  $region17: #{svgp_forward.7} parent=0 // pred_fallthru
    _
  // Predicated region
  $region18: #{svgp_forward.7} parent=0 // pred_check
    _
  $region19: #{svgp_forward.7} parent=0 // pred_check_branch
    %280 = sbr.rel (0) target = $region21
  $region20: #{svgp_forward.7} parent=0 // pred_region
    _
  $region21: #{svgp_forward.7} parent=0 // pred_fallthru
    _
  // Predicated region
  $region22: #{svgp_forward.7} parent=0 // pred_check
    _
  $region23: #{svgp_forward.7} parent=0 // pred_check_branch
    %282 = sbr.rel (0) target = $region25
  $region24: #{svgp_forward.7} parent=0 // pred_region
    _
  $region25: #{svgp_forward.7} parent=0 // pred_fallthru
    _
  // Predicated region
  $region26: #{svgp_forward.7} parent=0 // pred_check
    _
  $region27: #{svgp_forward.7} parent=0 // pred_check_branch
    %284 = sbr.rel (0) target = $region29
  $region28: #{svgp_forward.7} parent=0 // pred_region
    _
  $region29: #{svgp_forward.7} parent=0 // pred_fallthru
    _

</llo_original>
